<compile_context>
chip_gen: v6e
topology: v6e:2x2x1
jax: 0.10.0
libtpu: 0.0.40
codegen_flags: <defaults>
</compile_context>

<pallas_src>
import jax
import jax.numpy as jnp
from jax.experimental import pallas as pl
from jax.experimental.pallas import tpu as pltpu


def _round_up(x, m):
    return (x + m - 1) // m * m


# ---------------------------------------------------------------------------
# Fused bidirectional LSTM layer kernel (one grid step = one tile of T).
# ---------------------------------------------------------------------------
def _make_bilstm_kernel(two_streams):
    """two_streams=False: single input stream (layer 0).
    two_streams=True: previous layer's yf and yb fed as two separate streams
    with W_ih split into the matching row blocks (no inter-layer concat)."""

    def kernel(ilens_ref, *refs):
        if two_streams:
            (af_ref, bf_ref, ab_ref, bb_ref,
             wih_a_ref, wih_b_ref, whh_ref, bias_ref,
             yf_ref, yb_ref, hn_ref, cn_ref,
             gxf_scr, gxb_scr, h_scr, c_scr) = refs
        else:
            (af_ref, ab_ref,
             wih_a_ref, whh_ref, bias_ref,
             yf_ref, yb_ref, hn_ref, cn_ref,
             gxf_scr, gxb_scr, h_scr, c_scr) = refs
            bf_ref = bb_ref = wih_b_ref = None

        tt, bp, _ = af_ref.shape
        hp = whh_ref.shape[1]
        mm = whh_ref.dtype

        @pl.when(pl.program_id(0) == 0)
        def _init():
            h_scr[...] = jnp.zeros_like(h_scr)
            c_scr[...] = jnp.zeros_like(c_scr)

        # --- hoisted input projection: one big MXU matmul per direction per
        # --- tile (two when the previous layer's yf/yb are separate streams);
        # --- bias folded in here, not per timestep.
        def project(x_ref, x2_ref, d):
            g = jnp.dot(x_ref[...].reshape(tt * bp, -1), wih_a_ref[d],
                        preferred_element_type=jnp.float32)
            if two_streams:
                g = g + jnp.dot(x2_ref[...].reshape(tt * bp, -1), wih_b_ref[d],
                                preferred_element_type=jnp.float32)
            return (g + bias_ref[d]).reshape(tt, bp, 4 * hp)

        gxf_scr[...] = project(af_ref, bf_ref, 0).astype(gxf_scr.dtype)
        gxb_scr[...] = project(ab_ref, bb_ref, 1).astype(gxb_scr.dtype)

        whh_f = whh_ref[0]
        whh_b = whh_ref[1]
        ilens_v = ilens_ref[...]                        # (Bp, 1) int32, hoisted
        base_f = pl.program_id(0) * tt                  # global t0 of fwd tile
        base_b = (pl.num_programs(0) - 1 - pl.program_id(0)) * tt  # bwd tile t0

        def sigmoid(x):
            # one EUP op instead of exp + reciprocal
            return 0.5 * (jnp.tanh(0.5 * x) + 1.0)

        def cell(gates, c_prev):
            # PyTorch LSTM gate order i, f, g, o; each gate sits in its own
            # 128-aligned lane block of width hp (no cross-lane shuffles).
            i_g = sigmoid(gates[:, 0 * hp:1 * hp])
            f_g = sigmoid(gates[:, 1 * hp:2 * hp])
            g_g = jnp.tanh(gates[:, 2 * hp:3 * hp])
            o_g = sigmoid(gates[:, 3 * hp:4 * hp])
            c_new = f_g * c_prev + i_g * g_g
            h_new = o_g * jnp.tanh(c_new)
            return h_new, c_new

        def step(t, carry):
            hf, cf, hb, cb = carry                      # f32 vreg-carried state
            tb = tt - 1 - t

            # ---- forward direction: global time increases ----
            gates = gxf_scr[t].astype(jnp.float32) + jnp.dot(
                hf.astype(mm), whh_f, preferred_element_type=jnp.float32)
            h_new, c_new = cell(gates, cf)
            m = ilens_v > (base_f + t)                  # (Bp,1) validity
            yf_ref[t] = jnp.where(m, h_new, 0.0).astype(yf_ref.dtype)
            hf = jnp.where(m, h_new, hf)
            cf = jnp.where(m, c_new, cf)

            # ---- backward direction: global time decreases (no flips) ----
            gates = gxb_scr[tb].astype(jnp.float32) + jnp.dot(
                hb.astype(mm), whh_b, preferred_element_type=jnp.float32)
            h_new, c_new = cell(gates, cb)
            m = ilens_v > (base_b + tb)
            yb_ref[tb] = jnp.where(m, h_new, 0.0).astype(yb_ref.dtype)
            hb = jnp.where(m, h_new, hb)
            cb = jnp.where(m, c_new, cb)
            return hf, cf, hb, cb

        carry0 = (h_scr[0], c_scr[0], h_scr[1], c_scr[1])
        hf, cf, hb, cb = jax.lax.fori_loop(0, tt, step, carry0, unroll=4)

        # Spill the carried state to scratch once per tile (next grid step).
        h_scr[0] = hf
        c_scr[0] = cf
        h_scr[1] = hb
        c_scr[1] = cb

        @pl.when(pl.program_id(0) == pl.num_programs(0) - 1)
        def _finalize():
            hn_ref[0] = hf
            hn_ref[1] = hb
            cn_ref[0] = cf
            cn_ref[1] = cb

    return kernel


# ---------------------------------------------------------------------------
# VMEM budgeting (generation-dependent).
# ---------------------------------------------------------------------------
def _vmem_budget():
    cap = None
    try:
        info = pltpu.get_tpu_info()
        for name in ("vmem_capacity_bytes", "vmem_size_bytes", "vmem_bytes"):
            cap = getattr(info, name, None)
            if cap:
                break
    except Exception:
        cap = None
    if not cap:
        cap = 64 * 1024 * 1024          # conservative: v7x physical VMEM / TC
    cap = int(cap)
    return int(cap * 0.70), int(cap * 0.85)   # (tile-choice budget, vmem_limit)


def _vmem_estimate(tt, Bp, D_eff, Hp, mm_bytes, y_bytes, gx_bytes):
    f32 = 4
    streamed = (2 * tt * Bp * D_eff * mm_bytes       # fwd + bwd input streams
                + 2 * tt * Bp * Hp * y_bytes)        # yf + yb output streams
    resident = (Bp * 128 * 4                         # ilens (lane-padded)
                + 2 * D_eff * 4 * Hp * mm_bytes      # W_ih (both dirs)
                + 2 * Hp * 4 * Hp * mm_bytes         # W_hh (both dirs)
                + 8 * 4 * Hp * f32                   # bias (sublane-padded)
                + 2 * 2 * Bp * Hp * f32)             # h_n + c_n outputs
    scratch = 2 * tt * Bp * 4 * Hp * gx_bytes + 2 * 2 * Bp * Hp * f32
    return 2 * (streamed + resident) + scratch       # x2: double buffering


def _choose_t_tile(T, Bp, D_eff, Hp, mm_bytes, y_bytes, gx_bytes, budget):
    for tt in (1024, 512, 256, 128, 64, 32, 16, 8, 4, 2):
        if tt > T:
            continue
        if _vmem_estimate(tt, Bp, D_eff, Hp, mm_bytes, y_bytes, gx_bytes) <= budget:
            return tt
    return 1


# ---------------------------------------------------------------------------
# Layer wrapper: T-tiled streaming grid, both directions fused.
# ---------------------------------------------------------------------------
def _bilstm_layer(inputs, ilens_2d, wih_list, whh, bias, *, t_tile, mm_dtype,
                  gx_dtype, y_dtype, vmem_limit_bytes):
    Tp, Bp, _ = inputs[0].shape
    Hp = whh.shape[1]
    nt = Tp // t_tile
    assert nt * t_tile == Tp
    n_in = len(inputs)

    in_specs = [pl.BlockSpec((Bp, 1), lambda i: (0, 0))]          # ilens (resident)
    args = [ilens_2d]
    for x in inputs:                                              # fwd tile order
        in_specs.append(pl.BlockSpec((t_tile, Bp, x.shape[2]),
                                     lambda i: (i, 0, 0)))
        args.append(x)
    for x in inputs:                                              # bwd tile order
        in_specs.append(pl.BlockSpec((t_tile, Bp, x.shape[2]),
                                     lambda i, nt=nt: (nt - 1 - i, 0, 0)))
        args.append(x)
    for w in wih_list:                                            # W_ih block(s)
        in_specs.append(pl.BlockSpec((2, w.shape[1], 4 * Hp),
                                     lambda i: (0, 0, 0)))
        args.append(w.astype(mm_dtype))
    in_specs.append(pl.BlockSpec((2, Hp, 4 * Hp), lambda i: (0, 0, 0)))   # W_hh
    args.append(whh.astype(mm_dtype))
    in_specs.append(pl.BlockSpec((2, 1, 4 * Hp), lambda i: (0, 0, 0)))    # bias
    args.append(bias)

    grid_spec = pltpu.PrefetchScalarGridSpec(
        num_scalar_prefetch=0,
        grid=(nt,),
        in_specs=in_specs,
        out_specs=(
            pl.BlockSpec((t_tile, Bp, Hp), lambda i: (i, 0, 0)),            # y fwd
            pl.BlockSpec((t_tile, Bp, Hp), lambda i, nt=nt: (nt - 1 - i, 0, 0)),  # y bwd
            pl.BlockSpec((2, Bp, Hp), lambda i: (0, 0, 0)),                 # h_n
            pl.BlockSpec((2, Bp, Hp), lambda i: (0, 0, 0)),                 # c_n
        ),
        scratch_shapes=[
            pltpu.VMEM((t_tile, Bp, 4 * Hp), gx_dtype),   # hoisted x-gates, fwd tile
            pltpu.VMEM((t_tile, Bp, 4 * Hp), gx_dtype),   # hoisted x-gates, bwd tile
            pltpu.VMEM((2, Bp, Hp), jnp.float32),         # h state (fwd, bwd)
            pltpu.VMEM((2, Bp, Hp), jnp.float32),         # c state (fwd, bwd)
        ],
    )

    fn = pl.pallas_call(
        _make_bilstm_kernel(n_in == 2),
        out_shape=(
            jax.ShapeDtypeStruct((Tp, Bp, Hp), y_dtype),
            jax.ShapeDtypeStruct((Tp, Bp, Hp), y_dtype),
            jax.ShapeDtypeStruct((2, Bp, Hp), jnp.float32),
            jax.ShapeDtypeStruct((2, Bp, Hp), jnp.float32),
        ),
        grid_spec=grid_spec,
        compiler_params=pltpu.CompilerParams(
            dimension_semantics=("arbitrary",),   # serial recurrence over T tiles
            vmem_limit_bytes=vmem_limit_bytes,
        ),
    )
    return fn(*args)


# ---------------------------------------------------------------------------
# Parameters: torch.nn.LSTM-shaped raw weights + padded gate-blocked layouts.
# ---------------------------------------------------------------------------
def init_rnn_params(key, idim, elayers, cdim):
    ndir = 2
    Hp = _round_up(cdim, 128)
    k = 1.0 / jnp.sqrt(jnp.float32(cdim))
    layers = []
    for layer in range(elayers):
        in_size = idim if layer == 0 else ndir * cdim
        raw = []
        for _ in range(ndir):
            key, k1, k2, k3, k4 = jax.random.split(key, 5)
            w_ih = jax.random.uniform(k1, (4 * cdim, in_size), jnp.float32, -k, k)
            w_hh = jax.random.uniform(k2, (4 * cdim, cdim), jnp.float32, -k, k)
            b_ih = jax.random.uniform(k3, (4 * cdim,), jnp.float32, -k, k)
            b_hh = jax.random.uniform(k4, (4 * cdim,), jnp.float32, -k, k)
            raw.append({"w_ih": w_ih, "w_hh": w_hh, "b": b_ih + b_hh})

        # Gate g occupies lanes [g*Hp, g*Hp+cdim).  Layer 0 has a single input
        # stream; layers>0 consume the previous layer's yf/yb as two separate
        # streams, so W_ih is split into the matching row blocks.
        if layer == 0:
            Dp_list = [_round_up(idim, 128)]
            src_blocks = [(0, idim)]
        else:
            Dp_list = [Hp, Hp]
            src_blocks = [(0, cdim), (cdim, cdim)]
        wih_arrays = [jnp.zeros((ndir, Dp, 4 * Hp), jnp.float32) for Dp in Dp_list]
        whh_p = jnp.zeros((ndir, Hp, 4 * Hp), jnp.float32)
        b_p = jnp.zeros((ndir, 1, 4 * Hp), jnp.float32)
        for d in range(ndir):
            w_ih_t = raw[d]["w_ih"].T   # (in_size, 4*cdim)
            w_hh_t = raw[d]["w_hh"].T   # (cdim, 4*cdim)
            for g in range(4):
                for blk, (src, length) in enumerate(src_blocks):
                    wih_arrays[blk] = wih_arrays[blk].at[
                        d, :length, g * Hp:g * Hp + cdim].set(
                        w_ih_t[src:src + length, g * cdim:(g + 1) * cdim])
                whh_p = whh_p.at[d, :cdim, g * Hp:g * Hp + cdim].set(
                    w_hh_t[:, g * cdim:(g + 1) * cdim])
                b_p = b_p.at[d, 0, g * Hp:g * Hp + cdim].set(
                    raw[d]["b"][g * cdim:(g + 1) * cdim])
        layers.append({"raw": raw, "wih": wih_arrays, "whh": whh_p, "b": b_p})
    return {"config": {"idim": idim, "elayers": elayers, "cdim": cdim, "hp": Hp},
            "layers": layers}


# ---------------------------------------------------------------------------
# Full forward: equivalent of RNN.forward(xs_pad, ilens, prev_state=None).
# ---------------------------------------------------------------------------
def rnn_forward(params, xs_pad, ilens, *, t_tile=None, mm_dtype=jnp.bfloat16):
    cfg = params["config"]
    H, Hp = cfg["cdim"], cfg["hp"]
    layers = params["layers"]
    B, T, idim = xs_pad.shape

    mm_dtype = jnp.dtype(mm_dtype)
    mm_bytes = mm_dtype.itemsize
    y_dtype = mm_dtype                                   # inter-layer activations
    gx_dtype = jnp.bfloat16 if mm_bytes == 2 else jnp.float32
    b_tile = 8 * (4 // mm_bytes)                         # sublane tile: 8 f32 / 16 bf16
    Bp = _round_up(B, b_tile)
    Dp0 = _round_up(idim, 128)

    budget, vmem_limit = _vmem_budget()
    if t_tile is None:
        t_tile = _choose_t_tile(T, Bp, max(Dp0, 2 * Hp), Hp, mm_bytes,
                                jnp.dtype(y_dtype).itemsize,
                                jnp.dtype(gx_dtype).itemsize, budget)
    Tp = _round_up(T, t_tile)

    # ilens (packed-sequence emulation); padded batch rows get length 0.
    ilens_p = jnp.zeros((Bp,), jnp.int32).at[:B].set(ilens.astype(jnp.int32))
    ilens_2d = ilens_p[:, None]                          # (Bp, 1)

    # Time-major, zero-padded to (Tp, Bp, Dp0).
    x = jnp.transpose(xs_pad, (1, 0, 2)).astype(jnp.float32)
    x = jnp.pad(x, ((0, Tp - T), (0, Bp - B), (0, Dp0 - idim))).astype(mm_dtype)

    inputs = [x]
    h_states, c_states = [], []
    for lp in layers:
        yf, yb, hn, cn = _bilstm_layer(
            inputs, ilens_2d, lp["wih"], lp["whh"], lp["b"],
            t_tile=t_tile, mm_dtype=mm_dtype, gx_dtype=gx_dtype,
            y_dtype=y_dtype, vmem_limit_bytes=vmem_limit)
        h_states += [hn[0, :B, :H], hn[1, :B, :H]]
        c_states += [cn[0, :B, :H], cn[1, :B, :H]]
        inputs = [yf, yb]        # next layer reads the two directions separately

    yf, yb = inputs
    ys_pad = jnp.concatenate([yf[:T, :B, :H].astype(jnp.float32),
                              yb[:T, :B, :H].astype(jnp.float32)], axis=-1)
    ys_pad = jnp.transpose(ys_pad, (1, 0, 2))            # (B, T, 2*cdim)
    h_n = jnp.stack(h_states, axis=0)                    # (L*2, B, cdim)
    c_n = jnp.stack(c_states, axis=0)
    return ys_pad, ilens, (h_n, c_n)


# ---------------------------------------------------------------------------
# Pure-JAX reference (raw unpadded weights) for correctness checking.
# ---------------------------------------------------------------------------
def _ref_lstm_direction(x_tbd, mask_tb1, w_ih, w_hh, b):
    H = w_hh.shape[1]
    Bsz = x_tbd.shape[1]
    w_ih_t, w_hh_t = w_ih.T, w_hh.T

    def step(carry, inp):
        h_prev, c_prev = carry
        x_t, m_t = inp
        gates = x_t @ w_ih_t + h_prev @ w_hh_t + b[None, :]
        i_g = jax.nn.sigmoid(gates[:, 0 * H:1 * H])
        f_g = jax.nn.sigmoid(gates[:, 1 * H:2 * H])
        g_g = jnp.tanh(gates[:, 2 * H:3 * H])
        o_g = jax.nn.sigmoid(gates[:, 3 * H:4 * H])
        c_new = f_g * c_prev + i_g * g_g
        h_new = o_g * jnp.tanh(c_new)
        c = m_t * c_new + (1.0 - m_t) * c_prev
        h = m_t * h_new + (1.0 - m_t) * h_prev
        return (h, c), m_t * h_new

    init = (jnp.zeros((Bsz, H), jnp.float32), jnp.zeros((Bsz, H), jnp.float32))
    (hn, cn), ys = jax.lax.scan(step, init, (x_tbd, mask_tb1))
    return ys, hn, cn


def rnn_forward_ref(params, xs_pad, ilens):
    B, T, _ = xs_pad.shape
    mask = (jnp.arange(T)[None, :] < ilens[:, None]).astype(jnp.float32)
    mask_tb1 = jnp.transpose(mask, (1, 0))[:, :, None]
    x = jnp.transpose(xs_pad, (1, 0, 2)).astype(jnp.float32)
    h_states, c_states = [], []
    for lp in params["layers"]:
        y_dirs = []
        for d, p in enumerate(lp["raw"]):
            if d == 0:
                xin, min_ = x, mask_tb1
            else:
                xin, min_ = jnp.flip(x, axis=0), jnp.flip(mask_tb1, axis=0)
            y, hn, cn = _ref_lstm_direction(xin, min_, p["w_ih"], p["w_hh"], p["b"])
            if d == 1:
                y = jnp.flip(y, axis=0)
            y_dirs.append(y)
            h_states.append(hn)
            c_states.append(cn)
        x = jnp.concatenate(y_dirs, axis=-1)
    return (jnp.transpose(x, (1, 0, 2)), ilens,
            (jnp.stack(h_states, 0), jnp.stack(c_states, 0)))


if __name__ == "__main__":
    # Small shapes consistent with the module: B=2, Tmax=8, idim=16,
    # elayers=2, cdim=32, bidirectional ('blstm'), dropout=0.
    B, Tmax, idim, elayers, cdim = 2, 8, 16, 2, 32

    key = jax.random.PRNGKey(0)
    key, kx = jax.random.split(key)
    xs_pad = jax.random.normal(kx, (B, Tmax, idim), jnp.float32)
    ilens = jnp.array([Tmax, 5], dtype=jnp.int32)

    params = init_rnn_params(jax.random.PRNGKey(0), idim, elayers, cdim)

    # f32 path; t_tile=4 so the streamed T-grid (2 tiles) is exercised.
    ys_pad, out_ilens, (h_n, c_n) = rnn_forward(params, xs_pad, ilens,
                                                t_tile=4, mm_dtype=jnp.float32)
    jax.block_until_ready((ys_pad, out_ilens, h_n, c_n))

    ys_ref, _, (h_ref, c_ref) = rnn_forward_ref(params, xs_pad, ilens)
    assert ys_pad.shape == (B, Tmax, 2 * cdim)
    assert h_n.shape == (elayers * 2, B, cdim) and c_n.shape == h_n.shape
    assert jnp.allclose(ys_pad, ys_ref, atol=1e-4, rtol=1e-4)
    assert jnp.allclose(h_n, h_ref, atol=1e-4, rtol=1e-4)
    assert jnp.allclose(c_n, c_ref, atol=1e-4, rtol=1e-4)

    # Default path (bf16 matmul inputs / inter-layer activations, f32
    # accumulation and f32 state); checked with a loose tolerance.
    ys_bf, _, (h_bf, c_bf) = rnn_forward(params, xs_pad, ilens, t_tile=4)
    jax.block_until_ready((ys_bf, h_bf, c_bf))
    assert jnp.allclose(ys_bf, ys_ref, atol=1e-1, rtol=1e-1)
    assert jnp.allclose(h_bf, h_ref, atol=1e-1, rtol=1e-1)

    print("KERNEL_OK")
</pallas_src>

<mosaic_0001>
module attributes {stable_mosaic.version = 11 : i64} {
  func.func @kernel(%arg0: i32, %arg1: memref<8x1xi32, #tpu.memory_space<vmem>>, %arg2: memref<4x8x128xf32, #tpu.memory_space<vmem>>, %arg3: memref<4x8x128xf32, #tpu.memory_space<vmem>>, %arg4: memref<2x128x512xf32, #tpu.memory_space<vmem>>, %arg5: memref<2x128x512xf32, #tpu.memory_space<vmem>>, %arg6: memref<2x1x512xf32, #tpu.memory_space<vmem>>, %arg7: memref<4x8x128xf32, #tpu.memory_space<vmem>>, %arg8: memref<4x8x128xf32, #tpu.memory_space<vmem>>, %arg9: memref<2x8x128xf32, #tpu.memory_space<vmem>>, %arg10: memref<2x8x128xf32, #tpu.memory_space<vmem>>, %arg11: memref<4x8x512xf32, #tpu.memory_space<vmem>>, %arg12: memref<4x8x512xf32, #tpu.memory_space<vmem>>, %arg13: memref<2x8x128xf32, #tpu.memory_space<vmem>>, %arg14: memref<2x8x128xf32, #tpu.memory_space<vmem>>) attributes {dimension_semantics = [#tpu.dimension_semantics<arbitrary>], iteration_bounds = array<i64: 2>, scalar_prefetch = 0 : i64, scratch_operands = 4 : i64, tpu.core_type = #tpu.core_type<tc>, window_params = [{pipeline_mode = #tpu.pipeline_mode<synchronous>, transform_indices = @transform_0, window_bounds = array<i64: 8, 1>}, {transform_indices = @transform_1, window_bounds = array<i64: 4, 8, 128>}, {transform_indices = @transform_2, window_bounds = array<i64: 4, 8, 128>}, {pipeline_mode = #tpu.pipeline_mode<synchronous>, transform_indices = @transform_3, window_bounds = array<i64: 2, 128, 512>}, {pipeline_mode = #tpu.pipeline_mode<synchronous>, transform_indices = @transform_4, window_bounds = array<i64: 2, 128, 512>}, {pipeline_mode = #tpu.pipeline_mode<synchronous>, transform_indices = @transform_5, window_bounds = array<i64: 2, 1, 512>}, {transform_indices = @transform_6, window_bounds = array<i64: 4, 8, 128>}, {transform_indices = @transform_7, window_bounds = array<i64: 4, 8, 128>}, {pipeline_mode = #tpu.pipeline_mode<synchronous>, transform_indices = @transform_8, window_bounds = array<i64: 2, 8, 128>}, {pipeline_mode = #tpu.pipeline_mode<synchronous>, transform_indices = @transform_9, window_bounds = array<i64: 2, 8, 128>}]} {
    %c0_i32 = arith.constant 0 : i32
    %0 = arith.cmpi eq, %arg0, %c0_i32 : i32
    %1 = arith.extui %0 : i1 to i32
    %c0_i32_0 = arith.constant 0 : i32
    %2 = arith.cmpi ne, %1, %c0_i32_0 : i32
    scf.if %2 {
      %cst_186 = arith.constant 0.000000e+00 : f32
      %484 = vector.broadcast %cst_186 : f32 to vector<2x8x128xf32>
      %c0_187 = arith.constant 0 : index
      %c0_188 = arith.constant 0 : index
      %c0_189 = arith.constant 0 : index
      %485 = vector.load %arg13[%c0_187, %c0_188, %c0_189] : memref<2x8x128xf32, #tpu.memory_space<vmem>>, vector<2x8x128xf32>
      tpu.vector_store %arg13[%c0_187, %c0_188, %c0_189], %484 {strides = array<i32>} : memref<2x8x128xf32, #tpu.memory_space<vmem>>, vector<2x8x128xf32>,
      %cst_190 = arith.constant 0.000000e+00 : f32
      %486 = vector.broadcast %cst_190 : f32 to vector<2x8x128xf32>
      %c0_191 = arith.constant 0 : index
      %c0_192 = arith.constant 0 : index
      %c0_193 = arith.constant 0 : index
      %487 = vector.load %arg14[%c0_191, %c0_192, %c0_193] : memref<2x8x128xf32, #tpu.memory_space<vmem>>, vector<2x8x128xf32>
      tpu.vector_store %arg14[%c0_191, %c0_192, %c0_193], %486 {strides = array<i32>} : memref<2x8x128xf32, #tpu.memory_space<vmem>>, vector<2x8x128xf32>,
    } else {
    }
    %c0 = arith.constant 0 : index
    %c0_1 = arith.constant 0 : index
    %c0_2 = arith.constant 0 : index
    %3 = vector.load %arg2[%c0, %c0_1, %c0_2] : memref<4x8x128xf32, #tpu.memory_space<vmem>>, vector<4x8x128xf32>
    %4 = vector.shape_cast %3 : vector<4x8x128xf32> to vector<32x128xf32>
    %c0_3 = arith.constant 0 : index
    %c0_4 = arith.constant 0 : index
    %c0_5 = arith.constant 0 : index
    %5 = vector.load %arg4[%c0_3, %c0_4, %c0_5] : memref<2x128x512xf32, #tpu.memory_space<vmem>>, vector<1x128x512xf32>
    %6 = vector.shape_cast %5 : vector<1x128x512xf32> to vector<128x512xf32>
    %cst = arith.constant dense<0.000000e+00> : vector<32x512xf32>
    %7 = tpu.matmul %4, %6, %cst {dimension_numbers = #tpu.dot_dimension_numbers<[1], [0], [0], [1], [0, 0, 1, 1], [], []>} : vector<32x128xf32>, vector<128x512xf32>, vector<32x512xf32> -> vector<32x512xf32>
    %c0_6 = arith.constant 0 : index
    %c0_7 = arith.constant 0 : index
    %c0_8 = arith.constant 0 : index
    %8 = vector.load %arg6[%c0_6, %c0_7, %c0_8] : memref<2x1x512xf32, #tpu.memory_space<vmem>>, vector<1x1x512xf32>
    %9 = vector.shape_cast %8 : vector<1x1x512xf32> to vector<1x512xf32>
    %10 = vector.broadcast %9 : vector<1x512xf32> to vector<32x512xf32>
    %11 = arith.addf %7, %10 : vector<32x512xf32>
    %12 = vector.shape_cast %11 : vector<32x512xf32> to vector<4x8x512xf32>
    %c0_9 = arith.constant 0 : index
    %c0_10 = arith.constant 0 : index
    %c0_11 = arith.constant 0 : index
    %13 = vector.load %arg11[%c0_9, %c0_10, %c0_11] : memref<4x8x512xf32, #tpu.memory_space<vmem>>, vector<4x8x512xf32>
    tpu.vector_store %arg11[%c0_9, %c0_10, %c0_11], %12 {strides = array<i32>} : memref<4x8x512xf32, #tpu.memory_space<vmem>>, vector<4x8x512xf32>,
    %c0_12 = arith.constant 0 : index
    %c0_13 = arith.constant 0 : index
    %c0_14 = arith.constant 0 : index
    %14 = vector.load %arg3[%c0_12, %c0_13, %c0_14] : memref<4x8x128xf32, #tpu.memory_space<vmem>>, vector<4x8x128xf32>
    %15 = vector.shape_cast %14 : vector<4x8x128xf32> to vector<32x128xf32>
    %c1 = arith.constant 1 : index
    %c0_15 = arith.constant 0 : index
    %c0_16 = arith.constant 0 : index
    %16 = vector.load %arg4[%c1, %c0_15, %c0_16] : memref<2x128x512xf32, #tpu.memory_space<vmem>>, vector<1x128x512xf32>
    %17 = vector.shape_cast %16 : vector<1x128x512xf32> to vector<128x512xf32>
    %cst_17 = arith.constant dense<0.000000e+00> : vector<32x512xf32>
    %18 = tpu.matmul %15, %17, %cst_17 {dimension_numbers = #tpu.dot_dimension_numbers<[1], [0], [0], [1], [0, 0, 1, 1], [], []>} : vector<32x128xf32>, vector<128x512xf32>, vector<32x512xf32> -> vector<32x512xf32>
    %c1_18 = arith.constant 1 : index
    %c0_19 = arith.constant 0 : index
    %c0_20 = arith.constant 0 : index
    %19 = vector.load %arg6[%c1_18, %c0_19, %c0_20] : memref<2x1x512xf32, #tpu.memory_space<vmem>>, vector<1x1x512xf32>
    %20 = vector.shape_cast %19 : vector<1x1x512xf32> to vector<1x512xf32>
    %21 = vector.broadcast %20 : vector<1x512xf32> to vector<32x512xf32>
    %22 = arith.addf %18, %21 : vector<32x512xf32>
    %23 = vector.shape_cast %22 : vector<32x512xf32> to vector<4x8x512xf32>
    %c0_21 = arith.constant 0 : index
    %c0_22 = arith.constant 0 : index
    %c0_23 = arith.constant 0 : index
    %24 = vector.load %arg12[%c0_21, %c0_22, %c0_23] : memref<4x8x512xf32, #tpu.memory_space<vmem>>, vector<4x8x512xf32>
    tpu.vector_store %arg12[%c0_21, %c0_22, %c0_23], %23 {strides = array<i32>} : memref<4x8x512xf32, #tpu.memory_space<vmem>>, vector<4x8x512xf32>,
    %c0_24 = arith.constant 0 : index
    %c0_25 = arith.constant 0 : index
    %c0_26 = arith.constant 0 : index
    %25 = vector.load %arg5[%c0_24, %c0_25, %c0_26] : memref<2x128x512xf32, #tpu.memory_space<vmem>>, vector<1x128x512xf32>
    %26 = vector.shape_cast %25 : vector<1x128x512xf32> to vector<128x512xf32>
    %c1_27 = arith.constant 1 : index
    %c0_28 = arith.constant 0 : index
    %c0_29 = arith.constant 0 : index
    %27 = vector.load %arg5[%c1_27, %c0_28, %c0_29] : memref<2x128x512xf32, #tpu.memory_space<vmem>>, vector<1x128x512xf32>
    %28 = vector.shape_cast %27 : vector<1x128x512xf32> to vector<128x512xf32>
    %c0_30 = arith.constant 0 : index
    %c0_31 = arith.constant 0 : index
    %29 = vector.load %arg1[%c0_30, %c0_31] : memref<8x1xi32, #tpu.memory_space<vmem>>, vector<8x1xi32>
    %c4_i32 = arith.constant 4 : i32
    %30 = arith.muli %arg0, %c4_i32 : i32
    %c1_i32 = arith.constant 1 : i32
    %31 = arith.subi %c1_i32, %arg0 : i32
    %c4_i32_32 = arith.constant 4 : i32
    %32 = arith.muli %31, %c4_i32_32 : i32
    %c0_33 = arith.constant 0 : index
    %c0_34 = arith.constant 0 : index
    %c0_35 = arith.constant 0 : index
    %33 = vector.load %arg13[%c0_33, %c0_34, %c0_35] : memref<2x8x128xf32, #tpu.memory_space<vmem>>, vector<1x8x128xf32>
    %34 = vector.shape_cast %33 : vector<1x8x128xf32> to vector<8x128xf32>
    %c0_36 = arith.constant 0 : index
    %c0_37 = arith.constant 0 : index
    %c0_38 = arith.constant 0 : index
    %35 = vector.load %arg14[%c0_36, %c0_37, %c0_38] : memref<2x8x128xf32, #tpu.memory_space<vmem>>, vector<1x8x128xf32>
    %36 = vector.shape_cast %35 : vector<1x8x128xf32> to vector<8x128xf32>
    %c1_39 = arith.constant 1 : index
    %c0_40 = arith.constant 0 : index
    %c0_41 = arith.constant 0 : index
    %37 = vector.load %arg13[%c1_39, %c0_40, %c0_41] : memref<2x8x128xf32, #tpu.memory_space<vmem>>, vector<1x8x128xf32>
    %38 = vector.shape_cast %37 : vector<1x8x128xf32> to vector<8x128xf32>
    %c1_42 = arith.constant 1 : index
    %c0_43 = arith.constant 0 : index
    %c0_44 = arith.constant 0 : index
    %39 = vector.load %arg14[%c1_42, %c0_43, %c0_44] : memref<2x8x128xf32, #tpu.memory_space<vmem>>, vector<1x8x128xf32>
    %40 = vector.shape_cast %39 : vector<1x8x128xf32> to vector<8x128xf32>
    %c0_i32_45 = arith.constant 0 : i32
    %c3_i32 = arith.constant 3 : i32
    %41 = arith.subi %c3_i32, %c0_i32_45 : i32
    %42 = arith.index_cast %c0_i32_45 : i32 to index
    %c0_46 = arith.constant 0 : index
    %c0_47 = arith.constant 0 : index
    %43 = vector.load %arg11[%42, %c0_46, %c0_47] : memref<4x8x512xf32, #tpu.memory_space<vmem>>, vector<1x8x512xf32>
    %44 = vector.shape_cast %43 : vector<1x8x512xf32> to vector<8x512xf32>
    %cst_48 = arith.constant dense<0.000000e+00> : vector<8x512xf32>
    %45 = tpu.matmul %34, %26, %cst_48 {dimension_numbers = #tpu.dot_dimension_numbers<[1], [0], [0], [1], [0, 0, 1, 1], [], []>} : vector<8x128xf32>, vector<128x512xf32>, vector<8x512xf32> -> vector<8x512xf32>
    %46 = arith.addf %44, %45 : vector<8x512xf32>
    %47 = vector.extract_strided_slice %46 {offsets = [0, 0], sizes = [8, 128], strides = [1, 1]} : vector<8x512xf32> to vector<8x128xf32>
    %cst_49 = arith.constant 5.000000e-01 : f32
    %48 = vector.broadcast %cst_49 : f32 to vector<8x128xf32>
    %49 = arith.mulf %48, %47 : vector<8x128xf32>
    %50 = math.tanh %49 : vector<8x128xf32>
    %cst_50 = arith.constant 1.000000e+00 : f32
    %51 = vector.broadcast %cst_50 : f32 to vector<8x128xf32>
    %52 = arith.addf %50, %51 : vector<8x128xf32>
    %cst_51 = arith.constant 5.000000e-01 : f32
    %53 = vector.broadcast %cst_51 : f32 to vector<8x128xf32>
    %54 = arith.mulf %53, %52 : vector<8x128xf32>
    %55 = vector.extract_strided_slice %46 {offsets = [0, 128], sizes = [8, 128], strides = [1, 1]} : vector<8x512xf32> to vector<8x128xf32>
    %cst_52 = arith.constant 5.000000e-01 : f32
    %56 = vector.broadcast %cst_52 : f32 to vector<8x128xf32>
    %57 = arith.mulf %56, %55 : vector<8x128xf32>
    %58 = math.tanh %57 : vector<8x128xf32>
    %cst_53 = arith.constant 1.000000e+00 : f32
    %59 = vector.broadcast %cst_53 : f32 to vector<8x128xf32>
    %60 = arith.addf %58, %59 : vector<8x128xf32>
    %cst_54 = arith.constant 5.000000e-01 : f32
    %61 = vector.broadcast %cst_54 : f32 to vector<8x128xf32>
    %62 = arith.mulf %61, %60 : vector<8x128xf32>
    %63 = vector.extract_strided_slice %46 {offsets = [0, 256], sizes = [8, 128], strides = [1, 1]} : vector<8x512xf32> to vector<8x128xf32>
    %64 = math.tanh %63 : vector<8x128xf32>
    %65 = vector.extract_strided_slice %46 {offsets = [0, 384], sizes = [8, 128], strides = [1, 1]} : vector<8x512xf32> to vector<8x128xf32>
    %cst_55 = arith.constant 5.000000e-01 : f32
    %66 = vector.broadcast %cst_55 : f32 to vector<8x128xf32>
    %67 = arith.mulf %66, %65 : vector<8x128xf32>
    %68 = math.tanh %67 : vector<8x128xf32>
    %cst_56 = arith.constant 1.000000e+00 : f32
    %69 = vector.broadcast %cst_56 : f32 to vector<8x128xf32>
    %70 = arith.addf %68, %69 : vector<8x128xf32>
    %cst_57 = arith.constant 5.000000e-01 : f32
    %71 = vector.broadcast %cst_57 : f32 to vector<8x128xf32>
    %72 = arith.mulf %71, %70 : vector<8x128xf32>
    %73 = arith.mulf %62, %36 : vector<8x128xf32>
    %74 = arith.mulf %54, %64 : vector<8x128xf32>
    %75 = arith.addf %73, %74 : vector<8x128xf32>
    %76 = math.tanh %75 : vector<8x128xf32>
    %77 = arith.mulf %72, %76 : vector<8x128xf32>
    %78 = arith.addi %30, %c0_i32_45 : i32
    %79 = vector.broadcast %78 : i32 to vector<8x1xi32>
    %80 = arith.cmpi sgt, %29, %79 : vector<8x1xi32>
    %cst_58 = arith.constant 0.000000e+00 : f32
    %81 = vector.shape_cast %80 : vector<8x1xi1> to vector<8x1xi1>
    %82 = vector.broadcast %81 : vector<8x1xi1> to vector<8x128xi1>
    %83 = vector.broadcast %cst_58 : f32 to vector<8x128xf32>
    %84 = arith.select %82, %77, %83 : vector<8x128xi1>, vector<8x128xf32>
    %85 = arith.index_cast %c0_i32_45 : i32 to index
    %c0_59 = arith.constant 0 : index
    %c0_60 = arith.constant 0 : index
    %86 = vector.load %arg7[%85, %c0_59, %c0_60] : memref<4x8x128xf32, #tpu.memory_space<vmem>>, vector<1x8x128xf32>
    %87 = vector.shape_cast %86 : vector<1x8x128xf32> to vector<8x128xf32>
    %88 = vector.shape_cast %84 : vector<8x128xf32> to vector<1x8x128xf32>
    tpu.vector_store %arg7[%85, %c0_59, %c0_60], %88 {strides = array<i32>} : memref<4x8x128xf32, #tpu.memory_space<vmem>>, vector<1x8x128xf32>,
    %89 = vector.shape_cast %80 : vector<8x1xi1> to vector<8x1xi1>
    %90 = vector.broadcast %89 : vector<8x1xi1> to vector<8x128xi1>
    %91 = arith.select %90, %77, %34 : vector<8x128xi1>, vector<8x128xf32>
    %92 = vector.shape_cast %80 : vector<8x1xi1> to vector<8x1xi1>
    %93 = vector.broadcast %92 : vector<8x1xi1> to vector<8x128xi1>
    %94 = arith.select %93, %75, %36 : vector<8x128xi1>, vector<8x128xf32>
    %95 = arith.index_cast %41 : i32 to index
    %c0_61 = arith.constant 0 : index
    %c0_62 = arith.constant 0 : index
    %96 = vector.load %arg12[%95, %c0_61, %c0_62] : memref<4x8x512xf32, #tpu.memory_space<vmem>>, vector<1x8x512xf32>
    %97 = vector.shape_cast %96 : vector<1x8x512xf32> to vector<8x512xf32>
    %cst_63 = arith.constant dense<0.000000e+00> : vector<8x512xf32>
    %98 = tpu.matmul %38, %28, %cst_63 {dimension_numbers = #tpu.dot_dimension_numbers<[1], [0], [0], [1], [0, 0, 1, 1], [], []>} : vector<8x128xf32>, vector<128x512xf32>, vector<8x512xf32> -> vector<8x512xf32>
    %99 = arith.addf %97, %98 : vector<8x512xf32>
    %100 = vector.extract_strided_slice %99 {offsets = [0, 0], sizes = [8, 128], strides = [1, 1]} : vector<8x512xf32> to vector<8x128xf32>
    %cst_64 = arith.constant 5.000000e-01 : f32
    %101 = vector.broadcast %cst_64 : f32 to vector<8x128xf32>
    %102 = arith.mulf %101, %100 : vector<8x128xf32>
    %103 = math.tanh %102 : vector<8x128xf32>
    %cst_65 = arith.constant 1.000000e+00 : f32
    %104 = vector.broadcast %cst_65 : f32 to vector<8x128xf32>
    %105 = arith.addf %103, %104 : vector<8x128xf32>
    %cst_66 = arith.constant 5.000000e-01 : f32
    %106 = vector.broadcast %cst_66 : f32 to vector<8x128xf32>
    %107 = arith.mulf %106, %105 : vector<8x128xf32>
    %108 = vector.extract_strided_slice %99 {offsets = [0, 128], sizes = [8, 128], strides = [1, 1]} : vector<8x512xf32> to vector<8x128xf32>
    %cst_67 = arith.constant 5.000000e-01 : f32
    %109 = vector.broadcast %cst_67 : f32 to vector<8x128xf32>
    %110 = arith.mulf %109, %108 : vector<8x128xf32>
    %111 = math.tanh %110 : vector<8x128xf32>
    %cst_68 = arith.constant 1.000000e+00 : f32
    %112 = vector.broadcast %cst_68 : f32 to vector<8x128xf32>
    %113 = arith.addf %111, %112 : vector<8x128xf32>
    %cst_69 = arith.constant 5.000000e-01 : f32
    %114 = vector.broadcast %cst_69 : f32 to vector<8x128xf32>
    %115 = arith.mulf %114, %113 : vector<8x128xf32>
    %116 = vector.extract_strided_slice %99 {offsets = [0, 256], sizes = [8, 128], strides = [1, 1]} : vector<8x512xf32> to vector<8x128xf32>
    %117 = math.tanh %116 : vector<8x128xf32>
    %118 = vector.extract_strided_slice %99 {offsets = [0, 384], sizes = [8, 128], strides = [1, 1]} : vector<8x512xf32> to vector<8x128xf32>
    %cst_70 = arith.constant 5.000000e-01 : f32
    %119 = vector.broadcast %cst_70 : f32 to vector<8x128xf32>
    %120 = arith.mulf %119, %118 : vector<8x128xf32>
    %121 = math.tanh %120 : vector<8x128xf32>
    %cst_71 = arith.constant 1.000000e+00 : f32
    %122 = vector.broadcast %cst_71 : f32 to vector<8x128xf32>
    %123 = arith.addf %121, %122 : vector<8x128xf32>
    %cst_72 = arith.constant 5.000000e-01 : f32
    %124 = vector.broadcast %cst_72 : f32 to vector<8x128xf32>
    %125 = arith.mulf %124, %123 : vector<8x128xf32>
    %126 = arith.mulf %115, %40 : vector<8x128xf32>
    %127 = arith.mulf %107, %117 : vector<8x128xf32>
    %128 = arith.addf %126, %127 : vector<8x128xf32>
    %129 = math.tanh %128 : vector<8x128xf32>
    %130 = arith.mulf %125, %129 : vector<8x128xf32>
    %131 = arith.addi %32, %41 : i32
    %132 = vector.broadcast %131 : i32 to vector<8x1xi32>
    %133 = arith.cmpi sgt, %29, %132 : vector<8x1xi32>
    %cst_73 = arith.constant 0.000000e+00 : f32
    %134 = vector.shape_cast %133 : vector<8x1xi1> to vector<8x1xi1>
    %135 = vector.broadcast %134 : vector<8x1xi1> to vector<8x128xi1>
    %136 = vector.broadcast %cst_73 : f32 to vector<8x128xf32>
    %137 = arith.select %135, %130, %136 : vector<8x128xi1>, vector<8x128xf32>
    %138 = arith.index_cast %41 : i32 to index
    %c0_74 = arith.constant 0 : index
    %c0_75 = arith.constant 0 : index
    %139 = vector.load %arg8[%138, %c0_74, %c0_75] : memref<4x8x128xf32, #tpu.memory_space<vmem>>, vector<1x8x128xf32>
    %140 = vector.shape_cast %139 : vector<1x8x128xf32> to vector<8x128xf32>
    %141 = vector.shape_cast %137 : vector<8x128xf32> to vector<1x8x128xf32>
    tpu.vector_store %arg8[%138, %c0_74, %c0_75], %141 {strides = array<i32>} : memref<4x8x128xf32, #tpu.memory_space<vmem>>, vector<1x8x128xf32>,
    %142 = vector.shape_cast %133 : vector<8x1xi1> to vector<8x1xi1>
    %143 = vector.broadcast %142 : vector<8x1xi1> to vector<8x128xi1>
    %144 = arith.select %143, %130, %38 : vector<8x128xi1>, vector<8x128xf32>
    %145 = vector.shape_cast %133 : vector<8x1xi1> to vector<8x1xi1>
    %146 = vector.broadcast %145 : vector<8x1xi1> to vector<8x128xi1>
    %147 = arith.select %146, %128, %40 : vector<8x128xi1>, vector<8x128xf32>
    %c1_i32_76 = arith.constant 1 : i32
    %c3_i32_77 = arith.constant 3 : i32
    %148 = arith.subi %c3_i32_77, %c1_i32_76 : i32
    %149 = arith.index_cast %c1_i32_76 : i32 to index
    %c0_78 = arith.constant 0 : index
    %c0_79 = arith.constant 0 : index
    %150 = vector.load %arg11[%149, %c0_78, %c0_79] : memref<4x8x512xf32, #tpu.memory_space<vmem>>, vector<1x8x512xf32>
    %151 = vector.shape_cast %150 : vector<1x8x512xf32> to vector<8x512xf32>
    %cst_80 = arith.constant dense<0.000000e+00> : vector<8x512xf32>
    %152 = tpu.matmul %91, %26, %cst_80 {dimension_numbers = #tpu.dot_dimension_numbers<[1], [0], [0], [1], [0, 0, 1, 1], [], []>} : vector<8x128xf32>, vector<128x512xf32>, vector<8x512xf32> -> vector<8x512xf32>
    %153 = arith.addf %151, %152 : vector<8x512xf32>
    %154 = vector.extract_strided_slice %153 {offsets = [0, 0], sizes = [8, 128], strides = [1, 1]} : vector<8x512xf32> to vector<8x128xf32>
    %cst_81 = arith.constant 5.000000e-01 : f32
    %155 = vector.broadcast %cst_81 : f32 to vector<8x128xf32>
    %156 = arith.mulf %155, %154 : vector<8x128xf32>
    %157 = math.tanh %156 : vector<8x128xf32>
    %cst_82 = arith.constant 1.000000e+00 : f32
    %158 = vector.broadcast %cst_82 : f32 to vector<8x128xf32>
    %159 = arith.addf %157, %158 : vector<8x128xf32>
    %cst_83 = arith.constant 5.000000e-01 : f32
    %160 = vector.broadcast %cst_83 : f32 to vector<8x128xf32>
    %161 = arith.mulf %160, %159 : vector<8x128xf32>
    %162 = vector.extract_strided_slice %153 {offsets = [0, 128], sizes = [8, 128], strides = [1, 1]} : vector<8x512xf32> to vector<8x128xf32>
    %cst_84 = arith.constant 5.000000e-01 : f32
    %163 = vector.broadcast %cst_84 : f32 to vector<8x128xf32>
    %164 = arith.mulf %163, %162 : vector<8x128xf32>
    %165 = math.tanh %164 : vector<8x128xf32>
    %cst_85 = arith.constant 1.000000e+00 : f32
    %166 = vector.broadcast %cst_85 : f32 to vector<8x128xf32>
    %167 = arith.addf %165, %166 : vector<8x128xf32>
    %cst_86 = arith.constant 5.000000e-01 : f32
    %168 = vector.broadcast %cst_86 : f32 to vector<8x128xf32>
    %169 = arith.mulf %168, %167 : vector<8x128xf32>
    %170 = vector.extract_strided_slice %153 {offsets = [0, 256], sizes = [8, 128], strides = [1, 1]} : vector<8x512xf32> to vector<8x128xf32>
    %171 = math.tanh %170 : vector<8x128xf32>
    %172 = vector.extract_strided_slice %153 {offsets = [0, 384], sizes = [8, 128], strides = [1, 1]} : vector<8x512xf32> to vector<8x128xf32>
    %cst_87 = arith.constant 5.000000e-01 : f32
    %173 = vector.broadcast %cst_87 : f32 to vector<8x128xf32>
    %174 = arith.mulf %173, %172 : vector<8x128xf32>
    %175 = math.tanh %174 : vector<8x128xf32>
    %cst_88 = arith.constant 1.000000e+00 : f32
    %176 = vector.broadcast %cst_88 : f32 to vector<8x128xf32>
    %177 = arith.addf %175, %176 : vector<8x128xf32>
    %cst_89 = arith.constant 5.000000e-01 : f32
    %178 = vector.broadcast %cst_89 : f32 to vector<8x128xf32>
    %179 = arith.mulf %178, %177 : vector<8x128xf32>
    %180 = arith.mulf %169, %94 : vector<8x128xf32>
    %181 = arith.mulf %161, %171 : vector<8x128xf32>
    %182 = arith.addf %180, %181 : vector<8x128xf32>
    %183 = math.tanh %182 : vector<8x128xf32>
    %184 = arith.mulf %179, %183 : vector<8x128xf32>
    %185 = arith.addi %30, %c1_i32_76 : i32
    %186 = vector.broadcast %185 : i32 to vector<8x1xi32>
    %187 = arith.cmpi sgt, %29, %186 : vector<8x1xi32>
    %cst_90 = arith.constant 0.000000e+00 : f32
    %188 = vector.shape_cast %187 : vector<8x1xi1> to vector<8x1xi1>
    %189 = vector.broadcast %188 : vector<8x1xi1> to vector<8x128xi1>
    %190 = vector.broadcast %cst_90 : f32 to vector<8x128xf32>
    %191 = arith.select %189, %184, %190 : vector<8x128xi1>, vector<8x128xf32>
    %192 = arith.index_cast %c1_i32_76 : i32 to index
    %c0_91 = arith.constant 0 : index
    %c0_92 = arith.constant 0 : index
    %193 = vector.load %arg7[%192, %c0_91, %c0_92] : memref<4x8x128xf32, #tpu.memory_space<vmem>>, vector<1x8x128xf32>
    %194 = vector.shape_cast %193 : vector<1x8x128xf32> to vector<8x128xf32>
    %195 = vector.shape_cast %191 : vector<8x128xf32> to vector<1x8x128xf32>
    tpu.vector_store %arg7[%192, %c0_91, %c0_92], %195 {strides = array<i32>} : memref<4x8x128xf32, #tpu.memory_space<vmem>>, vector<1x8x128xf32>,
    %196 = vector.shape_cast %187 : vector<8x1xi1> to vector<8x1xi1>
    %197 = vector.broadcast %196 : vector<8x1xi1> to vector<8x128xi1>
    %198 = arith.select %197, %184, %91 : vector<8x128xi1>, vector<8x128xf32>
    %199 = vector.shape_cast %187 : vector<8x1xi1> to vector<8x1xi1>
    %200 = vector.broadcast %199 : vector<8x1xi1> to vector<8x128xi1>
    %201 = arith.select %200, %182, %94 : vector<8x128xi1>, vector<8x128xf32>
    %202 = arith.index_cast %148 : i32 to index
    %c0_93 = arith.constant 0 : index
    %c0_94 = arith.constant 0 : index
    %203 = vector.load %arg12[%202, %c0_93, %c0_94] : memref<4x8x512xf32, #tpu.memory_space<vmem>>, vector<1x8x512xf32>
    %204 = vector.shape_cast %203 : vector<1x8x512xf32> to vector<8x512xf32>
    %cst_95 = arith.constant dense<0.000000e+00> : vector<8x512xf32>
    %205 = tpu.matmul %144, %28, %cst_95 {dimension_numbers = #tpu.dot_dimension_numbers<[1], [0], [0], [1], [0, 0, 1, 1], [], []>} : vector<8x128xf32>, vector<128x512xf32>, vector<8x512xf32> -> vector<8x512xf32>
    %206 = arith.addf %204, %205 : vector<8x512xf32>
    %207 = vector.extract_strided_slice %206 {offsets = [0, 0], sizes = [8, 128], strides = [1, 1]} : vector<8x512xf32> to vector<8x128xf32>
    %cst_96 = arith.constant 5.000000e-01 : f32
    %208 = vector.broadcast %cst_96 : f32 to vector<8x128xf32>
    %209 = arith.mulf %208, %207 : vector<8x128xf32>
    %210 = math.tanh %209 : vector<8x128xf32>
    %cst_97 = arith.constant 1.000000e+00 : f32
    %211 = vector.broadcast %cst_97 : f32 to vector<8x128xf32>
    %212 = arith.addf %210, %211 : vector<8x128xf32>
    %cst_98 = arith.constant 5.000000e-01 : f32
    %213 = vector.broadcast %cst_98 : f32 to vector<8x128xf32>
    %214 = arith.mulf %213, %212 : vector<8x128xf32>
    %215 = vector.extract_strided_slice %206 {offsets = [0, 128], sizes = [8, 128], strides = [1, 1]} : vector<8x512xf32> to vector<8x128xf32>
    %cst_99 = arith.constant 5.000000e-01 : f32
    %216 = vector.broadcast %cst_99 : f32 to vector<8x128xf32>
    %217 = arith.mulf %216, %215 : vector<8x128xf32>
    %218 = math.tanh %217 : vector<8x128xf32>
    %cst_100 = arith.constant 1.000000e+00 : f32
    %219 = vector.broadcast %cst_100 : f32 to vector<8x128xf32>
    %220 = arith.addf %218, %219 : vector<8x128xf32>
    %cst_101 = arith.constant 5.000000e-01 : f32
    %221 = vector.broadcast %cst_101 : f32 to vector<8x128xf32>
    %222 = arith.mulf %221, %220 : vector<8x128xf32>
    %223 = vector.extract_strided_slice %206 {offsets = [0, 256], sizes = [8, 128], strides = [1, 1]} : vector<8x512xf32> to vector<8x128xf32>
    %224 = math.tanh %223 : vector<8x128xf32>
    %225 = vector.extract_strided_slice %206 {offsets = [0, 384], sizes = [8, 128], strides = [1, 1]} : vector<8x512xf32> to vector<8x128xf32>
    %cst_102 = arith.constant 5.000000e-01 : f32
    %226 = vector.broadcast %cst_102 : f32 to vector<8x128xf32>
    %227 = arith.mulf %226, %225 : vector<8x128xf32>
    %228 = math.tanh %227 : vector<8x128xf32>
    %cst_103 = arith.constant 1.000000e+00 : f32
    %229 = vector.broadcast %cst_103 : f32 to vector<8x128xf32>
    %230 = arith.addf %228, %229 : vector<8x128xf32>
    %cst_104 = arith.constant 5.000000e-01 : f32
    %231 = vector.broadcast %cst_104 : f32 to vector<8x128xf32>
    %232 = arith.mulf %231, %230 : vector<8x128xf32>
    %233 = arith.mulf %222, %147 : vector<8x128xf32>
    %234 = arith.mulf %214, %224 : vector<8x128xf32>
    %235 = arith.addf %233, %234 : vector<8x128xf32>
    %236 = math.tanh %235 : vector<8x128xf32>
    %237 = arith.mulf %232, %236 : vector<8x128xf32>
    %238 = arith.addi %32, %148 : i32
    %239 = vector.broadcast %238 : i32 to vector<8x1xi32>
    %240 = arith.cmpi sgt, %29, %239 : vector<8x1xi32>
    %cst_105 = arith.constant 0.000000e+00 : f32
    %241 = vector.shape_cast %240 : vector<8x1xi1> to vector<8x1xi1>
    %242 = vector.broadcast %241 : vector<8x1xi1> to vector<8x128xi1>
    %243 = vector.broadcast %cst_105 : f32 to vector<8x128xf32>
    %244 = arith.select %242, %237, %243 : vector<8x128xi1>, vector<8x128xf32>
    %245 = arith.index_cast %148 : i32 to index
    %c0_106 = arith.constant 0 : index
    %c0_107 = arith.constant 0 : index
    %246 = vector.load %arg8[%245, %c0_106, %c0_107] : memref<4x8x128xf32, #tpu.memory_space<vmem>>, vector<1x8x128xf32>
    %247 = vector.shape_cast %246 : vector<1x8x128xf32> to vector<8x128xf32>
    %248 = vector.shape_cast %244 : vector<8x128xf32> to vector<1x8x128xf32>
    tpu.vector_store %arg8[%245, %c0_106, %c0_107], %248 {strides = array<i32>} : memref<4x8x128xf32, #tpu.memory_space<vmem>>, vector<1x8x128xf32>,
    %249 = vector.shape_cast %240 : vector<8x1xi1> to vector<8x1xi1>
    %250 = vector.broadcast %249 : vector<8x1xi1> to vector<8x128xi1>
    %251 = arith.select %250, %237, %144 : vector<8x128xi1>, vector<8x128xf32>
    %252 = vector.shape_cast %240 : vector<8x1xi1> to vector<8x1xi1>
    %253 = vector.broadcast %252 : vector<8x1xi1> to vector<8x128xi1>
    %254 = arith.select %253, %235, %147 : vector<8x128xi1>, vector<8x128xf32>
    %c2_i32 = arith.constant 2 : i32
    %c3_i32_108 = arith.constant 3 : i32
    %255 = arith.subi %c3_i32_108, %c2_i32 : i32
    %256 = arith.index_cast %c2_i32 : i32 to index
    %c0_109 = arith.constant 0 : index
    %c0_110 = arith.constant 0 : index
    %257 = vector.load %arg11[%256, %c0_109, %c0_110] : memref<4x8x512xf32, #tpu.memory_space<vmem>>, vector<1x8x512xf32>
    %258 = vector.shape_cast %257 : vector<1x8x512xf32> to vector<8x512xf32>
    %cst_111 = arith.constant dense<0.000000e+00> : vector<8x512xf32>
    %259 = tpu.matmul %198, %26, %cst_111 {dimension_numbers = #tpu.dot_dimension_numbers<[1], [0], [0], [1], [0, 0, 1, 1], [], []>} : vector<8x128xf32>, vector<128x512xf32>, vector<8x512xf32> -> vector<8x512xf32>
    %260 = arith.addf %258, %259 : vector<8x512xf32>
    %261 = vector.extract_strided_slice %260 {offsets = [0, 0], sizes = [8, 128], strides = [1, 1]} : vector<8x512xf32> to vector<8x128xf32>
    %cst_112 = arith.constant 5.000000e-01 : f32
    %262 = vector.broadcast %cst_112 : f32 to vector<8x128xf32>
    %263 = arith.mulf %262, %261 : vector<8x128xf32>
    %264 = math.tanh %263 : vector<8x128xf32>
    %cst_113 = arith.constant 1.000000e+00 : f32
    %265 = vector.broadcast %cst_113 : f32 to vector<8x128xf32>
    %266 = arith.addf %264, %265 : vector<8x128xf32>
    %cst_114 = arith.constant 5.000000e-01 : f32
    %267 = vector.broadcast %cst_114 : f32 to vector<8x128xf32>
    %268 = arith.mulf %267, %266 : vector<8x128xf32>
    %269 = vector.extract_strided_slice %260 {offsets = [0, 128], sizes = [8, 128], strides = [1, 1]} : vector<8x512xf32> to vector<8x128xf32>
    %cst_115 = arith.constant 5.000000e-01 : f32
    %270 = vector.broadcast %cst_115 : f32 to vector<8x128xf32>
    %271 = arith.mulf %270, %269 : vector<8x128xf32>
    %272 = math.tanh %271 : vector<8x128xf32>
    %cst_116 = arith.constant 1.000000e+00 : f32
    %273 = vector.broadcast %cst_116 : f32 to vector<8x128xf32>
    %274 = arith.addf %272, %273 : vector<8x128xf32>
    %cst_117 = arith.constant 5.000000e-01 : f32
    %275 = vector.broadcast %cst_117 : f32 to vector<8x128xf32>
    %276 = arith.mulf %275, %274 : vector<8x128xf32>
    %277 = vector.extract_strided_slice %260 {offsets = [0, 256], sizes = [8, 128], strides = [1, 1]} : vector<8x512xf32> to vector<8x128xf32>
    %278 = math.tanh %277 : vector<8x128xf32>
    %279 = vector.extract_strided_slice %260 {offsets = [0, 384], sizes = [8, 128], strides = [1, 1]} : vector<8x512xf32> to vector<8x128xf32>
    %cst_118 = arith.constant 5.000000e-01 : f32
    %280 = vector.broadcast %cst_118 : f32 to vector<8x128xf32>
    %281 = arith.mulf %280, %279 : vector<8x128xf32>
    %282 = math.tanh %281 : vector<8x128xf32>
    %cst_119 = arith.constant 1.000000e+00 : f32
    %283 = vector.broadcast %cst_119 : f32 to vector<8x128xf32>
    %284 = arith.addf %282, %283 : vector<8x128xf32>
    %cst_120 = arith.constant 5.000000e-01 : f32
    %285 = vector.broadcast %cst_120 : f32 to vector<8x128xf32>
    %286 = arith.mulf %285, %284 : vector<8x128xf32>
    %287 = arith.mulf %276, %201 : vector<8x128xf32>
    %288 = arith.mulf %268, %278 : vector<8x128xf32>
    %289 = arith.addf %287, %288 : vector<8x128xf32>
    %290 = math.tanh %289 : vector<8x128xf32>
    %291 = arith.mulf %286, %290 : vector<8x128xf32>
    %292 = arith.addi %30, %c2_i32 : i32
    %293 = vector.broadcast %292 : i32 to vector<8x1xi32>
    %294 = arith.cmpi sgt, %29, %293 : vector<8x1xi32>
    %cst_121 = arith.constant 0.000000e+00 : f32
    %295 = vector.shape_cast %294 : vector<8x1xi1> to vector<8x1xi1>
    %296 = vector.broadcast %295 : vector<8x1xi1> to vector<8x128xi1>
    %297 = vector.broadcast %cst_121 : f32 to vector<8x128xf32>
    %298 = arith.select %296, %291, %297 : vector<8x128xi1>, vector<8x128xf32>
    %299 = arith.index_cast %c2_i32 : i32 to index
    %c0_122 = arith.constant 0 : index
    %c0_123 = arith.constant 0 : index
    %300 = vector.load %arg7[%299, %c0_122, %c0_123] : memref<4x8x128xf32, #tpu.memory_space<vmem>>, vector<1x8x128xf32>
    %301 = vector.shape_cast %300 : vector<1x8x128xf32> to vector<8x128xf32>
    %302 = vector.shape_cast %298 : vector<8x128xf32> to vector<1x8x128xf32>
    tpu.vector_store %arg7[%299, %c0_122, %c0_123], %302 {strides = array<i32>} : memref<4x8x128xf32, #tpu.memory_space<vmem>>, vector<1x8x128xf32>,
    %303 = vector.shape_cast %294 : vector<8x1xi1> to vector<8x1xi1>
    %304 = vector.broadcast %303 : vector<8x1xi1> to vector<8x128xi1>
    %305 = arith.select %304, %291, %198 : vector<8x128xi1>, vector<8x128xf32>
    %306 = vector.shape_cast %294 : vector<8x1xi1> to vector<8x1xi1>
    %307 = vector.broadcast %306 : vector<8x1xi1> to vector<8x128xi1>
    %308 = arith.select %307, %289, %201 : vector<8x128xi1>, vector<8x128xf32>
    %309 = arith.index_cast %255 : i32 to index
    %c0_124 = arith.constant 0 : index
    %c0_125 = arith.constant 0 : index
    %310 = vector.load %arg12[%309, %c0_124, %c0_125] : memref<4x8x512xf32, #tpu.memory_space<vmem>>, vector<1x8x512xf32>
    %311 = vector.shape_cast %310 : vector<1x8x512xf32> to vector<8x512xf32>
    %cst_126 = arith.constant dense<0.000000e+00> : vector<8x512xf32>
    %312 = tpu.matmul %251, %28, %cst_126 {dimension_numbers = #tpu.dot_dimension_numbers<[1], [0], [0], [1], [0, 0, 1, 1], [], []>} : vector<8x128xf32>, vector<128x512xf32>, vector<8x512xf32> -> vector<8x512xf32>
    %313 = arith.addf %311, %312 : vector<8x512xf32>
    %314 = vector.extract_strided_slice %313 {offsets = [0, 0], sizes = [8, 128], strides = [1, 1]} : vector<8x512xf32> to vector<8x128xf32>
    %cst_127 = arith.constant 5.000000e-01 : f32
    %315 = vector.broadcast %cst_127 : f32 to vector<8x128xf32>
    %316 = arith.mulf %315, %314 : vector<8x128xf32>
    %317 = math.tanh %316 : vector<8x128xf32>
    %cst_128 = arith.constant 1.000000e+00 : f32
    %318 = vector.broadcast %cst_128 : f32 to vector<8x128xf32>
    %319 = arith.addf %317, %318 : vector<8x128xf32>
    %cst_129 = arith.constant 5.000000e-01 : f32
    %320 = vector.broadcast %cst_129 : f32 to vector<8x128xf32>
    %321 = arith.mulf %320, %319 : vector<8x128xf32>
    %322 = vector.extract_strided_slice %313 {offsets = [0, 128], sizes = [8, 128], strides = [1, 1]} : vector<8x512xf32> to vector<8x128xf32>
    %cst_130 = arith.constant 5.000000e-01 : f32
    %323 = vector.broadcast %cst_130 : f32 to vector<8x128xf32>
    %324 = arith.mulf %323, %322 : vector<8x128xf32>
    %325 = math.tanh %324 : vector<8x128xf32>
    %cst_131 = arith.constant 1.000000e+00 : f32
    %326 = vector.broadcast %cst_131 : f32 to vector<8x128xf32>
    %327 = arith.addf %325, %326 : vector<8x128xf32>
    %cst_132 = arith.constant 5.000000e-01 : f32
    %328 = vector.broadcast %cst_132 : f32 to vector<8x128xf32>
    %329 = arith.mulf %328, %327 : vector<8x128xf32>
    %330 = vector.extract_strided_slice %313 {offsets = [0, 256], sizes = [8, 128], strides = [1, 1]} : vector<8x512xf32> to vector<8x128xf32>
    %331 = math.tanh %330 : vector<8x128xf32>
    %332 = vector.extract_strided_slice %313 {offsets = [0, 384], sizes = [8, 128], strides = [1, 1]} : vector<8x512xf32> to vector<8x128xf32>
    %cst_133 = arith.constant 5.000000e-01 : f32
    %333 = vector.broadcast %cst_133 : f32 to vector<8x128xf32>
    %334 = arith.mulf %333, %332 : vector<8x128xf32>
    %335 = math.tanh %334 : vector<8x128xf32>
    %cst_134 = arith.constant 1.000000e+00 : f32
    %336 = vector.broadcast %cst_134 : f32 to vector<8x128xf32>
    %337 = arith.addf %335, %336 : vector<8x128xf32>
    %cst_135 = arith.constant 5.000000e-01 : f32
    %338 = vector.broadcast %cst_135 : f32 to vector<8x128xf32>
    %339 = arith.mulf %338, %337 : vector<8x128xf32>
    %340 = arith.mulf %329, %254 : vector<8x128xf32>
    %341 = arith.mulf %321, %331 : vector<8x128xf32>
    %342 = arith.addf %340, %341 : vector<8x128xf32>
    %343 = math.tanh %342 : vector<8x128xf32>
    %344 = arith.mulf %339, %343 : vector<8x128xf32>
    %345 = arith.addi %32, %255 : i32
    %346 = vector.broadcast %345 : i32 to vector<8x1xi32>
    %347 = arith.cmpi sgt, %29, %346 : vector<8x1xi32>
    %cst_136 = arith.constant 0.000000e+00 : f32
    %348 = vector.shape_cast %347 : vector<8x1xi1> to vector<8x1xi1>
    %349 = vector.broadcast %348 : vector<8x1xi1> to vector<8x128xi1>
    %350 = vector.broadcast %cst_136 : f32 to vector<8x128xf32>
    %351 = arith.select %349, %344, %350 : vector<8x128xi1>, vector<8x128xf32>
    %352 = arith.index_cast %255 : i32 to index
    %c0_137 = arith.constant 0 : index
    %c0_138 = arith.constant 0 : index
    %353 = vector.load %arg8[%352, %c0_137, %c0_138] : memref<4x8x128xf32, #tpu.memory_space<vmem>>, vector<1x8x128xf32>
    %354 = vector.shape_cast %353 : vector<1x8x128xf32> to vector<8x128xf32>
    %355 = vector.shape_cast %351 : vector<8x128xf32> to vector<1x8x128xf32>
    tpu.vector_store %arg8[%352, %c0_137, %c0_138], %355 {strides = array<i32>} : memref<4x8x128xf32, #tpu.memory_space<vmem>>, vector<1x8x128xf32>,
    %356 = vector.shape_cast %347 : vector<8x1xi1> to vector<8x1xi1>
    %357 = vector.broadcast %356 : vector<8x1xi1> to vector<8x128xi1>
    %358 = arith.select %357, %344, %251 : vector<8x128xi1>, vector<8x128xf32>
    %359 = vector.shape_cast %347 : vector<8x1xi1> to vector<8x1xi1>
    %360 = vector.broadcast %359 : vector<8x1xi1> to vector<8x128xi1>
    %361 = arith.select %360, %342, %254 : vector<8x128xi1>, vector<8x128xf32>
    %c3_i32_139 = arith.constant 3 : i32
    %c3_i32_140 = arith.constant 3 : i32
    %362 = arith.subi %c3_i32_140, %c3_i32_139 : i32
    %363 = arith.index_cast %c3_i32_139 : i32 to index
    %c0_141 = arith.constant 0 : index
    %c0_142 = arith.constant 0 : index
    %364 = vector.load %arg11[%363, %c0_141, %c0_142] : memref<4x8x512xf32, #tpu.memory_space<vmem>>, vector<1x8x512xf32>
    %365 = vector.shape_cast %364 : vector<1x8x512xf32> to vector<8x512xf32>
    %cst_143 = arith.constant dense<0.000000e+00> : vector<8x512xf32>
    %366 = tpu.matmul %305, %26, %cst_143 {dimension_numbers = #tpu.dot_dimension_numbers<[1], [0], [0], [1], [0, 0, 1, 1], [], []>} : vector<8x128xf32>, vector<128x512xf32>, vector<8x512xf32> -> vector<8x512xf32>
    %367 = arith.addf %365, %366 : vector<8x512xf32>
    %368 = vector.extract_strided_slice %367 {offsets = [0, 0], sizes = [8, 128], strides = [1, 1]} : vector<8x512xf32> to vector<8x128xf32>
    %cst_144 = arith.constant 5.000000e-01 : f32
    %369 = vector.broadcast %cst_144 : f32 to vector<8x128xf32>
    %370 = arith.mulf %369, %368 : vector<8x128xf32>
    %371 = math.tanh %370 : vector<8x128xf32>
    %cst_145 = arith.constant 1.000000e+00 : f32
    %372 = vector.broadcast %cst_145 : f32 to vector<8x128xf32>
    %373 = arith.addf %371, %372 : vector<8x128xf32>
    %cst_146 = arith.constant 5.000000e-01 : f32
    %374 = vector.broadcast %cst_146 : f32 to vector<8x128xf32>
    %375 = arith.mulf %374, %373 : vector<8x128xf32>
    %376 = vector.extract_strided_slice %367 {offsets = [0, 128], sizes = [8, 128], strides = [1, 1]} : vector<8x512xf32> to vector<8x128xf32>
    %cst_147 = arith.constant 5.000000e-01 : f32
    %377 = vector.broadcast %cst_147 : f32 to vector<8x128xf32>
    %378 = arith.mulf %377, %376 : vector<8x128xf32>
    %379 = math.tanh %378 : vector<8x128xf32>
    %cst_148 = arith.constant 1.000000e+00 : f32
    %380 = vector.broadcast %cst_148 : f32 to vector<8x128xf32>
    %381 = arith.addf %379, %380 : vector<8x128xf32>
    %cst_149 = arith.constant 5.000000e-01 : f32
    %382 = vector.broadcast %cst_149 : f32 to vector<8x128xf32>
    %383 = arith.mulf %382, %381 : vector<8x128xf32>
    %384 = vector.extract_strided_slice %367 {offsets = [0, 256], sizes = [8, 128], strides = [1, 1]} : vector<8x512xf32> to vector<8x128xf32>
    %385 = math.tanh %384 : vector<8x128xf32>
    %386 = vector.extract_strided_slice %367 {offsets = [0, 384], sizes = [8, 128], strides = [1, 1]} : vector<8x512xf32> to vector<8x128xf32>
    %cst_150 = arith.constant 5.000000e-01 : f32
    %387 = vector.broadcast %cst_150 : f32 to vector<8x128xf32>
    %388 = arith.mulf %387, %386 : vector<8x128xf32>
    %389 = math.tanh %388 : vector<8x128xf32>
    %cst_151 = arith.constant 1.000000e+00 : f32
    %390 = vector.broadcast %cst_151 : f32 to vector<8x128xf32>
    %391 = arith.addf %389, %390 : vector<8x128xf32>
    %cst_152 = arith.constant 5.000000e-01 : f32
    %392 = vector.broadcast %cst_152 : f32 to vector<8x128xf32>
    %393 = arith.mulf %392, %391 : vector<8x128xf32>
    %394 = arith.mulf %383, %308 : vector<8x128xf32>
    %395 = arith.mulf %375, %385 : vector<8x128xf32>
    %396 = arith.addf %394, %395 : vector<8x128xf32>
    %397 = math.tanh %396 : vector<8x128xf32>
    %398 = arith.mulf %393, %397 : vector<8x128xf32>
    %399 = arith.addi %30, %c3_i32_139 : i32
    %400 = vector.broadcast %399 : i32 to vector<8x1xi32>
    %401 = arith.cmpi sgt, %29, %400 : vector<8x1xi32>
    %cst_153 = arith.constant 0.000000e+00 : f32
    %402 = vector.shape_cast %401 : vector<8x1xi1> to vector<8x1xi1>
    %403 = vector.broadcast %402 : vector<8x1xi1> to vector<8x128xi1>
    %404 = vector.broadcast %cst_153 : f32 to vector<8x128xf32>
    %405 = arith.select %403, %398, %404 : vector<8x128xi1>, vector<8x128xf32>
    %406 = arith.index_cast %c3_i32_139 : i32 to index
    %c0_154 = arith.constant 0 : index
    %c0_155 = arith.constant 0 : index
    %407 = vector.load %arg7[%406, %c0_154, %c0_155] : memref<4x8x128xf32, #tpu.memory_space<vmem>>, vector<1x8x128xf32>
    %408 = vector.shape_cast %407 : vector<1x8x128xf32> to vector<8x128xf32>
    %409 = vector.shape_cast %405 : vector<8x128xf32> to vector<1x8x128xf32>
    tpu.vector_store %arg7[%406, %c0_154, %c0_155], %409 {strides = array<i32>} : memref<4x8x128xf32, #tpu.memory_space<vmem>>, vector<1x8x128xf32>,
    %410 = vector.shape_cast %401 : vector<8x1xi1> to vector<8x1xi1>
    %411 = vector.broadcast %410 : vector<8x1xi1> to vector<8x128xi1>
    %412 = arith.select %411, %398, %305 : vector<8x128xi1>, vector<8x128xf32>
    %413 = vector.shape_cast %401 : vector<8x1xi1> to vector<8x1xi1>
    %414 = vector.broadcast %413 : vector<8x1xi1> to vector<8x128xi1>
    %415 = arith.select %414, %396, %308 : vector<8x128xi1>, vector<8x128xf32>
    %416 = arith.index_cast %362 : i32 to index
    %c0_156 = arith.constant 0 : index
    %c0_157 = arith.constant 0 : index
    %417 = vector.load %arg12[%416, %c0_156, %c0_157] : memref<4x8x512xf32, #tpu.memory_space<vmem>>, vector<1x8x512xf32>
    %418 = vector.shape_cast %417 : vector<1x8x512xf32> to vector<8x512xf32>
    %cst_158 = arith.constant dense<0.000000e+00> : vector<8x512xf32>
    %419 = tpu.matmul %358, %28, %cst_158 {dimension_numbers = #tpu.dot_dimension_numbers<[1], [0], [0], [1], [0, 0, 1, 1], [], []>} : vector<8x128xf32>, vector<128x512xf32>, vector<8x512xf32> -> vector<8x512xf32>
    %420 = arith.addf %418, %419 : vector<8x512xf32>
    %421 = vector.extract_strided_slice %420 {offsets = [0, 0], sizes = [8, 128], strides = [1, 1]} : vector<8x512xf32> to vector<8x128xf32>
    %cst_159 = arith.constant 5.000000e-01 : f32
    %422 = vector.broadcast %cst_159 : f32 to vector<8x128xf32>
    %423 = arith.mulf %422, %421 : vector<8x128xf32>
    %424 = math.tanh %423 : vector<8x128xf32>
    %cst_160 = arith.constant 1.000000e+00 : f32
    %425 = vector.broadcast %cst_160 : f32 to vector<8x128xf32>
    %426 = arith.addf %424, %425 : vector<8x128xf32>
    %cst_161 = arith.constant 5.000000e-01 : f32
    %427 = vector.broadcast %cst_161 : f32 to vector<8x128xf32>
    %428 = arith.mulf %427, %426 : vector<8x128xf32>
    %429 = vector.extract_strided_slice %420 {offsets = [0, 128], sizes = [8, 128], strides = [1, 1]} : vector<8x512xf32> to vector<8x128xf32>
    %cst_162 = arith.constant 5.000000e-01 : f32
    %430 = vector.broadcast %cst_162 : f32 to vector<8x128xf32>
    %431 = arith.mulf %430, %429 : vector<8x128xf32>
    %432 = math.tanh %431 : vector<8x128xf32>
    %cst_163 = arith.constant 1.000000e+00 : f32
    %433 = vector.broadcast %cst_163 : f32 to vector<8x128xf32>
    %434 = arith.addf %432, %433 : vector<8x128xf32>
    %cst_164 = arith.constant 5.000000e-01 : f32
    %435 = vector.broadcast %cst_164 : f32 to vector<8x128xf32>
    %436 = arith.mulf %435, %434 : vector<8x128xf32>
    %437 = vector.extract_strided_slice %420 {offsets = [0, 256], sizes = [8, 128], strides = [1, 1]} : vector<8x512xf32> to vector<8x128xf32>
    %438 = math.tanh %437 : vector<8x128xf32>
    %439 = vector.extract_strided_slice %420 {offsets = [0, 384], sizes = [8, 128], strides = [1, 1]} : vector<8x512xf32> to vector<8x128xf32>
    %cst_165 = arith.constant 5.000000e-01 : f32
    %440 = vector.broadcast %cst_165 : f32 to vector<8x128xf32>
    %441 = arith.mulf %440, %439 : vector<8x128xf32>
    %442 = math.tanh %441 : vector<8x128xf32>
    %cst_166 = arith.constant 1.000000e+00 : f32
    %443 = vector.broadcast %cst_166 : f32 to vector<8x128xf32>
    %444 = arith.addf %442, %443 : vector<8x128xf32>
    %cst_167 = arith.constant 5.000000e-01 : f32
    %445 = vector.broadcast %cst_167 : f32 to vector<8x128xf32>
    %446 = arith.mulf %445, %444 : vector<8x128xf32>
    %447 = arith.mulf %436, %361 : vector<8x128xf32>
    %448 = arith.mulf %428, %438 : vector<8x128xf32>
    %449 = arith.addf %447, %448 : vector<8x128xf32>
    %450 = math.tanh %449 : vector<8x128xf32>
    %451 = arith.mulf %446, %450 : vector<8x128xf32>
    %452 = arith.addi %32, %362 : i32
    %453 = vector.broadcast %452 : i32 to vector<8x1xi32>
    %454 = arith.cmpi sgt, %29, %453 : vector<8x1xi32>
    %cst_168 = arith.constant 0.000000e+00 : f32
    %455 = vector.shape_cast %454 : vector<8x1xi1> to vector<8x1xi1>
    %456 = vector.broadcast %455 : vector<8x1xi1> to vector<8x128xi1>
    %457 = vector.broadcast %cst_168 : f32 to vector<8x128xf32>
    %458 = arith.select %456, %451, %457 : vector<8x128xi1>, vector<8x128xf32>
    %459 = arith.index_cast %362 : i32 to index
    %c0_169 = arith.constant 0 : index
    %c0_170 = arith.constant 0 : index
    %460 = vector.load %arg8[%459, %c0_169, %c0_170] : memref<4x8x128xf32, #tpu.memory_space<vmem>>, vector<1x8x128xf32>
    %461 = vector.shape_cast %460 : vector<1x8x128xf32> to vector<8x128xf32>
    %462 = vector.shape_cast %458 : vector<8x128xf32> to vector<1x8x128xf32>
    tpu.vector_store %arg8[%459, %c0_169, %c0_170], %462 {strides = array<i32>} : memref<4x8x128xf32, #tpu.memory_space<vmem>>, vector<1x8x128xf32>,
    %463 = vector.shape_cast %454 : vector<8x1xi1> to vector<8x1xi1>
    %464 = vector.broadcast %463 : vector<8x1xi1> to vector<8x128xi1>
    %465 = arith.select %464, %451, %358 : vector<8x128xi1>, vector<8x128xf32>
    %466 = vector.shape_cast %454 : vector<8x1xi1> to vector<8x1xi1>
    %467 = vector.broadcast %466 : vector<8x1xi1> to vector<8x128xi1>
    %468 = arith.select %467, %449, %361 : vector<8x128xi1>, vector<8x128xf32>
    %c4_i32_171 = arith.constant 4 : i32
    %c0_172 = arith.constant 0 : index
    %c0_173 = arith.constant 0 : index
    %c0_174 = arith.constant 0 : index
    %469 = vector.load %arg13[%c0_172, %c0_173, %c0_174] : memref<2x8x128xf32, #tpu.memory_space<vmem>>, vector<1x8x128xf32>
    %470 = vector.shape_cast %469 : vector<1x8x128xf32> to vector<8x128xf32>
    %471 = vector.shape_cast %412 : vector<8x128xf32> to vector<1x8x128xf32>
    tpu.vector_store %arg13[%c0_172, %c0_173, %c0_174], %471 {strides = array<i32>} : memref<2x8x128xf32, #tpu.memory_space<vmem>>, vector<1x8x128xf32>,
    %c0_175 = arith.constant 0 : index
    %c0_176 = arith.constant 0 : index
    %c0_177 = arith.constant 0 : index
    %472 = vector.load %arg14[%c0_175, %c0_176, %c0_177] : memref<2x8x128xf32, #tpu.memory_space<vmem>>, vector<1x8x128xf32>
    %473 = vector.shape_cast %472 : vector<1x8x128xf32> to vector<8x128xf32>
    %474 = vector.shape_cast %415 : vector<8x128xf32> to vector<1x8x128xf32>
    tpu.vector_store %arg14[%c0_175, %c0_176, %c0_177], %474 {strides = array<i32>} : memref<2x8x128xf32, #tpu.memory_space<vmem>>, vector<1x8x128xf32>,
    %c1_178 = arith.constant 1 : index
    %c0_179 = arith.constant 0 : index
    %c0_180 = arith.constant 0 : index
    %475 = vector.load %arg13[%c1_178, %c0_179, %c0_180] : memref<2x8x128xf32, #tpu.memory_space<vmem>>, vector<1x8x128xf32>
    %476 = vector.shape_cast %475 : vector<1x8x128xf32> to vector<8x128xf32>
    %477 = vector.shape_cast %465 : vector<8x128xf32> to vector<1x8x128xf32>
    tpu.vector_store %arg13[%c1_178, %c0_179, %c0_180], %477 {strides = array<i32>} : memref<2x8x128xf32, #tpu.memory_space<vmem>>, vector<1x8x128xf32>,
    %c1_181 = arith.constant 1 : index
    %c0_182 = arith.constant 0 : index
    %c0_183 = arith.constant 0 : index
    %478 = vector.load %arg14[%c1_181, %c0_182, %c0_183] : memref<2x8x128xf32, #tpu.memory_space<vmem>>, vector<1x8x128xf32>
    %479 = vector.shape_cast %478 : vector<1x8x128xf32> to vector<8x128xf32>
    %480 = vector.shape_cast %468 : vector<8x128xf32> to vector<1x8x128xf32>
    tpu.vector_store %arg14[%c1_181, %c0_182, %c0_183], %480 {strides = array<i32>} : memref<2x8x128xf32, #tpu.memory_space<vmem>>, vector<1x8x128xf32>,
    %c1_i32_184 = arith.constant 1 : i32
    %481 = arith.cmpi eq, %arg0, %c1_i32_184 : i32
    %482 = arith.extui %481 : i1 to i32
    %c0_i32_185 = arith.constant 0 : i32
    %483 = arith.cmpi ne, %482, %c0_i32_185 : i32
    scf.if %483 {
      %c0_186 = arith.constant 0 : index
      %c0_187 = arith.constant 0 : index
      %c0_188 = arith.constant 0 : index
      %484 = vector.load %arg9[%c0_186, %c0_187, %c0_188] : memref<2x8x128xf32, #tpu.memory_space<vmem>>, vector<1x8x128xf32>
      %485 = vector.shape_cast %484 : vector<1x8x128xf32> to vector<8x128xf32>
      %486 = vector.shape_cast %412 : vector<8x128xf32> to vector<1x8x128xf32>
      tpu.vector_store %arg9[%c0_186, %c0_187, %c0_188], %486 {strides = array<i32>} : memref<2x8x128xf32, #tpu.memory_space<vmem>>, vector<1x8x128xf32>,
      %c1_189 = arith.constant 1 : index
      %c0_190 = arith.constant 0 : index
      %c0_191 = arith.constant 0 : index
      %487 = vector.load %arg9[%c1_189, %c0_190, %c0_191] : memref<2x8x128xf32, #tpu.memory_space<vmem>>, vector<1x8x128xf32>
      %488 = vector.shape_cast %487 : vector<1x8x128xf32> to vector<8x128xf32>
      %489 = vector.shape_cast %465 : vector<8x128xf32> to vector<1x8x128xf32>
      tpu.vector_store %arg9[%c1_189, %c0_190, %c0_191], %489 {strides = array<i32>} : memref<2x8x128xf32, #tpu.memory_space<vmem>>, vector<1x8x128xf32>,
      %c0_192 = arith.constant 0 : index
      %c0_193 = arith.constant 0 : index
      %c0_194 = arith.constant 0 : index
      %490 = vector.load %arg10[%c0_192, %c0_193, %c0_194] : memref<2x8x128xf32, #tpu.memory_space<vmem>>, vector<1x8x128xf32>
      %491 = vector.shape_cast %490 : vector<1x8x128xf32> to vector<8x128xf32>
      %492 = vector.shape_cast %415 : vector<8x128xf32> to vector<1x8x128xf32>
      tpu.vector_store %arg10[%c0_192, %c0_193, %c0_194], %492 {strides = array<i32>} : memref<2x8x128xf32, #tpu.memory_space<vmem>>, vector<1x8x128xf32>,
      %c1_195 = arith.constant 1 : index
      %c0_196 = arith.constant 0 : index
      %c0_197 = arith.constant 0 : index
      %493 = vector.load %arg10[%c1_195, %c0_196, %c0_197] : memref<2x8x128xf32, #tpu.memory_space<vmem>>, vector<1x8x128xf32>
      %494 = vector.shape_cast %493 : vector<1x8x128xf32> to vector<8x128xf32>
      %495 = vector.shape_cast %468 : vector<8x128xf32> to vector<1x8x128xf32>
      tpu.vector_store %arg10[%c1_195, %c0_196, %c0_197], %495 {strides = array<i32>} : memref<2x8x128xf32, #tpu.memory_space<vmem>>, vector<1x8x128xf32>,
    } else {
    }
    return
  }
  func.func @transform_0(%arg0: i32) -> (i32, i32) {
    %c0_i32 = arith.constant 0 : i32
    %c0_i32_0 = arith.constant 0 : i32
    %c0_i32_1 = arith.constant 0 : i32
    return %c0_i32, %c0_i32_0 : i32, i32
  }
  func.func @transform_1(%arg0: i32) -> (i32, i32, i32) {
    %c0_i32 = arith.constant 0 : i32
    %c0_i32_0 = arith.constant 0 : i32
    %c0_i32_1 = arith.constant 0 : i32
    return %arg0, %c0_i32, %c0_i32_0 : i32, i32, i32
  }
  func.func @transform_2(%arg0: i32) -> (i32, i32, i32) {
    %c1_i32 = arith.constant 1 : i32
    %0 = arith.subi %c1_i32, %arg0 : i32
    %c0_i32 = arith.constant 0 : i32
    %c0_i32_0 = arith.constant 0 : i32
    %c0_i32_1 = arith.constant 0 : i32
    return %0, %c0_i32, %c0_i32_0 : i32, i32, i32
  }
  func.func @transform_3(%arg0: i32) -> (i32, i32, i32) {
    %c0_i32 = arith.constant 0 : i32
    %c0_i32_0 = arith.constant 0 : i32
    %c0_i32_1 = arith.constant 0 : i32
    %c0_i32_2 = arith.constant 0 : i32
    return %c0_i32, %c0_i32_0, %c0_i32_1 : i32, i32, i32
  }
  func.func @transform_4(%arg0: i32) -> (i32, i32, i32) {
    %c0_i32 = arith.constant 0 : i32
    %c0_i32_0 = arith.constant 0 : i32
    %c0_i32_1 = arith.constant 0 : i32
    %c0_i32_2 = arith.constant 0 : i32
    return %c0_i32, %c0_i32_0, %c0_i32_1 : i32, i32, i32
  }
  func.func @transform_5(%arg0: i32) -> (i32, i32, i32) {
    %c0_i32 = arith.constant 0 : i32
    %c0_i32_0 = arith.constant 0 : i32
    %c0_i32_1 = arith.constant 0 : i32
    %c0_i32_2 = arith.constant 0 : i32
    return %c0_i32, %c0_i32_0, %c0_i32_1 : i32, i32, i32
  }
  func.func @transform_6(%arg0: i32) -> (i32, i32, i32) {
    %c0_i32 = arith.constant 0 : i32
    %c0_i32_0 = arith.constant 0 : i32
    %c0_i32_1 = arith.constant 0 : i32
    return %arg0, %c0_i32, %c0_i32_0 : i32, i32, i32
  }
  func.func @transform_7(%arg0: i32) -> (i32, i32, i32) {
    %c1_i32 = arith.constant 1 : i32
    %0 = arith.subi %c1_i32, %arg0 : i32
    %c0_i32 = arith.constant 0 : i32
    %c0_i32_0 = arith.constant 0 : i32
    %c0_i32_1 = arith.constant 0 : i32
    return %0, %c0_i32, %c0_i32_0 : i32, i32, i32
  }
  func.func @transform_8(%arg0: i32) -> (i32, i32, i32) {
    %c0_i32 = arith.constant 0 : i32
    %c0_i32_0 = arith.constant 0 : i32
    %c0_i32_1 = arith.constant 0 : i32
    %c0_i32_2 = arith.constant 0 : i32
    return %c0_i32, %c0_i32_0, %c0_i32_1 : i32, i32, i32
  }
  func.func @transform_9(%arg0: i32) -> (i32, i32, i32) {
    %c0_i32 = arith.constant 0 : i32
    %c0_i32_0 = arith.constant 0 : i32
    %c0_i32_1 = arith.constant 0 : i32
    %c0_i32_2 = arith.constant 0 : i32
    return %c0_i32, %c0_i32_0, %c0_i32_1 : i32, i32, i32
  }
}

</mosaic_0001>

<llo_original>
// kernel: tpu_custom_call.1
$region0: #{tpu_custom_call.1}
  #allocation0 [shape = 'u32[]', space=smem, size = 0x4, offset = 0x4, fixed_abs, tag = 'smem constant byte address 0x4 - core index']
  #allocation1 [shape = 'u32[144,128]{1,0:T(1,128)}', space=vmem, size = 0x12000, scoped, tag = 'internal scratch']
  #allocation2 [shape = 'f32[4,8,512]{2,1,0:T(8,128)}', space=vmem, size = 0x10000, scoped, tag = 'scratch operand']
  #allocation3 [shape = 'f32[4,8,512]{2,1,0:T(8,128)}', space=vmem, size = 0x10000, scoped, tag = 'scratch operand']
  #allocation4 [shape = 'f32[2,8,128]{2,1,0:T(8,128)}', space=vmem, size = 0x2000, scoped, tag = 'scratch operand']
  #allocation5 [shape = 'f32[2,8,128]{2,1,0:T(8,128)}', space=vmem, size = 0x2000, scoped, tag = 'scratch operand']
  %s0 = inlined_call_operand.vmem [shape: s32[8,1], index: 0, kind: input, shape index: {}]
  %s1 = inlined_call_operand.hbm [shape: f32[8,8,128], index: 1, kind: input, shape index: {}]
  %s2 = inlined_call_operand.hbm [shape: f32[8,8,128], index: 2, kind: input, shape index: {}]
  %s3 = inlined_call_operand.hbm [shape: f32[2,128,512], index: 3, kind: input, shape index: {}]
  %s4 = inlined_call_operand.hbm [shape: f32[2,128,512], index: 4, kind: input, shape index: {}]
  %s5 = inlined_call_operand.vmem [shape: f32[2,1,512], index: 5, kind: input, shape index: {}]
  %s6 = inlined_call_operand.hbm [shape: f32[8,8,128], index: 6, kind: output, shape index: {0}]
  %s7 = inlined_call_operand.hbm [shape: f32[8,8,128], index: 7, kind: output, shape index: {1}]
  %s8 = inlined_call_operand.hbm [shape: f32[2,8,128], index: 8, kind: output, shape index: {2}]
  %s9 = inlined_call_operand.hbm [shape: f32[2,8,128], index: 9, kind: output, shape index: {3}]
  %10 = xla_tuple %s6, %s7, %s8, %s9
  %s11 = sld [smem:[#allocation0]]
  $region105: #{tpu_custom_call.1} parent=0
    _
  %s13 = ssub.s32 1, %s11
  %s14 = scalar_select 0, %s13, %s11
  $region1: #{tpu_custom_call.1} parent=0
    #allocation6 [shape = 'u8[32768]{0}', space=vmem, size = 0x8000, scoped, tag = 'input window, operand 1']
    #allocation7 [shape = 's32[2]{0}', space=sflag, size = 0x8, scoped, tag = 'scoped memory for tpu_custom_call.1']
    #allocation8 [shape = 's32[2]{0}', space=sflag, size = 0x8, scoped, tag = 'scoped memory for tpu_custom_call.1']
    #allocation9 [shape = 'u8[32768]{0}', space=vmem, size = 0x8000, scoped, tag = 'input window, operand 2']
    #allocation10 [shape = 's32[2]{0}', space=sflag, size = 0x8, scoped, tag = 'scoped memory for tpu_custom_call.1']
    #allocation11 [shape = 'u8[524288]{0}', space=vmem, size = 0x80000, scoped, tag = 'input window, operand 3, single buffered']
    #allocation12 [shape = 'u8[524288]{0}', space=vmem, size = 0x80000, scoped, tag = 'input window, operand 4, single buffered']
    #allocation13 [shape = 's32[1]{0}', space=sflag, size = 0x4, scoped, tag = 'scoped memory for tpu_custom_call.1']
    #allocation14 [shape = 'u8[32768]{0}', space=vmem, size = 0x8000, scoped, tag = 'output window, operand 0']
    #allocation15 [shape = 'u8[32768]{0}', space=vmem, size = 0x8000, scoped, tag = 'output window, operand 1']
    #allocation16 [shape = 's32[2]{0}', space=sflag, size = 0x8, scoped, tag = 'scoped memory for tpu_custom_call.1']
    #allocation17 [shape = 'u8[8192]{0}', space=vmem, size = 0x2000, scoped, tag = 'output window, operand 2, single buffered']
    #allocation18 [shape = 'u8[8192]{0}', space=vmem, size = 0x2000, scoped, tag = 'output window, operand 3, single buffered']
    #allocation19 [shape = 's32[1]{0}', space=sflag, size = 0x4, scoped, tag = 'scoped memory for tpu_custom_call.1']
    %15 = vsyncpa [#allocation7], 0
    %s16 = scalar_lea.sflag [#allocation7], 1
    %17 = vsyncpa %s16, 0
    %18 = vsyncpa [#allocation10], 0
    %s19 = scalar_lea.sflag [#allocation10], 1
    %20 = vsyncpa %s19, 0
    %21 = vsyncpa [#allocation13], 0
    %22 = vsyncpa [#allocation8], 0
    %s23 = scalar_lea.sflag [#allocation8], 1
    %24 = vsyncpa %s23, 0
    %25 = vsyncpa [#allocation16], 0
    %s26 = scalar_lea.sflag [#allocation16], 1
    %27 = vsyncpa %s26, 0
    %28 = vsyncpa [#allocation19], 0
    loop: start=0, step=1, limit=4
    $region2: #{tpu_custom_call.1} parent=1 // loop_pre_header
      _
    $region3: #{tpu_custom_call.1} parent=1 // loop_header
      %s30 = sphi 0, %s34
      %p31 = scmp.ge.s32.totalorder %s30, 4
      %s38 = sphi 0, %s38
      %s40 = sphi 0, %s38
      %s41 = sphi 0, %s40
      %s55 = sphi 0, %s41
      %s61 = sphi 0, %s63
      %s64 = sphi 0, %s61
      %s65 = sphi 0, %s64
      %s81 = sphi 0, %s65
      %s89 = sphi 0, %s91
      %s92 = sphi 0, %s89
      %s93 = sphi 0, %s92
      %s109 = sphi 0, %s93
      %s113 = sphi 0, %s113
      %s115 = sphi 0, %s113
      %s116 = sphi 0, %s115
      %s130 = sphi 0, %s116
      %s134 = sphi 0, %s134
      %s136 = sphi 0, %s134
      %s137 = sphi 0, %s136
      %s151 = sphi 0, %s137
      %s155 = sphi 0, %s155
      %s157 = sphi 0, %s155
      %s158 = sphi 0, %s157
      %s172 = sphi 0, %s158
      %s178 = sphi 0, %s180
      %s181 = sphi 0, %s178
      %s182 = sphi 0, %s181
      %s198 = sphi 0, %s182
      %s206 = sphi 0, %s208
      %s209 = sphi 0, %s206
      %s210 = sphi 0, %s209
      %s226 = sphi 0, %s210
      %s230 = sphi 0, %s230
      %s232 = sphi 0, %s230
      %s233 = sphi 0, %s232
      %s247 = sphi 0, %s233
      %s251 = sphi 0, %s251
      %s253 = sphi 0, %s251
      %s254 = sphi 0, %s253
      %s268 = sphi 0, %s254
    $region4: #{tpu_custom_call.1} parent=1 // loop_header_branch
      %33 = sbr.rel (%p31) target = $region8
    $region5: #{tpu_custom_call.1} parent=1 // loop_body
      %s35 = ssub.s32 %s30, 1
      %s36 = ssub.s32 %s30, 2
      %s37 = sadd.s32 %s30, 1
      %s39 = sadd.s32 %s38, 1
      %p42 = scmp.eq.s32.totalorder %s30, 1
      %p43 = scmp.ne.s32.totalorder %s38, %s40
      %p44 = scmp.eq.s32.totalorder %s30, 0
      %p45 = por %p43, %p44
      %p46 = scmp.ne.s32.totalorder %s38, %s40
      %p47 = scmp.eq.s32.totalorder %s35, 1
      %p48 = por %p46, %p47
      %p49 = scmp.ne.s32.totalorder %s40, %s41
      %p50 = scmp.eq.s32.totalorder %s35, 0
      %p51 = por %p49, %p50
      %p52 = scmp.ne.s32.totalorder %s40, %s41
      %p53 = scmp.eq.s32.totalorder %s36, 1
      %p54 = por %p52, %p53
      %p56 = scmp.ne.s32.totalorder %s41, %s55
      %p57 = scmp.eq.s32.totalorder %s36, 0
      %p58 = por %p56, %p57
      %s59 = ssub.s32 %s30, %s37
      %p60 = scmp.eq.s32.totalorder %s59, 0
      %s62 = sadd.s32 %s61, 1
      %s63 = scalar_select %p60, %s61, %s62
      %p66 = pneg %p60
      %p67 = scmp.eq.s32.totalorder %s30, 1
      %p68 = por %p66, %p67
      %p69 = scmp.ne.s32.totalorder %s61, %s64
      %p70 = scmp.eq.s32.totalorder %s30, 0
      %p71 = por %p69, %p70
      %p72 = scmp.ne.s32.totalorder %s61, %s64
      %p73 = scmp.eq.s32.totalorder %s35, 1
      %p74 = por %p72, %p73
      %p75 = scmp.ne.s32.totalorder %s64, %s65
      %p76 = scmp.eq.s32.totalorder %s35, 0
      %p77 = por %p75, %p76
      %p78 = scmp.ne.s32.totalorder %s64, %s65
      %p79 = scmp.eq.s32.totalorder %s36, 1
      %p80 = por %p78, %p79
      %p82 = scmp.ne.s32.totalorder %s65, %s81
      %p83 = scmp.eq.s32.totalorder %s36, 0
      %p84 = por %p82, %p83
      %s85 = ssub.s32 1, %s30
      %s86 = ssub.s32 1, %s37
      %s87 = ssub.s32 %s85, %s86
      %p88 = scmp.eq.s32.totalorder %s87, 0
      %s90 = sadd.s32 %s89, 1
      %s91 = scalar_select %p88, %s89, %s90
      %p94 = pneg %p88
      %p95 = scmp.eq.s32.totalorder %s30, 1
      %p96 = por %p94, %p95
      %p97 = scmp.ne.s32.totalorder %s89, %s92
      %p98 = scmp.eq.s32.totalorder %s30, 0
      %p99 = por %p97, %p98
      %p100 = scmp.ne.s32.totalorder %s89, %s92
      %p101 = scmp.eq.s32.totalorder %s35, 1
      %p102 = por %p100, %p101
      %p103 = scmp.ne.s32.totalorder %s92, %s93
      %p104 = scmp.eq.s32.totalorder %s35, 0
      %p105 = por %p103, %p104
      %p106 = scmp.ne.s32.totalorder %s92, %s93
      %p107 = scmp.eq.s32.totalorder %s36, 1
      %p108 = por %p106, %p107
      %p110 = scmp.ne.s32.totalorder %s93, %s109
      %p111 = scmp.eq.s32.totalorder %s36, 0
      %p112 = por %p110, %p111
      %s114 = sadd.s32 %s113, 1
      %p117 = scmp.eq.s32.totalorder %s30, 1
      %p118 = scmp.ne.s32.totalorder %s113, %s115
      %p119 = scmp.eq.s32.totalorder %s30, 0
      %p120 = por %p118, %p119
      %p121 = scmp.ne.s32.totalorder %s113, %s115
      %p122 = scmp.eq.s32.totalorder %s35, 1
      %p123 = por %p121, %p122
      %p124 = scmp.ne.s32.totalorder %s115, %s116
      %p125 = scmp.eq.s32.totalorder %s35, 0
      %p126 = por %p124, %p125
      %p127 = scmp.ne.s32.totalorder %s115, %s116
      %p128 = scmp.eq.s32.totalorder %s36, 1
      %p129 = por %p127, %p128
      %p131 = scmp.ne.s32.totalorder %s116, %s130
      %p132 = scmp.eq.s32.totalorder %s36, 0
      %p133 = por %p131, %p132
      %s135 = sadd.s32 %s134, 1
      %p138 = scmp.eq.s32.totalorder %s30, 1
      %p139 = scmp.ne.s32.totalorder %s134, %s136
      %p140 = scmp.eq.s32.totalorder %s30, 0
      %p141 = por %p139, %p140
      %p142 = scmp.ne.s32.totalorder %s134, %s136
      %p143 = scmp.eq.s32.totalorder %s35, 1
      %p144 = por %p142, %p143
      %p145 = scmp.ne.s32.totalorder %s136, %s137
      %p146 = scmp.eq.s32.totalorder %s35, 0
      %p147 = por %p145, %p146
      %p148 = scmp.ne.s32.totalorder %s136, %s137
      %p149 = scmp.eq.s32.totalorder %s36, 1
      %p150 = por %p148, %p149
      %p152 = scmp.ne.s32.totalorder %s137, %s151
      %p153 = scmp.eq.s32.totalorder %s36, 0
      %p154 = por %p152, %p153
      %s156 = sadd.s32 %s155, 1
      %p159 = scmp.eq.s32.totalorder %s30, 1
      %p160 = scmp.ne.s32.totalorder %s155, %s157
      %p161 = scmp.eq.s32.totalorder %s30, 0
      %p162 = por %p160, %p161
      %p163 = scmp.ne.s32.totalorder %s155, %s157
      %p164 = scmp.eq.s32.totalorder %s35, 1
      %p165 = por %p163, %p164
      %p166 = scmp.ne.s32.totalorder %s157, %s158
      %p167 = scmp.eq.s32.totalorder %s35, 0
      %p168 = por %p166, %p167
      %p169 = scmp.ne.s32.totalorder %s157, %s158
      %p170 = scmp.eq.s32.totalorder %s36, 1
      %p171 = por %p169, %p170
      %p173 = scmp.ne.s32.totalorder %s158, %s172
      %p174 = scmp.eq.s32.totalorder %s36, 0
      %p175 = por %p173, %p174
      %s176 = ssub.s32 %s30, %s37
      %p177 = scmp.eq.s32.totalorder %s176, 0
      %s179 = sadd.s32 %s178, 1
      %s180 = scalar_select %p177, %s178, %s179
      %p183 = pneg %p177
      %p184 = scmp.eq.s32.totalorder %s30, 1
      %p185 = por %p183, %p184
      %p186 = scmp.ne.s32.totalorder %s178, %s181
      %p187 = scmp.eq.s32.totalorder %s30, 0
      %p188 = por %p186, %p187
      %p189 = scmp.ne.s32.totalorder %s178, %s181
      %p190 = scmp.eq.s32.totalorder %s35, 1
      %p191 = por %p189, %p190
      %p192 = scmp.ne.s32.totalorder %s181, %s182
      %p193 = scmp.eq.s32.totalorder %s35, 0
      %p194 = por %p192, %p193
      %p195 = scmp.ne.s32.totalorder %s181, %s182
      %p196 = scmp.eq.s32.totalorder %s36, 1
      %p197 = por %p195, %p196
      %p199 = scmp.ne.s32.totalorder %s182, %s198
      %p200 = scmp.eq.s32.totalorder %s36, 0
      %p201 = por %p199, %p200
      %s202 = ssub.s32 1, %s30
      %s203 = ssub.s32 1, %s37
      %s204 = ssub.s32 %s202, %s203
      %p205 = scmp.eq.s32.totalorder %s204, 0
      %s207 = sadd.s32 %s206, 1
      %s208 = scalar_select %p205, %s206, %s207
      %p211 = pneg %p205
      %p212 = scmp.eq.s32.totalorder %s30, 1
      %p213 = por %p211, %p212
      %p214 = scmp.ne.s32.totalorder %s206, %s209
      %p215 = scmp.eq.s32.totalorder %s30, 0
      %p216 = por %p214, %p215
      %p217 = scmp.ne.s32.totalorder %s206, %s209
      %p218 = scmp.eq.s32.totalorder %s35, 1
      %p219 = por %p217, %p218
      %p220 = scmp.ne.s32.totalorder %s209, %s210
      %p221 = scmp.eq.s32.totalorder %s35, 0
      %p222 = por %p220, %p221
      %p223 = scmp.ne.s32.totalorder %s209, %s210
      %p224 = scmp.eq.s32.totalorder %s36, 1
      %p225 = por %p223, %p224
      %p227 = scmp.ne.s32.totalorder %s210, %s226
      %p228 = scmp.eq.s32.totalorder %s36, 0
      %p229 = por %p227, %p228
      %s231 = sadd.s32 %s230, 1
      %p234 = scmp.eq.s32.totalorder %s30, 1
      %p235 = scmp.ne.s32.totalorder %s230, %s232
      %p236 = scmp.eq.s32.totalorder %s30, 0
      %p237 = por %p235, %p236
      %p238 = scmp.ne.s32.totalorder %s230, %s232
      %p239 = scmp.eq.s32.totalorder %s35, 1
      %p240 = por %p238, %p239
      %p241 = scmp.ne.s32.totalorder %s232, %s233
      %p242 = scmp.eq.s32.totalorder %s35, 0
      %p243 = por %p241, %p242
      %p244 = scmp.ne.s32.totalorder %s232, %s233
      %p245 = scmp.eq.s32.totalorder %s36, 1
      %p246 = por %p244, %p245
      %p248 = scmp.ne.s32.totalorder %s233, %s247
      %p249 = scmp.eq.s32.totalorder %s36, 0
      %p250 = por %p248, %p249
      %s252 = sadd.s32 %s251, 1
      %p255 = scmp.eq.s32.totalorder %s30, 1
      %p256 = scmp.ne.s32.totalorder %s251, %s253
      %p257 = scmp.eq.s32.totalorder %s30, 0
      %p258 = por %p256, %p257
      %p259 = scmp.ne.s32.totalorder %s251, %s253
      %p260 = scmp.eq.s32.totalorder %s35, 1
      %p261 = por %p259, %p260
      %p262 = scmp.ne.s32.totalorder %s253, %s254
      %p263 = scmp.eq.s32.totalorder %s35, 0
      %p264 = por %p262, %p263
      %p265 = scmp.ne.s32.totalorder %s253, %s254
      %p266 = scmp.eq.s32.totalorder %s36, 1
      %p267 = por %p265, %p266
      %p269 = scmp.ne.s32.totalorder %s254, %s268
      %p270 = scmp.eq.s32.totalorder %s36, 0
      %p271 = por %p269, %p270
      %p272 = scmp.le.s32.totalorder 1, %s30
      %p273 = scmp.lt.s32.totalorder %s30, 3
      %p274 = pnand %p272, %p273
      %p275 = pneg %p274
      // Predicated region
      $region9: #{tpu_custom_call.1} parent=5 // pred_check
        _
      $region10: #{tpu_custom_call.1} parent=5 // pred_check_branch
        %277 = sbr.rel (%p274) target = $region12
      $region11: #{tpu_custom_call.1} parent=5 // pred_region
        %s278 = ssub.s32 %s30, 1
        // Predicated region
        $region13: #{tpu_custom_call.1} parent=11 // pred_check
          %p279 = pneg %p51
        $region14: #{tpu_custom_call.1} parent=11 // pred_check_branch
          %281 = sbr.rel (%p279) target = $region16
        $region15: #{tpu_custom_call.1} parent=11 // pred_region
          _
        $region16: #{tpu_custom_call.1} parent=11 // pred_fallthru
          _
        // Predicated region
        $region17: #{tpu_custom_call.1} parent=11 // pred_check
          %p282 = pneg %p126
        $region18: #{tpu_custom_call.1} parent=11 // pred_check_branch
          %284 = sbr.rel (%p282) target = $region20
        $region19: #{tpu_custom_call.1} parent=11 // pred_region
          %s286 = ssub.s32 16384, 16384
          %287 = vsyncadd [#allocation10], %s286
          %s288 = sshll.u32 [#allocation11], 4
          %s289 = int_to_ptr.vmem [resolvable:$true] %s288
          %294 = dma.hbm_to_vmem [thread:$0]  %s3, 16384, %s289, [#allocation10], 512, 512, 32
        $region20: #{tpu_custom_call.1} parent=11 // pred_fallthru
          _
        // Predicated region
        $region21: #{tpu_custom_call.1} parent=11 // pred_check
          %p295 = pneg %p147
        $region22: #{tpu_custom_call.1} parent=11 // pred_check_branch
          %297 = sbr.rel (%p295) target = $region24
        $region23: #{tpu_custom_call.1} parent=11 // pred_region
          %s299 = ssub.s32 16384, 16384
          %300 = vsyncadd [#allocation13], %s299
          %s301 = sshll.u32 [#allocation12], 4
          %s302 = int_to_ptr.vmem [resolvable:$true] %s301
          %307 = dma.hbm_to_vmem [thread:$0]  %s4, 16384, %s302, [#allocation13], 512, 512, 32
        $region24: #{tpu_custom_call.1} parent=11 // pred_fallthru
          _
        // Predicated region
        $region25: #{tpu_custom_call.1} parent=11 // pred_check
          %p308 = pneg %p168
        $region26: #{tpu_custom_call.1} parent=11 // pred_check_branch
          %310 = sbr.rel (%p308) target = $region28
        $region27: #{tpu_custom_call.1} parent=11 // pred_region
          _
        $region28: #{tpu_custom_call.1} parent=11 // pred_fallthru
          _
      $region12: #{tpu_custom_call.1} parent=5 // pred_fallthru
        _
      %p311 = scmp.lt.s32.totalorder %s30, 2
      // Predicated region
      $region29: #{tpu_custom_call.1} parent=5 // pred_check
        %p312 = pneg %p311
      $region30: #{tpu_custom_call.1} parent=5 // pred_check_branch
        %314 = sbr.rel (%p312) target = $region32
      $region31: #{tpu_custom_call.1} parent=5 // pred_region
        // Predicated region
        $region33: #{tpu_custom_call.1} parent=31 // pred_check
          %p315 = pneg %p71
        $region34: #{tpu_custom_call.1} parent=31 // pred_check_branch
          %317 = sbr.rel (%p315) target = $region36
        $region35: #{tpu_custom_call.1} parent=31 // pred_region
          %s318 = sand.u32 %s61, 1
          %s319 = scalar_lea.sflag [#allocation7], %s318
          %s320 = sand.u32 %s61, 1
          %s321 = smul.addr %s320, 32
          %s322 = scalar_lea.vmem [#allocation6], %s321
          %s323 = smul.u32 4, %s30
          %s325 = ssub.s32 512, 512
          %326 = vsyncadd %s319, %s325
          %s327 = smul.addr %s323, 128
          %s328 = scalar_lea.hbm %s1, %s327
          %s329 = sshll.u32 %s322, 4
          %s330 = int_to_ptr.vmem [resolvable:$true] %s329
          %335 = dma.hbm_to_vmem [thread:$0]  %s328, 512, %s330, %s319, 128, 128, 8
        $region36: #{tpu_custom_call.1} parent=31 // pred_fallthru
          _
        // Predicated region
        $region37: #{tpu_custom_call.1} parent=31 // pred_check
          %p336 = pneg %p99
        $region38: #{tpu_custom_call.1} parent=31 // pred_check_branch
          %338 = sbr.rel (%p336) target = $region40
        $region39: #{tpu_custom_call.1} parent=31 // pred_region
          %s339 = sand.u32 %s30, 1
          %s340 = scalar_lea.sflag [#allocation10], %s339
          %s341 = sand.u32 %s89, 1
          %s342 = smul.addr %s341, 32
          %s343 = scalar_lea.vmem [#allocation9], %s342
          %s344 = ssub.s32 1, %s30
          %s345 = smul.u32 4, %s344
          %s347 = ssub.s32 512, 512
          %348 = vsyncadd %s340, %s347
          %s349 = smul.addr %s345, 128
          %s350 = scalar_lea.hbm %s2, %s349
          %s351 = sshll.u32 %s343, 4
          %s352 = int_to_ptr.vmem [resolvable:$true] %s351
          %357 = dma.hbm_to_vmem [thread:$0]  %s350, 512, %s352, %s340, 128, 128, 8
        $region40: #{tpu_custom_call.1} parent=31 // pred_fallthru
          _
      $region32: #{tpu_custom_call.1} parent=5 // pred_fallthru
        _
      %p358 = scmp.le.s32.totalorder 1, %s30
      %p359 = scmp.lt.s32.totalorder %s30, 3
      %p360 = pnand %p358, %p359
      %p361 = pneg %p360
      // Predicated region
      $region41: #{tpu_custom_call.1} parent=5 // pred_check
        _
      $region42: #{tpu_custom_call.1} parent=5 // pred_check_branch
        %363 = sbr.rel (%p360) target = $region44
      $region43: #{tpu_custom_call.1} parent=5 // pred_region
        %s364 = ssub.s32 %s30, 1
        %s365 = sand.u32 %s64, 1
        %s366 = scalar_lea.sflag [#allocation7], %s365
        %s367 = sand.u32 %s64, 1
        %s368 = smul.addr %s367, 32
        %s369 = scalar_lea.vmem [#allocation6], %s368
        // Predicated region
        $region45: #{tpu_custom_call.1} parent=43 // pred_check
          %p370 = pneg %p77
        $region46: #{tpu_custom_call.1} parent=43 // pred_check_branch
          %372 = sbr.rel (%p370) target = $region48
        $region47: #{tpu_custom_call.1} parent=43 // pred_region
          %373 = dma.done %s366, 512
        $region48: #{tpu_custom_call.1} parent=43 // pred_fallthru
          _
        %s374 = sand.u32 %s35, 1
        %s375 = scalar_lea.sflag [#allocation10], %s374
        %s376 = sand.u32 %s92, 1
        %s377 = smul.addr %s376, 32
        %s378 = scalar_lea.vmem [#allocation9], %s377
        // Predicated region
        $region49: #{tpu_custom_call.1} parent=43 // pred_check
          %p379 = pneg %p105
        $region50: #{tpu_custom_call.1} parent=43 // pred_check_branch
          %381 = sbr.rel (%p379) target = $region52
        $region51: #{tpu_custom_call.1} parent=43 // pred_region
          %382 = dma.done %s375, 512
        $region52: #{tpu_custom_call.1} parent=43 // pred_fallthru
          _
        // Predicated region
        $region53: #{tpu_custom_call.1} parent=43 // pred_check
          %p383 = pneg %p126
        $region54: #{tpu_custom_call.1} parent=43 // pred_check_branch
          %385 = sbr.rel (%p383) target = $region56
        $region55: #{tpu_custom_call.1} parent=43 // pred_region
          %386 = dma.done [#allocation10], 16384
        $region56: #{tpu_custom_call.1} parent=43 // pred_fallthru
          _
        // Predicated region
        $region57: #{tpu_custom_call.1} parent=43 // pred_check
          %p387 = pneg %p147
        $region58: #{tpu_custom_call.1} parent=43 // pred_check_branch
          %389 = sbr.rel (%p387) target = $region60
        $region59: #{tpu_custom_call.1} parent=43 // pred_region
          %390 = dma.done [#allocation13], 16384
        $region60: #{tpu_custom_call.1} parent=43 // pred_fallthru
          _
        %p391 = pneg %p51
        %p392 = pneg %p48
        %s393 = sand.u32 %s64, 1
        %s394 = scalar_lea.sflag [#allocation7], %s393
        %s395 = sand.u32 %s64, 1
        %s396 = smul.addr %s395, 32
        %s397 = scalar_lea.vmem [#allocation6], %s396
        %p398 = pneg %p77
        %p399 = pneg %p74
        %s400 = sand.u32 %s35, 1
        %s401 = scalar_lea.sflag [#allocation10], %s400
        %s402 = sand.u32 %s92, 1
        %s403 = smul.addr %s402, 32
        %s404 = scalar_lea.vmem [#allocation9], %s403
        %p405 = pneg %p105
        %p406 = pneg %p102
        %p407 = pneg %p126
        %p408 = pneg %p123
        %p409 = pneg %p147
        %p410 = pneg %p144
        %p411 = pneg %p168
        %p412 = pneg %p165
        %p413 = pneg %p194
        %p414 = pneg %p191
        %s415 = sand.u32 %s181, 1
        %s416 = scalar_lea.sflag [#allocation8], %s415
        %s417 = sand.u32 %s181, 1
        %s418 = smul.addr %s417, 32
        %s419 = scalar_lea.vmem [#allocation14], %s418
        %p420 = pneg %p222
        %p421 = pneg %p219
        %s422 = sand.u32 %s35, 1
        %s423 = scalar_lea.sflag [#allocation16], %s422
        %s424 = sand.u32 %s209, 1
        %s425 = smul.addr %s424, 32
        %s426 = scalar_lea.vmem [#allocation15], %s425
        %p427 = pneg %p243
        %p428 = pneg %p240
        %p429 = pneg %p264
        %p430 = pneg %p261
        %s431 = smul.u32 4, %s35
        %s432 = ssub.s32 1, %s35
        %s433 = smul.u32 4, %s432
        %s434 = smul.u32 4, %s35
        %s435 = ssub.s32 1, %s35
        %s436 = smul.u32 4, %s435
        %p437 = scmp.eq.s32.totalorder %s35, 0
        // Predicated region
        $region61: #{tpu_custom_call.1} parent=43 // pred_check
          %p438 = pneg %p437
        $region62: #{tpu_custom_call.1} parent=43 // pred_check_branch
          %440 = sbr.rel (%p438) target = $region64
        $region63: #{tpu_custom_call.1} parent=43 // pred_region
          %441 = vst [vmem:[#allocation4] sm:$0xff] 0.0
          %442 = vst [vmem:[#allocation4 + $0x8] sm:$0xff] 0.0
          %443 = vst [vmem:[#allocation5] sm:$0xff] 0.0
          %444 = vst [vmem:[#allocation5 + $0x8] sm:$0xff] 0.0
        $region64: #{tpu_custom_call.1} parent=43 // pred_fallthru
          _
        %v445 = vld [vmem:[%s369] sm:$0xff]
        %v446 = vld [vmem:[%s369 + $0x8] sm:$0xff]
        %v447 = vld [vmem:[%s369 + $0x10] sm:$0xff]
        %v448 = vld [vmem:[%s369 + $0x18] sm:$0xff]
        %v449 = vld [vmem:[#allocation11] sm:$0xff]
        %v450 = vld [vmem:[#allocation11 + $0x8] sm:$0xff]
        %v451 = vld [vmem:[#allocation11 + $0x10] sm:$0xff]
        %v452 = vld [vmem:[#allocation11 + $0x18] sm:$0xff]
        %v453 = vld [vmem:[#allocation11 + $0x20] sm:$0xff]
        %v454 = vld [vmem:[#allocation11 + $0x28] sm:$0xff]
        %v455 = vld [vmem:[#allocation11 + $0x30] sm:$0xff]
        %v456 = vld [vmem:[#allocation11 + $0x38] sm:$0xff]
        %v457 = vld [vmem:[#allocation11 + $0x40] sm:$0xff]
        %v458 = vld [vmem:[#allocation11 + $0x48] sm:$0xff]
        %v459 = vld [vmem:[#allocation11 + $0x50] sm:$0xff]
        %v460 = vld [vmem:[#allocation11 + $0x58] sm:$0xff]
        %v461 = vld [vmem:[#allocation11 + $0x60] sm:$0xff]
        %v462 = vld [vmem:[#allocation11 + $0x68] sm:$0xff]
        %v463 = vld [vmem:[#allocation11 + $0x70] sm:$0xff]
        %v464 = vld [vmem:[#allocation11 + $0x78] sm:$0xff]
        %v465 = vld [vmem:[#allocation11 + $0x80] sm:$0xff]
        %v466 = vld [vmem:[#allocation11 + $0x88] sm:$0xff]
        %v467 = vld [vmem:[#allocation11 + $0x90] sm:$0xff]
        %v468 = vld [vmem:[#allocation11 + $0x98] sm:$0xff]
        %v469 = vld [vmem:[#allocation11 + $0xa0] sm:$0xff]
        %v470 = vld [vmem:[#allocation11 + $0xa8] sm:$0xff]
        %v471 = vld [vmem:[#allocation11 + $0xb0] sm:$0xff]
        %v472 = vld [vmem:[#allocation11 + $0xb8] sm:$0xff]
        %v473 = vld [vmem:[#allocation11 + $0xc0] sm:$0xff]
        %v474 = vld [vmem:[#allocation11 + $0xc8] sm:$0xff]
        %v475 = vld [vmem:[#allocation11 + $0xd0] sm:$0xff]
        %v476 = vld [vmem:[#allocation11 + $0xd8] sm:$0xff]
        %v477 = vld [vmem:[#allocation11 + $0xe0] sm:$0xff]
        %v478 = vld [vmem:[#allocation11 + $0xe8] sm:$0xff]
        %v479 = vld [vmem:[#allocation11 + $0xf0] sm:$0xff]
        %v480 = vld [vmem:[#allocation11 + $0xf8] sm:$0xff]
        %v481 = vld [vmem:[#allocation11 + $0x100] sm:$0xff]
        %v482 = vld [vmem:[#allocation11 + $0x108] sm:$0xff]
        %v483 = vld [vmem:[#allocation11 + $0x110] sm:$0xff]
        %v484 = vld [vmem:[#allocation11 + $0x118] sm:$0xff]
        %v485 = vld [vmem:[#allocation11 + $0x120] sm:$0xff]
        %v486 = vld [vmem:[#allocation11 + $0x128] sm:$0xff]
        %v487 = vld [vmem:[#allocation11 + $0x130] sm:$0xff]
        %v488 = vld [vmem:[#allocation11 + $0x138] sm:$0xff]
        %v489 = vld [vmem:[#allocation11 + $0x140] sm:$0xff]
        %v490 = vld [vmem:[#allocation11 + $0x148] sm:$0xff]
        %v491 = vld [vmem:[#allocation11 + $0x150] sm:$0xff]
        %v492 = vld [vmem:[#allocation11 + $0x158] sm:$0xff]
        %v493 = vld [vmem:[#allocation11 + $0x160] sm:$0xff]
        %v494 = vld [vmem:[#allocation11 + $0x168] sm:$0xff]
        %v495 = vld [vmem:[#allocation11 + $0x170] sm:$0xff]
        %v496 = vld [vmem:[#allocation11 + $0x178] sm:$0xff]
        %v497 = vld [vmem:[#allocation11 + $0x180] sm:$0xff]
        %v498 = vld [vmem:[#allocation11 + $0x188] sm:$0xff]
        %v499 = vld [vmem:[#allocation11 + $0x190] sm:$0xff]
        %v500 = vld [vmem:[#allocation11 + $0x198] sm:$0xff]
        %v501 = vld [vmem:[#allocation11 + $0x1a0] sm:$0xff]
        %v502 = vld [vmem:[#allocation11 + $0x1a8] sm:$0xff]
        %v503 = vld [vmem:[#allocation11 + $0x1b0] sm:$0xff]
        %v504 = vld [vmem:[#allocation11 + $0x1b8] sm:$0xff]
        %v505 = vld [vmem:[#allocation11 + $0x1c0] sm:$0xff]
        %v506 = vld [vmem:[#allocation11 + $0x1c8] sm:$0xff]
        %v507 = vld [vmem:[#allocation11 + $0x1d0] sm:$0xff]
        %v508 = vld [vmem:[#allocation11 + $0x1d8] sm:$0xff]
        %v509 = vld [vmem:[#allocation11 + $0x1e0] sm:$0xff]
        %v510 = vld [vmem:[#allocation11 + $0x1e8] sm:$0xff]
        %v511 = vld [vmem:[#allocation11 + $0x1f0] sm:$0xff]
        %v512 = vld [vmem:[#allocation11 + $0x1f8] sm:$0xff]
        %v513 = vld [vmem:[%s5] sm:$0xf]
        %v515 = vlaneseq
        %v516 = vshrl.u32 %v515, 7
        %v517 = vsub.s32 0, %v516
        %v518 = vrot.slane %v513, %v517
        %v519 = vlaneseq
        %v520 = vshrl.u32 %v519, 7
        %v521 = vsub.s32 1, %v520
        %v522 = vrot.slane %v513, %v521
        %v523 = vlaneseq
        %v524 = vshrl.u32 %v523, 7
        %v525 = vsub.s32 2, %v524
        %v526 = vrot.slane %v513, %v525
        %v527 = vlaneseq
        %v528 = vshrl.u32 %v527, 7
        %v529 = vsub.s32 3, %v528
        %v530 = vrot.slane %v513, %v529
        %535 = vmatprep.subr.mxu0 %v510
        %536 = vmatpush1.msra.mxu0 %v509
        %537 = vmatprep.subr.mxu0 %v506
        %538 = vmatpush1.msra.mxu0 %v505
        %539 = vmatprep.subr.mxu0 %v502
        %540 = vmatpush1.msra.mxu0 %v501
        %541 = vmatprep.subr.mxu0 %v498
        %542 = vmatpush1.msra.mxu0 %v497
        %543 = vmatprep.subr.mxu0 %v494
        %544 = vmatpush1.msra.mxu0 %v493
        %545 = vmatprep.subr.mxu0 %v490
        %546 = vmatpush1.msra.mxu0 %v489
        %547 = vmatprep.subr.mxu0 %v486
        %548 = vmatpush1.msra.mxu0 %v485
        %549 = vmatprep.subr.mxu0 %v482
        %550 = vmatpush1.msra.mxu0 %v481
        %551 = vmatprep.subr.mxu0 %v478
        %552 = vmatpush1.msra.mxu0 %v477
        %553 = vmatprep.subr.mxu0 %v474
        %554 = vmatpush1.msra.mxu0 %v473
        %555 = vmatprep.subr.mxu0 %v470
        %556 = vmatpush1.msra.mxu0 %v469
        %557 = vmatprep.subr.mxu0 %v466
        %558 = vmatpush1.msra.mxu0 %v465
        %559 = vmatprep.subr.mxu0 %v462
        %560 = vmatpush1.msra.mxu0 %v461
        %561 = vmatprep.subr.mxu0 %v458
        %562 = vmatpush1.msra.mxu0 %v457
        %563 = vmatprep.subr.mxu0 %v454
        %564 = vmatpush1.msra.mxu0 %v453
        %565 = vmatprep.subr.mxu0 %v450
        %566 = vmatpush1.msra.mxu0 %v449
        %567 = vmatprep.subr.mxu0 0.0
        %568 = vmatpush2.msra.mxu0 0.0
        %569 = vmatprep.subr.mxu0 0.0
        %570 = vmatpush2.msra.mxu0 0.0
        %571 = vmatprep.subr.mxu0 0.0
        %572 = vmatpush2.msra.mxu0 0.0
        %573 = vmatprep.subr.mxu0 0.0
        %574 = vmatpush2.msra.mxu0 0.0
        %575 = vmatprep.subr.mxu0 0.0
        %576 = vmatpush2.msra.mxu0 0.0
        %577 = vmatprep.subr.mxu0 0.0
        %578 = vmatpush2.msra.mxu0 0.0
        %579 = vmatprep.subr.mxu0 0.0
        %580 = vmatpush2.msra.mxu0 0.0
        %581 = vmatprep.subr.mxu0 0.0
        %582 = vmatpush2.msra.mxu0 0.0
        %583 = vmatprep.subr.mxu0 0.0
        %584 = vmatpush2.msra.mxu0 0.0
        %585 = vmatprep.subr.mxu0 0.0
        %586 = vmatpush2.msra.mxu0 0.0
        %587 = vmatprep.subr.mxu0 0.0
        %588 = vmatpush2.msra.mxu0 0.0
        %589 = vmatprep.subr.mxu0 0.0
        %590 = vmatpush2.msra.mxu0 0.0
        %591 = vmatprep.subr.mxu0 0.0
        %592 = vmatpush2.msra.mxu0 0.0
        %593 = vmatprep.subr.mxu0 0.0
        %594 = vmatpush2.msra.mxu0 0.0
        %595 = vmatprep.subr.mxu0 0.0
        %596 = vmatpush2.msra.mxu0 0.0
        %597 = vmatprep.subr.mxu0 0.0
        %598 = vmatpush2.msra.mxu0 0.0
        %599 = vmatprep.mubr.f32.mxu0 0.0
        %600 = vmatmul.mubr.f32.gmra.mxu0 %v445
        %v601 = vpop.f32.mrf.mxu0
        %v602 = vadd.f32 %v518, %v601
        %v603 = vpop.f32.mrf.mxu0
        %v604 = vadd.f32 %v522, %v603
        %605 = vmatprep.mubr.f32.mxu0 0.0
        %606 = vmatmul.mubr.f32.gmra.mxu0 %v446
        %v607 = vpop.f32.mrf.mxu0
        %v608 = vadd.f32 %v518, %v607
        %v609 = vpop.f32.mrf.mxu0
        %v610 = vadd.f32 %v522, %v609
        %611 = vmatprep.mubr.f32.mxu0 0.0
        %612 = vmatmul.mubr.f32.gmra.mxu0 %v447
        %v613 = vpop.f32.mrf.mxu0
        %v614 = vadd.f32 %v518, %v613
        %v615 = vpop.f32.mrf.mxu0
        %v616 = vadd.f32 %v522, %v615
        %617 = vmatprep.mubr.f32.mxu0 0.0
        %618 = vmatmul.mubr.f32.gmra.mxu0 %v448
        %v619 = vpop.f32.mrf.mxu0
        %v620 = vadd.f32 %v518, %v619
        %v621 = vpop.f32.mrf.mxu0
        %v622 = vadd.f32 %v522, %v621
        %623 = vdwg.mxu0
        %624 = vmatprep.subr.mxu0 %v512
        %625 = vmatpush1.msra.mxu0 %v511
        %626 = vmatprep.subr.mxu0 %v508
        %627 = vmatpush1.msra.mxu0 %v507
        %628 = vmatprep.subr.mxu0 %v504
        %629 = vmatpush1.msra.mxu0 %v503
        %630 = vmatprep.subr.mxu0 %v500
        %631 = vmatpush1.msra.mxu0 %v499
        %632 = vmatprep.subr.mxu0 %v496
        %633 = vmatpush1.msra.mxu0 %v495
        %634 = vmatprep.subr.mxu0 %v492
        %635 = vmatpush1.msra.mxu0 %v491
        %636 = vmatprep.subr.mxu0 %v488
        %637 = vmatpush1.msra.mxu0 %v487
        %638 = vmatprep.subr.mxu0 %v484
        %639 = vmatpush1.msra.mxu0 %v483
        %640 = vmatprep.subr.mxu0 %v480
        %641 = vmatpush1.msra.mxu0 %v479
        %642 = vmatprep.subr.mxu0 %v476
        %643 = vmatpush1.msra.mxu0 %v475
        %644 = vmatprep.subr.mxu0 %v472
        %645 = vmatpush1.msra.mxu0 %v471
        %646 = vmatprep.subr.mxu0 %v468
        %647 = vmatpush1.msra.mxu0 %v467
        %648 = vmatprep.subr.mxu0 %v464
        %649 = vmatpush1.msra.mxu0 %v463
        %650 = vmatprep.subr.mxu0 %v460
        %651 = vmatpush1.msra.mxu0 %v459
        %652 = vmatprep.subr.mxu0 %v456
        %653 = vmatpush1.msra.mxu0 %v455
        %654 = vmatprep.subr.mxu0 %v452
        %655 = vmatpush1.msra.mxu0 %v451
        %656 = vmatprep.subr.mxu0 0.0
        %657 = vmatpush2.msra.mxu0 0.0
        %658 = vmatprep.subr.mxu0 0.0
        %659 = vmatpush2.msra.mxu0 0.0
        %660 = vmatprep.subr.mxu0 0.0
        %661 = vmatpush2.msra.mxu0 0.0
        %662 = vmatprep.subr.mxu0 0.0
        %663 = vmatpush2.msra.mxu0 0.0
        %664 = vmatprep.subr.mxu0 0.0
        %665 = vmatpush2.msra.mxu0 0.0
        %666 = vmatprep.subr.mxu0 0.0
        %667 = vmatpush2.msra.mxu0 0.0
        %668 = vmatprep.subr.mxu0 0.0
        %669 = vmatpush2.msra.mxu0 0.0
        %670 = vmatprep.subr.mxu0 0.0
        %671 = vmatpush2.msra.mxu0 0.0
        %672 = vmatprep.subr.mxu0 0.0
        %673 = vmatpush2.msra.mxu0 0.0
        %674 = vmatprep.subr.mxu0 0.0
        %675 = vmatpush2.msra.mxu0 0.0
        %676 = vmatprep.subr.mxu0 0.0
        %677 = vmatpush2.msra.mxu0 0.0
        %678 = vmatprep.subr.mxu0 0.0
        %679 = vmatpush2.msra.mxu0 0.0
        %680 = vmatprep.subr.mxu0 0.0
        %681 = vmatpush2.msra.mxu0 0.0
        %682 = vmatprep.subr.mxu0 0.0
        %683 = vmatpush2.msra.mxu0 0.0
        %684 = vmatprep.subr.mxu0 0.0
        %685 = vmatpush2.msra.mxu0 0.0
        %686 = vmatprep.subr.mxu0 0.0
        %687 = vmatpush2.msra.mxu0 0.0
        %688 = vmatprep.mubr.f32.mxu0 0.0
        %689 = vmatmul.mubr.f32.gmra.mxu0 %v445
        %v690 = vpop.f32.mrf.mxu0
        %v691 = vadd.f32 %v526, %v690
        %v692 = vpop.f32.mrf.mxu0
        %v693 = vadd.f32 %v530, %v692
        %694 = vmatprep.mubr.f32.mxu0 0.0
        %695 = vmatmul.mubr.f32.gmra.mxu0 %v446
        %v696 = vpop.f32.mrf.mxu0
        %v697 = vadd.f32 %v526, %v696
        %v698 = vpop.f32.mrf.mxu0
        %v699 = vadd.f32 %v530, %v698
        %700 = vmatprep.mubr.f32.mxu0 0.0
        %701 = vmatmul.mubr.f32.gmra.mxu0 %v447
        %v702 = vpop.f32.mrf.mxu0
        %v703 = vadd.f32 %v526, %v702
        %v704 = vpop.f32.mrf.mxu0
        %v705 = vadd.f32 %v530, %v704
        %706 = vmatprep.mubr.f32.mxu0 0.0
        %707 = vmatmul.mubr.f32.gmra.mxu0 %v448
        %v708 = vpop.f32.mrf.mxu0
        %v709 = vadd.f32 %v526, %v708
        %v710 = vpop.f32.mrf.mxu0
        %v711 = vadd.f32 %v530, %v710
        %712 = vdwg.mxu0
        %713 = vst [vmem:[#allocation2] sm:$0xff] %v602
        %714 = vst [vmem:[#allocation2 + $0x8] sm:$0xff] %v604
        %715 = vst [vmem:[#allocation2 + $0x10] sm:$0xff] %v691
        %716 = vst [vmem:[#allocation2 + $0x18] sm:$0xff] %v693
        %717 = vst [vmem:[#allocation2 + $0x20] sm:$0xff] %v608
        %718 = vst [vmem:[#allocation2 + $0x28] sm:$0xff] %v610
        %719 = vst [vmem:[#allocation2 + $0x30] sm:$0xff] %v697
        %720 = vst [vmem:[#allocation2 + $0x38] sm:$0xff] %v699
        %721 = vst [vmem:[#allocation2 + $0x40] sm:$0xff] %v614
        %722 = vst [vmem:[#allocation2 + $0x48] sm:$0xff] %v616
        %723 = vst [vmem:[#allocation2 + $0x50] sm:$0xff] %v703
        %724 = vst [vmem:[#allocation2 + $0x58] sm:$0xff] %v705
        %725 = vst [vmem:[#allocation2 + $0x60] sm:$0xff] %v620
        %726 = vst [vmem:[#allocation2 + $0x68] sm:$0xff] %v622
        %727 = vst [vmem:[#allocation2 + $0x70] sm:$0xff] %v709
        %728 = vst [vmem:[#allocation2 + $0x78] sm:$0xff] %v711
        %v729 = vld [vmem:[%s378] sm:$0xff]
        %v730 = vld [vmem:[%s378 + $0x8] sm:$0xff]
        %v731 = vld [vmem:[%s378 + $0x10] sm:$0xff]
        %v732 = vld [vmem:[%s378 + $0x18] sm:$0xff]
        %s733 = scalar_lea.vmem [#allocation11], 512
        %v734 = vld [vmem:[%s733] sm:$0xff]
        %v735 = vld [vmem:[%s733 + $0x8] sm:$0xff]
        %v736 = vld [vmem:[%s733 + $0x10] sm:$0xff]
        %v737 = vld [vmem:[%s733 + $0x18] sm:$0xff]
        %v738 = vld [vmem:[%s733 + $0x20] sm:$0xff]
        %v739 = vld [vmem:[%s733 + $0x28] sm:$0xff]
        %v740 = vld [vmem:[%s733 + $0x30] sm:$0xff]
        %v741 = vld [vmem:[%s733 + $0x38] sm:$0xff]
        %v742 = vld [vmem:[%s733 + $0x40] sm:$0xff]
        %v743 = vld [vmem:[%s733 + $0x48] sm:$0xff]
        %v744 = vld [vmem:[%s733 + $0x50] sm:$0xff]
        %v745 = vld [vmem:[%s733 + $0x58] sm:$0xff]
        %v746 = vld [vmem:[%s733 + $0x60] sm:$0xff]
        %v747 = vld [vmem:[%s733 + $0x68] sm:$0xff]
        %v748 = vld [vmem:[%s733 + $0x70] sm:$0xff]
        %v749 = vld [vmem:[%s733 + $0x78] sm:$0xff]
        %v750 = vld [vmem:[%s733 + $0x80] sm:$0xff]
        %v751 = vld [vmem:[%s733 + $0x88] sm:$0xff]
        %v752 = vld [vmem:[%s733 + $0x90] sm:$0xff]
        %v753 = vld [vmem:[%s733 + $0x98] sm:$0xff]
        %v754 = vld [vmem:[%s733 + $0xa0] sm:$0xff]
        %v755 = vld [vmem:[%s733 + $0xa8] sm:$0xff]
        %v756 = vld [vmem:[%s733 + $0xb0] sm:$0xff]
        %v757 = vld [vmem:[%s733 + $0xb8] sm:$0xff]
        %v758 = vld [vmem:[%s733 + $0xc0] sm:$0xff]
        %v759 = vld [vmem:[%s733 + $0xc8] sm:$0xff]
        %v760 = vld [vmem:[%s733 + $0xd0] sm:$0xff]
        %v761 = vld [vmem:[%s733 + $0xd8] sm:$0xff]
        %v762 = vld [vmem:[%s733 + $0xe0] sm:$0xff]
        %v763 = vld [vmem:[%s733 + $0xe8] sm:$0xff]
        %v764 = vld [vmem:[%s733 + $0xf0] sm:$0xff]
        %v765 = vld [vmem:[%s733 + $0xf8] sm:$0xff]
        %v766 = vld [vmem:[%s733 + $0x100] sm:$0xff]
        %v767 = vld [vmem:[%s733 + $0x108] sm:$0xff]
        %v768 = vld [vmem:[%s733 + $0x110] sm:$0xff]
        %v769 = vld [vmem:[%s733 + $0x118] sm:$0xff]
        %v770 = vld [vmem:[%s733 + $0x120] sm:$0xff]
        %v771 = vld [vmem:[%s733 + $0x128] sm:$0xff]
        %v772 = vld [vmem:[%s733 + $0x130] sm:$0xff]
        %v773 = vld [vmem:[%s733 + $0x138] sm:$0xff]
        %v774 = vld [vmem:[%s733 + $0x140] sm:$0xff]
        %v775 = vld [vmem:[%s733 + $0x148] sm:$0xff]
        %v776 = vld [vmem:[%s733 + $0x150] sm:$0xff]
        %v777 = vld [vmem:[%s733 + $0x158] sm:$0xff]
        %v778 = vld [vmem:[%s733 + $0x160] sm:$0xff]
        %v779 = vld [vmem:[%s733 + $0x168] sm:$0xff]
        %v780 = vld [vmem:[%s733 + $0x170] sm:$0xff]
        %v781 = vld [vmem:[%s733 + $0x178] sm:$0xff]
        %v782 = vld [vmem:[%s733 + $0x180] sm:$0xff]
        %v783 = vld [vmem:[%s733 + $0x188] sm:$0xff]
        %v784 = vld [vmem:[%s733 + $0x190] sm:$0xff]
        %v785 = vld [vmem:[%s733 + $0x198] sm:$0xff]
        %v786 = vld [vmem:[%s733 + $0x1a0] sm:$0xff]
        %v787 = vld [vmem:[%s733 + $0x1a8] sm:$0xff]
        %v788 = vld [vmem:[%s733 + $0x1b0] sm:$0xff]
        %v789 = vld [vmem:[%s733 + $0x1b8] sm:$0xff]
        %v790 = vld [vmem:[%s733 + $0x1c0] sm:$0xff]
        %v791 = vld [vmem:[%s733 + $0x1c8] sm:$0xff]
        %v792 = vld [vmem:[%s733 + $0x1d0] sm:$0xff]
        %v793 = vld [vmem:[%s733 + $0x1d8] sm:$0xff]
        %v794 = vld [vmem:[%s733 + $0x1e0] sm:$0xff]
        %v795 = vld [vmem:[%s733 + $0x1e8] sm:$0xff]
        %v796 = vld [vmem:[%s733 + $0x1f0] sm:$0xff]
        %v797 = vld [vmem:[%s733 + $0x1f8] sm:$0xff]
        %s798 = scalar_lea.vmem %s5, 4
        %v799 = vld [vmem:[%s798] sm:$0xf]
        %v801 = vlaneseq
        %v802 = vshrl.u32 %v801, 7
        %v803 = vsub.s32 0, %v802
        %v804 = vrot.slane %v799, %v803
        %v805 = vlaneseq
        %v806 = vshrl.u32 %v805, 7
        %v807 = vsub.s32 1, %v806
        %v808 = vrot.slane %v799, %v807
        %v809 = vlaneseq
        %v810 = vshrl.u32 %v809, 7
        %v811 = vsub.s32 2, %v810
        %v812 = vrot.slane %v799, %v811
        %v813 = vlaneseq
        %v814 = vshrl.u32 %v813, 7
        %v815 = vsub.s32 3, %v814
        %v816 = vrot.slane %v799, %v815
        %821 = vmatprep.subr.mxu0 %v795
        %822 = vmatpush1.msra.mxu0 %v794
        %823 = vmatprep.subr.mxu0 %v791
        %824 = vmatpush1.msra.mxu0 %v790
        %825 = vmatprep.subr.mxu0 %v787
        %826 = vmatpush1.msra.mxu0 %v786
        %827 = vmatprep.subr.mxu0 %v783
        %828 = vmatpush1.msra.mxu0 %v782
        %829 = vmatprep.subr.mxu0 %v779
        %830 = vmatpush1.msra.mxu0 %v778
        %831 = vmatprep.subr.mxu0 %v775
        %832 = vmatpush1.msra.mxu0 %v774
        %833 = vmatprep.subr.mxu0 %v771
        %834 = vmatpush1.msra.mxu0 %v770
        %835 = vmatprep.subr.mxu0 %v767
        %836 = vmatpush1.msra.mxu0 %v766
        %837 = vmatprep.subr.mxu0 %v763
        %838 = vmatpush1.msra.mxu0 %v762
        %839 = vmatprep.subr.mxu0 %v759
        %840 = vmatpush1.msra.mxu0 %v758
        %841 = vmatprep.subr.mxu0 %v755
        %842 = vmatpush1.msra.mxu0 %v754
        %843 = vmatprep.subr.mxu0 %v751
        %844 = vmatpush1.msra.mxu0 %v750
        %845 = vmatprep.subr.mxu0 %v747
        %846 = vmatpush1.msra.mxu0 %v746
        %847 = vmatprep.subr.mxu0 %v743
        %848 = vmatpush1.msra.mxu0 %v742
        %849 = vmatprep.subr.mxu0 %v739
        %850 = vmatpush1.msra.mxu0 %v738
        %851 = vmatprep.subr.mxu0 %v735
        %852 = vmatpush1.msra.mxu0 %v734
        %853 = vmatprep.subr.mxu0 0.0
        %854 = vmatpush2.msra.mxu0 0.0
        %855 = vmatprep.subr.mxu0 0.0
        %856 = vmatpush2.msra.mxu0 0.0
        %857 = vmatprep.subr.mxu0 0.0
        %858 = vmatpush2.msra.mxu0 0.0
        %859 = vmatprep.subr.mxu0 0.0
        %860 = vmatpush2.msra.mxu0 0.0
        %861 = vmatprep.subr.mxu0 0.0
        %862 = vmatpush2.msra.mxu0 0.0
        %863 = vmatprep.subr.mxu0 0.0
        %864 = vmatpush2.msra.mxu0 0.0
        %865 = vmatprep.subr.mxu0 0.0
        %866 = vmatpush2.msra.mxu0 0.0
        %867 = vmatprep.subr.mxu0 0.0
        %868 = vmatpush2.msra.mxu0 0.0
        %869 = vmatprep.subr.mxu0 0.0
        %870 = vmatpush2.msra.mxu0 0.0
        %871 = vmatprep.subr.mxu0 0.0
        %872 = vmatpush2.msra.mxu0 0.0
        %873 = vmatprep.subr.mxu0 0.0
        %874 = vmatpush2.msra.mxu0 0.0
        %875 = vmatprep.subr.mxu0 0.0
        %876 = vmatpush2.msra.mxu0 0.0
        %877 = vmatprep.subr.mxu0 0.0
        %878 = vmatpush2.msra.mxu0 0.0
        %879 = vmatprep.subr.mxu0 0.0
        %880 = vmatpush2.msra.mxu0 0.0
        %881 = vmatprep.subr.mxu0 0.0
        %882 = vmatpush2.msra.mxu0 0.0
        %883 = vmatprep.subr.mxu0 0.0
        %884 = vmatpush2.msra.mxu0 0.0
        %885 = vmatprep.mubr.f32.mxu0 0.0
        %886 = vmatmul.mubr.f32.gmra.mxu0 %v729
        %v887 = vpop.f32.mrf.mxu0
        %v888 = vadd.f32 %v804, %v887
        %v889 = vpop.f32.mrf.mxu0
        %v890 = vadd.f32 %v808, %v889
        %891 = vmatprep.mubr.f32.mxu0 0.0
        %892 = vmatmul.mubr.f32.gmra.mxu0 %v730
        %v893 = vpop.f32.mrf.mxu0
        %v894 = vadd.f32 %v804, %v893
        %v895 = vpop.f32.mrf.mxu0
        %v896 = vadd.f32 %v808, %v895
        %897 = vmatprep.mubr.f32.mxu0 0.0
        %898 = vmatmul.mubr.f32.gmra.mxu0 %v731
        %v899 = vpop.f32.mrf.mxu0
        %v900 = vadd.f32 %v804, %v899
        %v901 = vpop.f32.mrf.mxu0
        %v902 = vadd.f32 %v808, %v901
        %903 = vmatprep.mubr.f32.mxu0 0.0
        %904 = vmatmul.mubr.f32.gmra.mxu0 %v732
        %v905 = vpop.f32.mrf.mxu0
        %v906 = vadd.f32 %v804, %v905
        %v907 = vpop.f32.mrf.mxu0
        %v908 = vadd.f32 %v808, %v907
        %909 = vdwg.mxu0
        %910 = vmatprep.subr.mxu0 %v797
        %911 = vmatpush1.msra.mxu0 %v796
        %912 = vmatprep.subr.mxu0 %v793
        %913 = vmatpush1.msra.mxu0 %v792
        %914 = vmatprep.subr.mxu0 %v789
        %915 = vmatpush1.msra.mxu0 %v788
        %916 = vmatprep.subr.mxu0 %v785
        %917 = vmatpush1.msra.mxu0 %v784
        %918 = vmatprep.subr.mxu0 %v781
        %919 = vmatpush1.msra.mxu0 %v780
        %920 = vmatprep.subr.mxu0 %v777
        %921 = vmatpush1.msra.mxu0 %v776
        %922 = vmatprep.subr.mxu0 %v773
        %923 = vmatpush1.msra.mxu0 %v772
        %924 = vmatprep.subr.mxu0 %v769
        %925 = vmatpush1.msra.mxu0 %v768
        %926 = vmatprep.subr.mxu0 %v765
        %927 = vmatpush1.msra.mxu0 %v764
        %928 = vmatprep.subr.mxu0 %v761
        %929 = vmatpush1.msra.mxu0 %v760
        %930 = vmatprep.subr.mxu0 %v757
        %931 = vmatpush1.msra.mxu0 %v756
        %932 = vmatprep.subr.mxu0 %v753
        %933 = vmatpush1.msra.mxu0 %v752
        %934 = vmatprep.subr.mxu0 %v749
        %935 = vmatpush1.msra.mxu0 %v748
        %936 = vmatprep.subr.mxu0 %v745
        %937 = vmatpush1.msra.mxu0 %v744
        %938 = vmatprep.subr.mxu0 %v741
        %939 = vmatpush1.msra.mxu0 %v740
        %940 = vmatprep.subr.mxu0 %v737
        %941 = vmatpush1.msra.mxu0 %v736
        %942 = vmatprep.subr.mxu0 0.0
        %943 = vmatpush2.msra.mxu0 0.0
        %944 = vmatprep.subr.mxu0 0.0
        %945 = vmatpush2.msra.mxu0 0.0
        %946 = vmatprep.subr.mxu0 0.0
        %947 = vmatpush2.msra.mxu0 0.0
        %948 = vmatprep.subr.mxu0 0.0
        %949 = vmatpush2.msra.mxu0 0.0
        %950 = vmatprep.subr.mxu0 0.0
        %951 = vmatpush2.msra.mxu0 0.0
        %952 = vmatprep.subr.mxu0 0.0
        %953 = vmatpush2.msra.mxu0 0.0
        %954 = vmatprep.subr.mxu0 0.0
        %955 = vmatpush2.msra.mxu0 0.0
        %956 = vmatprep.subr.mxu0 0.0
        %957 = vmatpush2.msra.mxu0 0.0
        %958 = vmatprep.subr.mxu0 0.0
        %959 = vmatpush2.msra.mxu0 0.0
        %960 = vmatprep.subr.mxu0 0.0
        %961 = vmatpush2.msra.mxu0 0.0
        %962 = vmatprep.subr.mxu0 0.0
        %963 = vmatpush2.msra.mxu0 0.0
        %964 = vmatprep.subr.mxu0 0.0
        %965 = vmatpush2.msra.mxu0 0.0
        %966 = vmatprep.subr.mxu0 0.0
        %967 = vmatpush2.msra.mxu0 0.0
        %968 = vmatprep.subr.mxu0 0.0
        %969 = vmatpush2.msra.mxu0 0.0
        %970 = vmatprep.subr.mxu0 0.0
        %971 = vmatpush2.msra.mxu0 0.0
        %972 = vmatprep.subr.mxu0 0.0
        %973 = vmatpush2.msra.mxu0 0.0
        %974 = vmatprep.mubr.f32.mxu0 0.0
        %975 = vmatmul.mubr.f32.gmra.mxu0 %v729
        %v976 = vpop.f32.mrf.mxu0
        %v977 = vadd.f32 %v812, %v976
        %v978 = vpop.f32.mrf.mxu0
        %v979 = vadd.f32 %v816, %v978
        %980 = vmatprep.mubr.f32.mxu0 0.0
        %981 = vmatmul.mubr.f32.gmra.mxu0 %v730
        %v982 = vpop.f32.mrf.mxu0
        %v983 = vadd.f32 %v812, %v982
        %v984 = vpop.f32.mrf.mxu0
        %v985 = vadd.f32 %v816, %v984
        %986 = vmatprep.mubr.f32.mxu0 0.0
        %987 = vmatmul.mubr.f32.gmra.mxu0 %v731
        %v988 = vpop.f32.mrf.mxu0
        %v989 = vadd.f32 %v812, %v988
        %v990 = vpop.f32.mrf.mxu0
        %v991 = vadd.f32 %v816, %v990
        %992 = vmatprep.mubr.f32.mxu0 0.0
        %993 = vmatmul.mubr.f32.gmra.mxu0 %v732
        %v994 = vpop.f32.mrf.mxu0
        %v995 = vadd.f32 %v812, %v994
        %v996 = vpop.f32.mrf.mxu0
        %v997 = vadd.f32 %v816, %v996
        %998 = vdwg.mxu0
        %999 = vst [vmem:[#allocation3] sm:$0xff] %v888
        %1000 = vst [vmem:[#allocation3 + $0x8] sm:$0xff] %v890
        %1001 = vst [vmem:[#allocation3 + $0x10] sm:$0xff] %v977
        %1002 = vst [vmem:[#allocation3 + $0x18] sm:$0xff] %v979
        %1003 = vst [vmem:[#allocation3 + $0x20] sm:$0xff] %v894
        %1004 = vst [vmem:[#allocation3 + $0x28] sm:$0xff] %v896
        %1005 = vst [vmem:[#allocation3 + $0x30] sm:$0xff] %v983
        %1006 = vst [vmem:[#allocation3 + $0x38] sm:$0xff] %v985
        %1007 = vst [vmem:[#allocation3 + $0x40] sm:$0xff] %v900
        %1008 = vst [vmem:[#allocation3 + $0x48] sm:$0xff] %v902
        %1009 = vst [vmem:[#allocation3 + $0x50] sm:$0xff] %v989
        %1010 = vst [vmem:[#allocation3 + $0x58] sm:$0xff] %v991
        %1011 = vst [vmem:[#allocation3 + $0x60] sm:$0xff] %v906
        %1012 = vst [vmem:[#allocation3 + $0x68] sm:$0xff] %v908
        %1013 = vst [vmem:[#allocation3 + $0x70] sm:$0xff] %v995
        %1014 = vst [vmem:[#allocation3 + $0x78] sm:$0xff] %v997
        %v1015 = vld [vmem:[#allocation12] sm:$0xff]
        %v1016 = vld [vmem:[#allocation12 + $0x8] sm:$0xff]
        %v1017 = vld [vmem:[#allocation12 + $0x10] sm:$0xff]
        %v1018 = vld [vmem:[#allocation12 + $0x18] sm:$0xff]
        %v1019 = vld [vmem:[#allocation12 + $0x20] sm:$0xff]
        %v1020 = vld [vmem:[#allocation12 + $0x28] sm:$0xff]
        %v1021 = vld [vmem:[#allocation12 + $0x30] sm:$0xff]
        %v1022 = vld [vmem:[#allocation12 + $0x38] sm:$0xff]
        %v1023 = vld [vmem:[#allocation12 + $0x40] sm:$0xff]
        %v1024 = vld [vmem:[#allocation12 + $0x48] sm:$0xff]
        %v1025 = vld [vmem:[#allocation12 + $0x50] sm:$0xff]
        %v1026 = vld [vmem:[#allocation12 + $0x58] sm:$0xff]
        %v1027 = vld [vmem:[#allocation12 + $0x60] sm:$0xff]
        %v1028 = vld [vmem:[#allocation12 + $0x68] sm:$0xff]
        %v1029 = vld [vmem:[#allocation12 + $0x70] sm:$0xff]
        %v1030 = vld [vmem:[#allocation12 + $0x78] sm:$0xff]
        %v1031 = vld [vmem:[#allocation12 + $0x80] sm:$0xff]
        %v1032 = vld [vmem:[#allocation12 + $0x88] sm:$0xff]
        %v1033 = vld [vmem:[#allocation12 + $0x90] sm:$0xff]
        %v1034 = vld [vmem:[#allocation12 + $0x98] sm:$0xff]
        %v1035 = vld [vmem:[#allocation12 + $0xa0] sm:$0xff]
        %v1036 = vld [vmem:[#allocation12 + $0xa8] sm:$0xff]
        %v1037 = vld [vmem:[#allocation12 + $0xb0] sm:$0xff]
        %v1038 = vld [vmem:[#allocation12 + $0xb8] sm:$0xff]
        %v1039 = vld [vmem:[#allocation12 + $0xc0] sm:$0xff]
        %v1040 = vld [vmem:[#allocation12 + $0xc8] sm:$0xff]
        %v1041 = vld [vmem:[#allocation12 + $0xd0] sm:$0xff]
        %v1042 = vld [vmem:[#allocation12 + $0xd8] sm:$0xff]
        %v1043 = vld [vmem:[#allocation12 + $0xe0] sm:$0xff]
        %v1044 = vld [vmem:[#allocation12 + $0xe8] sm:$0xff]
        %v1045 = vld [vmem:[#allocation12 + $0xf0] sm:$0xff]
        %v1046 = vld [vmem:[#allocation12 + $0xf8] sm:$0xff]
        %v1047 = vld [vmem:[#allocation12 + $0x100] sm:$0xff]
        %v1048 = vld [vmem:[#allocation12 + $0x108] sm:$0xff]
        %v1049 = vld [vmem:[#allocation12 + $0x110] sm:$0xff]
        %v1050 = vld [vmem:[#allocation12 + $0x118] sm:$0xff]
        %v1051 = vld [vmem:[#allocation12 + $0x120] sm:$0xff]
        %v1052 = vld [vmem:[#allocation12 + $0x128] sm:$0xff]
        %v1053 = vld [vmem:[#allocation12 + $0x130] sm:$0xff]
        %v1054 = vld [vmem:[#allocation12 + $0x138] sm:$0xff]
        %v1055 = vld [vmem:[#allocation12 + $0x140] sm:$0xff]
        %v1056 = vld [vmem:[#allocation12 + $0x148] sm:$0xff]
        %v1057 = vld [vmem:[#allocation12 + $0x150] sm:$0xff]
        %v1058 = vld [vmem:[#allocation12 + $0x158] sm:$0xff]
        %v1059 = vld [vmem:[#allocation12 + $0x160] sm:$0xff]
        %v1060 = vld [vmem:[#allocation12 + $0x168] sm:$0xff]
        %v1061 = vld [vmem:[#allocation12 + $0x170] sm:$0xff]
        %v1062 = vld [vmem:[#allocation12 + $0x178] sm:$0xff]
        %v1063 = vld [vmem:[#allocation12 + $0x180] sm:$0xff]
        %v1064 = vld [vmem:[#allocation12 + $0x188] sm:$0xff]
        %v1065 = vld [vmem:[#allocation12 + $0x190] sm:$0xff]
        %v1066 = vld [vmem:[#allocation12 + $0x198] sm:$0xff]
        %v1067 = vld [vmem:[#allocation12 + $0x1a0] sm:$0xff]
        %v1068 = vld [vmem:[#allocation12 + $0x1a8] sm:$0xff]
        %v1069 = vld [vmem:[#allocation12 + $0x1b0] sm:$0xff]
        %v1070 = vld [vmem:[#allocation12 + $0x1b8] sm:$0xff]
        %v1071 = vld [vmem:[#allocation12 + $0x1c0] sm:$0xff]
        %v1072 = vld [vmem:[#allocation12 + $0x1c8] sm:$0xff]
        %v1073 = vld [vmem:[#allocation12 + $0x1d0] sm:$0xff]
        %v1074 = vld [vmem:[#allocation12 + $0x1d8] sm:$0xff]
        %v1075 = vld [vmem:[#allocation12 + $0x1e0] sm:$0xff]
        %v1076 = vld [vmem:[#allocation12 + $0x1e8] sm:$0xff]
        %v1077 = vld [vmem:[#allocation12 + $0x1f0] sm:$0xff]
        %v1078 = vld [vmem:[#allocation12 + $0x1f8] sm:$0xff]
        %s1079 = scalar_lea.vmem [#allocation12], 512
        %v1080 = vld [vmem:[%s1079] sm:$0xff]
        %v1081 = vld [vmem:[%s1079 + $0x8] sm:$0xff]
        %v1082 = vld [vmem:[%s1079 + $0x10] sm:$0xff]
        %v1083 = vld [vmem:[%s1079 + $0x18] sm:$0xff]
        %v1084 = vld [vmem:[%s1079 + $0x20] sm:$0xff]
        %v1085 = vld [vmem:[%s1079 + $0x28] sm:$0xff]
        %v1086 = vld [vmem:[%s1079 + $0x30] sm:$0xff]
        %v1087 = vld [vmem:[%s1079 + $0x38] sm:$0xff]
        %v1088 = vld [vmem:[%s1079 + $0x40] sm:$0xff]
        %v1089 = vld [vmem:[%s1079 + $0x48] sm:$0xff]
        %v1090 = vld [vmem:[%s1079 + $0x50] sm:$0xff]
        %v1091 = vld [vmem:[%s1079 + $0x58] sm:$0xff]
        %v1092 = vld [vmem:[%s1079 + $0x60] sm:$0xff]
        %v1093 = vld [vmem:[%s1079 + $0x68] sm:$0xff]
        %v1094 = vld [vmem:[%s1079 + $0x70] sm:$0xff]
        %v1095 = vld [vmem:[%s1079 + $0x78] sm:$0xff]
        %v1096 = vld [vmem:[%s1079 + $0x80] sm:$0xff]
        %v1097 = vld [vmem:[%s1079 + $0x88] sm:$0xff]
        %v1098 = vld [vmem:[%s1079 + $0x90] sm:$0xff]
        %v1099 = vld [vmem:[%s1079 + $0x98] sm:$0xff]
        %v1100 = vld [vmem:[%s1079 + $0xa0] sm:$0xff]
        %v1101 = vld [vmem:[%s1079 + $0xa8] sm:$0xff]
        %v1102 = vld [vmem:[%s1079 + $0xb0] sm:$0xff]
        %v1103 = vld [vmem:[%s1079 + $0xb8] sm:$0xff]
        %v1104 = vld [vmem:[%s1079 + $0xc0] sm:$0xff]
        %v1105 = vld [vmem:[%s1079 + $0xc8] sm:$0xff]
        %v1106 = vld [vmem:[%s1079 + $0xd0] sm:$0xff]
        %v1107 = vld [vmem:[%s1079 + $0xd8] sm:$0xff]
        %v1108 = vld [vmem:[%s1079 + $0xe0] sm:$0xff]
        %v1109 = vld [vmem:[%s1079 + $0xe8] sm:$0xff]
        %v1110 = vld [vmem:[%s1079 + $0xf0] sm:$0xff]
        %v1111 = vld [vmem:[%s1079 + $0xf8] sm:$0xff]
        %v1112 = vld [vmem:[%s1079 + $0x100] sm:$0xff]
        %v1113 = vld [vmem:[%s1079 + $0x108] sm:$0xff]
        %v1114 = vld [vmem:[%s1079 + $0x110] sm:$0xff]
        %v1115 = vld [vmem:[%s1079 + $0x118] sm:$0xff]
        %v1116 = vld [vmem:[%s1079 + $0x120] sm:$0xff]
        %v1117 = vld [vmem:[%s1079 + $0x128] sm:$0xff]
        %v1118 = vld [vmem:[%s1079 + $0x130] sm:$0xff]
        %v1119 = vld [vmem:[%s1079 + $0x138] sm:$0xff]
        %v1120 = vld [vmem:[%s1079 + $0x140] sm:$0xff]
        %v1121 = vld [vmem:[%s1079 + $0x148] sm:$0xff]
        %v1122 = vld [vmem:[%s1079 + $0x150] sm:$0xff]
        %v1123 = vld [vmem:[%s1079 + $0x158] sm:$0xff]
        %v1124 = vld [vmem:[%s1079 + $0x160] sm:$0xff]
        %v1125 = vld [vmem:[%s1079 + $0x168] sm:$0xff]
        %v1126 = vld [vmem:[%s1079 + $0x170] sm:$0xff]
        %v1127 = vld [vmem:[%s1079 + $0x178] sm:$0xff]
        %v1128 = vld [vmem:[%s1079 + $0x180] sm:$0xff]
        %v1129 = vld [vmem:[%s1079 + $0x188] sm:$0xff]
        %v1130 = vld [vmem:[%s1079 + $0x190] sm:$0xff]
        %v1131 = vld [vmem:[%s1079 + $0x198] sm:$0xff]
        %v1132 = vld [vmem:[%s1079 + $0x1a0] sm:$0xff]
        %v1133 = vld [vmem:[%s1079 + $0x1a8] sm:$0xff]
        %v1134 = vld [vmem:[%s1079 + $0x1b0] sm:$0xff]
        %v1135 = vld [vmem:[%s1079 + $0x1b8] sm:$0xff]
        %v1136 = vld [vmem:[%s1079 + $0x1c0] sm:$0xff]
        %v1137 = vld [vmem:[%s1079 + $0x1c8] sm:$0xff]
        %v1138 = vld [vmem:[%s1079 + $0x1d0] sm:$0xff]
        %v1139 = vld [vmem:[%s1079 + $0x1d8] sm:$0xff]
        %v1140 = vld [vmem:[%s1079 + $0x1e0] sm:$0xff]
        %v1141 = vld [vmem:[%s1079 + $0x1e8] sm:$0xff]
        %v1142 = vld [vmem:[%s1079 + $0x1f0] sm:$0xff]
        %v1143 = vld [vmem:[%s1079 + $0x1f8] sm:$0xff]
        %v1144 = vld [vmem:[%s0] sm:$0xff]
        %s1145 = smul.u32 %s35, 4
        %s1146 = ssub.s32 1, %s35
        %s1147 = smul.u32 %s1146, 4
        %v1148 = vld [vmem:[#allocation4] sm:$0xff]
        %v1149 = vld [vmem:[#allocation5] sm:$0xff]
        %s1150 = scalar_lea.vmem [#allocation4], 8
        %v1151 = vld [vmem:[%s1150] sm:$0xff]
        %s1152 = scalar_lea.vmem [#allocation5], 8
        %v1153 = vld [vmem:[%s1152] sm:$0xff]
        %v1154 = vld [vmem:[#allocation2] sm:$0xff]
        %v1155 = vld [vmem:[#allocation2 + $0x8] sm:$0xff]
        %v1156 = vld [vmem:[#allocation2 + $0x10] sm:$0xff]
        %v1157 = vld [vmem:[#allocation2 + $0x18] sm:$0xff]
        %1158 = vmatprep.subr.mxu0 %v1076
        %1159 = vmatpush1.msra.mxu0 %v1075
        %1160 = vmatprep.subr.mxu0 %v1072
        %1161 = vmatpush1.msra.mxu0 %v1071
        %1162 = vmatprep.subr.mxu0 %v1068
        %1163 = vmatpush1.msra.mxu0 %v1067
        %1164 = vmatprep.subr.mxu0 %v1064
        %1165 = vmatpush1.msra.mxu0 %v1063
        %1166 = vmatprep.subr.mxu0 %v1060
        %1167 = vmatpush1.msra.mxu0 %v1059
        %1168 = vmatprep.subr.mxu0 %v1056
        %1169 = vmatpush1.msra.mxu0 %v1055
        %1170 = vmatprep.subr.mxu0 %v1052
        %1171 = vmatpush1.msra.mxu0 %v1051
        %1172 = vmatprep.subr.mxu0 %v1048
        %1173 = vmatpush1.msra.mxu0 %v1047
        %1174 = vmatprep.subr.mxu0 %v1044
        %1175 = vmatpush1.msra.mxu0 %v1043
        %1176 = vmatprep.subr.mxu0 %v1040
        %1177 = vmatpush1.msra.mxu0 %v1039
        %1178 = vmatprep.subr.mxu0 %v1036
        %1179 = vmatpush1.msra.mxu0 %v1035
        %1180 = vmatprep.subr.mxu0 %v1032
        %1181 = vmatpush1.msra.mxu0 %v1031
        %1182 = vmatprep.subr.mxu0 %v1028
        %1183 = vmatpush1.msra.mxu0 %v1027
        %1184 = vmatprep.subr.mxu0 %v1024
        %1185 = vmatpush1.msra.mxu0 %v1023
        %1186 = vmatprep.subr.mxu0 %v1020
        %1187 = vmatpush1.msra.mxu0 %v1019
        %1188 = vmatprep.subr.mxu0 %v1016
        %1189 = vmatpush1.msra.mxu0 %v1015
        %1190 = vmatprep.subr.mxu0 0.0
        %1191 = vmatpush2.msra.mxu0 0.0
        %1192 = vmatprep.subr.mxu0 0.0
        %1193 = vmatpush2.msra.mxu0 0.0
        %1194 = vmatprep.subr.mxu0 0.0
        %1195 = vmatpush2.msra.mxu0 0.0
        %1196 = vmatprep.subr.mxu0 0.0
        %1197 = vmatpush2.msra.mxu0 0.0
        %1198 = vmatprep.subr.mxu0 0.0
        %1199 = vmatpush2.msra.mxu0 0.0
        %1200 = vmatprep.subr.mxu0 0.0
        %1201 = vmatpush2.msra.mxu0 0.0
        %1202 = vmatprep.subr.mxu0 0.0
        %1203 = vmatpush2.msra.mxu0 0.0
        %1204 = vmatprep.subr.mxu0 0.0
        %1205 = vmatpush2.msra.mxu0 0.0
        %1206 = vmatprep.subr.mxu0 0.0
        %1207 = vmatpush2.msra.mxu0 0.0
        %1208 = vmatprep.subr.mxu0 0.0
        %1209 = vmatpush2.msra.mxu0 0.0
        %1210 = vmatprep.subr.mxu0 0.0
        %1211 = vmatpush2.msra.mxu0 0.0
        %1212 = vmatprep.subr.mxu0 0.0
        %1213 = vmatpush2.msra.mxu0 0.0
        %1214 = vmatprep.subr.mxu0 0.0
        %1215 = vmatpush2.msra.mxu0 0.0
        %1216 = vmatprep.subr.mxu0 0.0
        %1217 = vmatpush2.msra.mxu0 0.0
        %1218 = vmatprep.subr.mxu0 0.0
        %1219 = vmatpush2.msra.mxu0 0.0
        %1220 = vmatprep.subr.mxu0 0.0
        %1221 = vmatpush2.msra.mxu0 0.0
        %1222 = vmatprep.mubr.f32.mxu0 0.0
        %1223 = vmatmul.mubr.f32.gmra.mxu0 %v1148
        %v1224 = vpop.f32.mrf.mxu0
        %v1225 = vadd.f32 0.0, %v1224
        %v1226 = vpop.f32.mrf.mxu0
        %v1227 = vadd.f32 0.0, %v1226
        %1228 = vdwg.mxu0
        %1229 = vmatprep.subr.mxu0 %v1078
        %1230 = vmatpush1.msra.mxu0 %v1077
        %1231 = vmatprep.subr.mxu0 %v1074
        %1232 = vmatpush1.msra.mxu0 %v1073
        %1233 = vmatprep.subr.mxu0 %v1070
        %1234 = vmatpush1.msra.mxu0 %v1069
        %1235 = vmatprep.subr.mxu0 %v1066
        %1236 = vmatpush1.msra.mxu0 %v1065
        %1237 = vmatprep.subr.mxu0 %v1062
        %1238 = vmatpush1.msra.mxu0 %v1061
        %1239 = vmatprep.subr.mxu0 %v1058
        %1240 = vmatpush1.msra.mxu0 %v1057
        %1241 = vmatprep.subr.mxu0 %v1054
        %1242 = vmatpush1.msra.mxu0 %v1053
        %1243 = vmatprep.subr.mxu0 %v1050
        %1244 = vmatpush1.msra.mxu0 %v1049
        %1245 = vmatprep.subr.mxu0 %v1046
        %1246 = vmatpush1.msra.mxu0 %v1045
        %1247 = vmatprep.subr.mxu0 %v1042
        %1248 = vmatpush1.msra.mxu0 %v1041
        %1249 = vmatprep.subr.mxu0 %v1038
        %1250 = vmatpush1.msra.mxu0 %v1037
        %1251 = vmatprep.subr.mxu0 %v1034
        %1252 = vmatpush1.msra.mxu0 %v1033
        %1253 = vmatprep.subr.mxu0 %v1030
        %1254 = vmatpush1.msra.mxu0 %v1029
        %1255 = vmatprep.subr.mxu0 %v1026
        %1256 = vmatpush1.msra.mxu0 %v1025
        %1257 = vmatprep.subr.mxu0 %v1022
        %1258 = vmatpush1.msra.mxu0 %v1021
        %1259 = vmatprep.subr.mxu0 %v1018
        %1260 = vmatpush1.msra.mxu0 %v1017
        %1261 = vmatprep.subr.mxu0 0.0
        %1262 = vmatpush2.msra.mxu0 0.0
        %1263 = vmatprep.subr.mxu0 0.0
        %1264 = vmatpush2.msra.mxu0 0.0
        %1265 = vmatprep.subr.mxu0 0.0
        %1266 = vmatpush2.msra.mxu0 0.0
        %1267 = vmatprep.subr.mxu0 0.0
        %1268 = vmatpush2.msra.mxu0 0.0
        %1269 = vmatprep.subr.mxu0 0.0
        %1270 = vmatpush2.msra.mxu0 0.0
        %1271 = vmatprep.subr.mxu0 0.0
        %1272 = vmatpush2.msra.mxu0 0.0
        %1273 = vmatprep.subr.mxu0 0.0
        %1274 = vmatpush2.msra.mxu0 0.0
        %1275 = vmatprep.subr.mxu0 0.0
        %1276 = vmatpush2.msra.mxu0 0.0
        %1277 = vmatprep.subr.mxu0 0.0
        %1278 = vmatpush2.msra.mxu0 0.0
        %1279 = vmatprep.subr.mxu0 0.0
        %1280 = vmatpush2.msra.mxu0 0.0
        %1281 = vmatprep.subr.mxu0 0.0
        %1282 = vmatpush2.msra.mxu0 0.0
        %1283 = vmatprep.subr.mxu0 0.0
        %1284 = vmatpush2.msra.mxu0 0.0
        %1285 = vmatprep.subr.mxu0 0.0
        %1286 = vmatpush2.msra.mxu0 0.0
        %1287 = vmatprep.subr.mxu0 0.0
        %1288 = vmatpush2.msra.mxu0 0.0
        %1289 = vmatprep.subr.mxu0 0.0
        %1290 = vmatpush2.msra.mxu0 0.0
        %1291 = vmatprep.subr.mxu0 0.0
        %1292 = vmatpush2.msra.mxu0 0.0
        %1293 = vmatprep.mubr.f32.mxu0 0.0
        %1294 = vmatmul.mubr.f32.gmra.mxu0 %v1148
        %v1295 = vpop.f32.mrf.mxu0
        %v1296 = vadd.f32 0.0, %v1295
        %v1297 = vpop.f32.mrf.mxu0
        %v1298 = vadd.f32 0.0, %v1297
        %1299 = vdwg.mxu0
        %v1300 = vadd.f32 %v1154, %v1225
        %v1301 = vadd.f32 %v1155, %v1227
        %v1302 = vadd.f32 %v1156, %v1296
        %v1303 = vadd.f32 %v1157, %v1298
        %v1304 = vmul.f32 %v1300, 0.5
        %v1305 = vtanh.pop %v1304
        %v1306 = vadd.f32 %v1305, 1.0
        %v1307 = vmul.f32 %v1306, 0.5
        %v1308 = vmul.f32 %v1301, 0.5
        %v1309 = vtanh.pop %v1308
        %v1310 = vadd.f32 %v1309, 1.0
        %v1311 = vmul.f32 %v1310, 0.5
        %v1312 = vtanh.pop %v1302
        %v1313 = vmul.f32 %v1303, 0.5
        %v1314 = vtanh.pop %v1313
        %v1315 = vadd.f32 %v1314, 1.0
        %v1316 = vmul.f32 %v1315, 0.5
        %v1317 = vmul.f32 %v1311, %v1149
        %v1318 = vmul.f32 %v1307, %v1312
        %v1319 = vadd.f32 %v1317, %v1318
        %v1320 = vtanh.pop %v1319
        %v1321 = vmul.f32 %v1316, %v1320
        %v1322 = vstv %s1145
        %vm1323 = vcmp.gt.s32.totalorder %v1144, %v1322
        %v1324 = vsel %vm1323, 1, 0
        %1325 = vset.pattern.permute.xlu0 0
        %1326 = vperm.xlu0 %1325, %v1324
        %v1327 = vpop.permute.xlu0 %1326
        %vm1328 = vcmp.eq.s32.totalorder %v1327, 1
        %v1329 = vsel %vm1328, %v1321, 0.0
        %1330 = vst [vmem:[%s419] sm:$0xff] %v1329
        %v1331 = vsel %vm1328, %v1321, %v1148
        %v1332 = vsel %vm1328, %v1319, %v1149
        %s1333 = scalar_lea.vmem [#allocation3], 96
        %v1334 = vld [vmem:[%s1333] sm:$0xff]
        %v1335 = vld [vmem:[%s1333 + $0x8] sm:$0xff]
        %v1336 = vld [vmem:[%s1333 + $0x10] sm:$0xff]
        %v1337 = vld [vmem:[%s1333 + $0x18] sm:$0xff]
        %1338 = vmatprep.subr.mxu0 %v1141
        %1339 = vmatpush1.msra.mxu0 %v1140
        %1340 = vmatprep.subr.mxu0 %v1137
        %1341 = vmatpush1.msra.mxu0 %v1136
        %1342 = vmatprep.subr.mxu0 %v1133
        %1343 = vmatpush1.msra.mxu0 %v1132
        %1344 = vmatprep.subr.mxu0 %v1129
        %1345 = vmatpush1.msra.mxu0 %v1128
        %1346 = vmatprep.subr.mxu0 %v1125
        %1347 = vmatpush1.msra.mxu0 %v1124
        %1348 = vmatprep.subr.mxu0 %v1121
        %1349 = vmatpush1.msra.mxu0 %v1120
        %1350 = vmatprep.subr.mxu0 %v1117
        %1351 = vmatpush1.msra.mxu0 %v1116
        %1352 = vmatprep.subr.mxu0 %v1113
        %1353 = vmatpush1.msra.mxu0 %v1112
        %1354 = vmatprep.subr.mxu0 %v1109
        %1355 = vmatpush1.msra.mxu0 %v1108
        %1356 = vmatprep.subr.mxu0 %v1105
        %1357 = vmatpush1.msra.mxu0 %v1104
        %1358 = vmatprep.subr.mxu0 %v1101
        %1359 = vmatpush1.msra.mxu0 %v1100
        %1360 = vmatprep.subr.mxu0 %v1097
        %1361 = vmatpush1.msra.mxu0 %v1096
        %1362 = vmatprep.subr.mxu0 %v1093
        %1363 = vmatpush1.msra.mxu0 %v1092
        %1364 = vmatprep.subr.mxu0 %v1089
        %1365 = vmatpush1.msra.mxu0 %v1088
        %1366 = vmatprep.subr.mxu0 %v1085
        %1367 = vmatpush1.msra.mxu0 %v1084
        %1368 = vmatprep.subr.mxu0 %v1081
        %1369 = vmatpush1.msra.mxu0 %v1080
        %1370 = vmatprep.subr.mxu0 0.0
        %1371 = vmatpush2.msra.mxu0 0.0
        %1372 = vmatprep.subr.mxu0 0.0
        %1373 = vmatpush2.msra.mxu0 0.0
        %1374 = vmatprep.subr.mxu0 0.0
        %1375 = vmatpush2.msra.mxu0 0.0
        %1376 = vmatprep.subr.mxu0 0.0
        %1377 = vmatpush2.msra.mxu0 0.0
        %1378 = vmatprep.subr.mxu0 0.0
        %1379 = vmatpush2.msra.mxu0 0.0
        %1380 = vmatprep.subr.mxu0 0.0
        %1381 = vmatpush2.msra.mxu0 0.0
        %1382 = vmatprep.subr.mxu0 0.0
        %1383 = vmatpush2.msra.mxu0 0.0
        %1384 = vmatprep.subr.mxu0 0.0
        %1385 = vmatpush2.msra.mxu0 0.0
        %1386 = vmatprep.subr.mxu0 0.0
        %1387 = vmatpush2.msra.mxu0 0.0
        %1388 = vmatprep.subr.mxu0 0.0
        %1389 = vmatpush2.msra.mxu0 0.0
        %1390 = vmatprep.subr.mxu0 0.0
        %1391 = vmatpush2.msra.mxu0 0.0
        %1392 = vmatprep.subr.mxu0 0.0
        %1393 = vmatpush2.msra.mxu0 0.0
        %1394 = vmatprep.subr.mxu0 0.0
        %1395 = vmatpush2.msra.mxu0 0.0
        %1396 = vmatprep.subr.mxu0 0.0
        %1397 = vmatpush2.msra.mxu0 0.0
        %1398 = vmatprep.subr.mxu0 0.0
        %1399 = vmatpush2.msra.mxu0 0.0
        %1400 = vmatprep.subr.mxu0 0.0
        %1401 = vmatpush2.msra.mxu0 0.0
        %1402 = vmatprep.mubr.f32.mxu0 0.0
        %1403 = vmatmul.mubr.f32.gmra.mxu0 %v1151
        %v1404 = vpop.f32.mrf.mxu0
        %v1405 = vadd.f32 0.0, %v1404
        %v1406 = vpop.f32.mrf.mxu0
        %v1407 = vadd.f32 0.0, %v1406
        %1408 = vdwg.mxu0
        %1409 = vmatprep.subr.mxu0 %v1143
        %1410 = vmatpush1.msra.mxu0 %v1142
        %1411 = vmatprep.subr.mxu0 %v1139
        %1412 = vmatpush1.msra.mxu0 %v1138
        %1413 = vmatprep.subr.mxu0 %v1135
        %1414 = vmatpush1.msra.mxu0 %v1134
        %1415 = vmatprep.subr.mxu0 %v1131
        %1416 = vmatpush1.msra.mxu0 %v1130
        %1417 = vmatprep.subr.mxu0 %v1127
        %1418 = vmatpush1.msra.mxu0 %v1126
        %1419 = vmatprep.subr.mxu0 %v1123
        %1420 = vmatpush1.msra.mxu0 %v1122
        %1421 = vmatprep.subr.mxu0 %v1119
        %1422 = vmatpush1.msra.mxu0 %v1118
        %1423 = vmatprep.subr.mxu0 %v1115
        %1424 = vmatpush1.msra.mxu0 %v1114
        %1425 = vmatprep.subr.mxu0 %v1111
        %1426 = vmatpush1.msra.mxu0 %v1110
        %1427 = vmatprep.subr.mxu0 %v1107
        %1428 = vmatpush1.msra.mxu0 %v1106
        %1429 = vmatprep.subr.mxu0 %v1103
        %1430 = vmatpush1.msra.mxu0 %v1102
        %1431 = vmatprep.subr.mxu0 %v1099
        %1432 = vmatpush1.msra.mxu0 %v1098
        %1433 = vmatprep.subr.mxu0 %v1095
        %1434 = vmatpush1.msra.mxu0 %v1094
        %1435 = vmatprep.subr.mxu0 %v1091
        %1436 = vmatpush1.msra.mxu0 %v1090
        %1437 = vmatprep.subr.mxu0 %v1087
        %1438 = vmatpush1.msra.mxu0 %v1086
        %1439 = vmatprep.subr.mxu0 %v1083
        %1440 = vmatpush1.msra.mxu0 %v1082
        %1441 = vmatprep.subr.mxu0 0.0
        %1442 = vmatpush2.msra.mxu0 0.0
        %1443 = vmatprep.subr.mxu0 0.0
        %1444 = vmatpush2.msra.mxu0 0.0
        %1445 = vmatprep.subr.mxu0 0.0
        %1446 = vmatpush2.msra.mxu0 0.0
        %1447 = vmatprep.subr.mxu0 0.0
        %1448 = vmatpush2.msra.mxu0 0.0
        %1449 = vmatprep.subr.mxu0 0.0
        %1450 = vmatpush2.msra.mxu0 0.0
        %1451 = vmatprep.subr.mxu0 0.0
        %1452 = vmatpush2.msra.mxu0 0.0
        %1453 = vmatprep.subr.mxu0 0.0
        %1454 = vmatpush2.msra.mxu0 0.0
        %1455 = vmatprep.subr.mxu0 0.0
        %1456 = vmatpush2.msra.mxu0 0.0
        %1457 = vmatprep.subr.mxu0 0.0
        %1458 = vmatpush2.msra.mxu0 0.0
        %1459 = vmatprep.subr.mxu0 0.0
        %1460 = vmatpush2.msra.mxu0 0.0
        %1461 = vmatprep.subr.mxu0 0.0
        %1462 = vmatpush2.msra.mxu0 0.0
        %1463 = vmatprep.subr.mxu0 0.0
        %1464 = vmatpush2.msra.mxu0 0.0
        %1465 = vmatprep.subr.mxu0 0.0
        %1466 = vmatpush2.msra.mxu0 0.0
        %1467 = vmatprep.subr.mxu0 0.0
        %1468 = vmatpush2.msra.mxu0 0.0
        %1469 = vmatprep.subr.mxu0 0.0
        %1470 = vmatpush2.msra.mxu0 0.0
        %1471 = vmatprep.subr.mxu0 0.0
        %1472 = vmatpush2.msra.mxu0 0.0
        %1473 = vmatprep.mubr.f32.mxu0 0.0
        %1474 = vmatmul.mubr.f32.gmra.mxu0 %v1151
        %v1475 = vpop.f32.mrf.mxu0
        %v1476 = vadd.f32 0.0, %v1475
        %v1477 = vpop.f32.mrf.mxu0
        %v1478 = vadd.f32 0.0, %v1477
        %1479 = vdwg.mxu0
        %v1480 = vadd.f32 %v1334, %v1405
        %v1481 = vadd.f32 %v1335, %v1407
        %v1482 = vadd.f32 %v1336, %v1476
        %v1483 = vadd.f32 %v1337, %v1478
        %v1484 = vmul.f32 %v1480, 0.5
        %v1485 = vtanh.pop %v1484
        %v1486 = vadd.f32 %v1485, 1.0
        %v1487 = vmul.f32 %v1486, 0.5
        %v1488 = vmul.f32 %v1481, 0.5
        %v1489 = vtanh.pop %v1488
        %v1490 = vadd.f32 %v1489, 1.0
        %v1491 = vmul.f32 %v1490, 0.5
        %v1492 = vtanh.pop %v1482
        %v1493 = vmul.f32 %v1483, 0.5
        %v1494 = vtanh.pop %v1493
        %v1495 = vadd.f32 %v1494, 1.0
        %v1496 = vmul.f32 %v1495, 0.5
        %v1497 = vmul.f32 %v1491, %v1153
        %v1498 = vmul.f32 %v1487, %v1492
        %v1499 = vadd.f32 %v1497, %v1498
        %v1500 = vtanh.pop %v1499
        %v1501 = vmul.f32 %v1496, %v1500
        %s1502 = sadd.s32 %s1147, 3
        %v1503 = vstv %s1502
        %vm1504 = vcmp.gt.s32.totalorder %v1144, %v1503
        %v1505 = vsel %vm1504, 1, 0
        %1506 = vset.pattern.permute.xlu0 0
        %1507 = vperm.xlu0 %1506, %v1505
        %v1508 = vpop.permute.xlu0 %1507
        %vm1509 = vcmp.eq.s32.totalorder %v1508, 1
        %v1510 = vsel %vm1509, %v1501, 0.0
        %s1511 = scalar_lea.vmem %s426, 24 [#allocation15]
        %1512 = vst [vmem:[%s1511] sm:$0xff] %v1510
        %v1513 = vsel %vm1509, %v1501, %v1151
        %v1514 = vsel %vm1509, %v1499, %v1153
        %s1515 = scalar_lea.vmem [#allocation2], 32
        %v1516 = vld [vmem:[%s1515] sm:$0xff]
        %v1517 = vld [vmem:[%s1515 + $0x8] sm:$0xff]
        %v1518 = vld [vmem:[%s1515 + $0x10] sm:$0xff]
        %v1519 = vld [vmem:[%s1515 + $0x18] sm:$0xff]
        %1520 = vmatprep.subr.mxu0 %v1076
        %1521 = vmatpush1.msra.mxu0 %v1075
        %1522 = vmatprep.subr.mxu0 %v1072
        %1523 = vmatpush1.msra.mxu0 %v1071
        %1524 = vmatprep.subr.mxu0 %v1068
        %1525 = vmatpush1.msra.mxu0 %v1067
        %1526 = vmatprep.subr.mxu0 %v1064
        %1527 = vmatpush1.msra.mxu0 %v1063
        %1528 = vmatprep.subr.mxu0 %v1060
        %1529 = vmatpush1.msra.mxu0 %v1059
        %1530 = vmatprep.subr.mxu0 %v1056
        %1531 = vmatpush1.msra.mxu0 %v1055
        %1532 = vmatprep.subr.mxu0 %v1052
        %1533 = vmatpush1.msra.mxu0 %v1051
        %1534 = vmatprep.subr.mxu0 %v1048
        %1535 = vmatpush1.msra.mxu0 %v1047
        %1536 = vmatprep.subr.mxu0 %v1044
        %1537 = vmatpush1.msra.mxu0 %v1043
        %1538 = vmatprep.subr.mxu0 %v1040
        %1539 = vmatpush1.msra.mxu0 %v1039
        %1540 = vmatprep.subr.mxu0 %v1036
        %1541 = vmatpush1.msra.mxu0 %v1035
        %1542 = vmatprep.subr.mxu0 %v1032
        %1543 = vmatpush1.msra.mxu0 %v1031
        %1544 = vmatprep.subr.mxu0 %v1028
        %1545 = vmatpush1.msra.mxu0 %v1027
        %1546 = vmatprep.subr.mxu0 %v1024
        %1547 = vmatpush1.msra.mxu0 %v1023
        %1548 = vmatprep.subr.mxu0 %v1020
        %1549 = vmatpush1.msra.mxu0 %v1019
        %1550 = vmatprep.subr.mxu0 %v1016
        %1551 = vmatpush1.msra.mxu0 %v1015
        %1552 = vmatprep.subr.mxu0 0.0
        %1553 = vmatpush2.msra.mxu0 0.0
        %1554 = vmatprep.subr.mxu0 0.0
        %1555 = vmatpush2.msra.mxu0 0.0
        %1556 = vmatprep.subr.mxu0 0.0
        %1557 = vmatpush2.msra.mxu0 0.0
        %1558 = vmatprep.subr.mxu0 0.0
        %1559 = vmatpush2.msra.mxu0 0.0
        %1560 = vmatprep.subr.mxu0 0.0
        %1561 = vmatpush2.msra.mxu0 0.0
        %1562 = vmatprep.subr.mxu0 0.0
        %1563 = vmatpush2.msra.mxu0 0.0
        %1564 = vmatprep.subr.mxu0 0.0
        %1565 = vmatpush2.msra.mxu0 0.0
        %1566 = vmatprep.subr.mxu0 0.0
        %1567 = vmatpush2.msra.mxu0 0.0
        %1568 = vmatprep.subr.mxu0 0.0
        %1569 = vmatpush2.msra.mxu0 0.0
        %1570 = vmatprep.subr.mxu0 0.0
        %1571 = vmatpush2.msra.mxu0 0.0
        %1572 = vmatprep.subr.mxu0 0.0
        %1573 = vmatpush2.msra.mxu0 0.0
        %1574 = vmatprep.subr.mxu0 0.0
        %1575 = vmatpush2.msra.mxu0 0.0
        %1576 = vmatprep.subr.mxu0 0.0
        %1577 = vmatpush2.msra.mxu0 0.0
        %1578 = vmatprep.subr.mxu0 0.0
        %1579 = vmatpush2.msra.mxu0 0.0
        %1580 = vmatprep.subr.mxu0 0.0
        %1581 = vmatpush2.msra.mxu0 0.0
        %1582 = vmatprep.subr.mxu0 0.0
        %1583 = vmatpush2.msra.mxu0 0.0
        %1584 = vmatprep.mubr.f32.mxu0 0.0
        %1585 = vmatmul.mubr.f32.gmra.mxu0 %v1331
        %v1586 = vpop.f32.mrf.mxu0
        %v1587 = vadd.f32 0.0, %v1586
        %v1588 = vpop.f32.mrf.mxu0
        %v1589 = vadd.f32 0.0, %v1588
        %1590 = vdwg.mxu0
        %1591 = vmatprep.subr.mxu0 %v1078
        %1592 = vmatpush1.msra.mxu0 %v1077
        %1593 = vmatprep.subr.mxu0 %v1074
        %1594 = vmatpush1.msra.mxu0 %v1073
        %1595 = vmatprep.subr.mxu0 %v1070
        %1596 = vmatpush1.msra.mxu0 %v1069
        %1597 = vmatprep.subr.mxu0 %v1066
        %1598 = vmatpush1.msra.mxu0 %v1065
        %1599 = vmatprep.subr.mxu0 %v1062
        %1600 = vmatpush1.msra.mxu0 %v1061
        %1601 = vmatprep.subr.mxu0 %v1058
        %1602 = vmatpush1.msra.mxu0 %v1057
        %1603 = vmatprep.subr.mxu0 %v1054
        %1604 = vmatpush1.msra.mxu0 %v1053
        %1605 = vmatprep.subr.mxu0 %v1050
        %1606 = vmatpush1.msra.mxu0 %v1049
        %1607 = vmatprep.subr.mxu0 %v1046
        %1608 = vmatpush1.msra.mxu0 %v1045
        %1609 = vmatprep.subr.mxu0 %v1042
        %1610 = vmatpush1.msra.mxu0 %v1041
        %1611 = vmatprep.subr.mxu0 %v1038
        %1612 = vmatpush1.msra.mxu0 %v1037
        %1613 = vmatprep.subr.mxu0 %v1034
        %1614 = vmatpush1.msra.mxu0 %v1033
        %1615 = vmatprep.subr.mxu0 %v1030
        %1616 = vmatpush1.msra.mxu0 %v1029
        %1617 = vmatprep.subr.mxu0 %v1026
        %1618 = vmatpush1.msra.mxu0 %v1025
        %1619 = vmatprep.subr.mxu0 %v1022
        %1620 = vmatpush1.msra.mxu0 %v1021
        %1621 = vmatprep.subr.mxu0 %v1018
        %1622 = vmatpush1.msra.mxu0 %v1017
        %1623 = vmatprep.subr.mxu0 0.0
        %1624 = vmatpush2.msra.mxu0 0.0
        %1625 = vmatprep.subr.mxu0 0.0
        %1626 = vmatpush2.msra.mxu0 0.0
        %1627 = vmatprep.subr.mxu0 0.0
        %1628 = vmatpush2.msra.mxu0 0.0
        %1629 = vmatprep.subr.mxu0 0.0
        %1630 = vmatpush2.msra.mxu0 0.0
        %1631 = vmatprep.subr.mxu0 0.0
        %1632 = vmatpush2.msra.mxu0 0.0
        %1633 = vmatprep.subr.mxu0 0.0
        %1634 = vmatpush2.msra.mxu0 0.0
        %1635 = vmatprep.subr.mxu0 0.0
        %1636 = vmatpush2.msra.mxu0 0.0
        %1637 = vmatprep.subr.mxu0 0.0
        %1638 = vmatpush2.msra.mxu0 0.0
        %1639 = vmatprep.subr.mxu0 0.0
        %1640 = vmatpush2.msra.mxu0 0.0
        %1641 = vmatprep.subr.mxu0 0.0
        %1642 = vmatpush2.msra.mxu0 0.0
        %1643 = vmatprep.subr.mxu0 0.0
        %1644 = vmatpush2.msra.mxu0 0.0
        %1645 = vmatprep.subr.mxu0 0.0
        %1646 = vmatpush2.msra.mxu0 0.0
        %1647 = vmatprep.subr.mxu0 0.0
        %1648 = vmatpush2.msra.mxu0 0.0
        %1649 = vmatprep.subr.mxu0 0.0
        %1650 = vmatpush2.msra.mxu0 0.0
        %1651 = vmatprep.subr.mxu0 0.0
        %1652 = vmatpush2.msra.mxu0 0.0
        %1653 = vmatprep.subr.mxu0 0.0
        %1654 = vmatpush2.msra.mxu0 0.0
        %1655 = vmatprep.mubr.f32.mxu0 0.0
        %1656 = vmatmul.mubr.f32.gmra.mxu0 %v1331
        %v1657 = vpop.f32.mrf.mxu0
        %v1658 = vadd.f32 0.0, %v1657
        %v1659 = vpop.f32.mrf.mxu0
        %v1660 = vadd.f32 0.0, %v1659
        %1661 = vdwg.mxu0
        %v1662 = vadd.f32 %v1516, %v1587
        %v1663 = vadd.f32 %v1517, %v1589
        %v1664 = vadd.f32 %v1518, %v1658
        %v1665 = vadd.f32 %v1519, %v1660
        %v1666 = vmul.f32 %v1662, 0.5
        %v1667 = vtanh.pop %v1666
        %v1668 = vadd.f32 %v1667, 1.0
        %v1669 = vmul.f32 %v1668, 0.5
        %v1670 = vmul.f32 %v1663, 0.5
        %v1671 = vtanh.pop %v1670
        %v1672 = vadd.f32 %v1671, 1.0
        %v1673 = vmul.f32 %v1672, 0.5
        %v1674 = vtanh.pop %v1664
        %v1675 = vmul.f32 %v1665, 0.5
        %v1676 = vtanh.pop %v1675
        %v1677 = vadd.f32 %v1676, 1.0
        %v1678 = vmul.f32 %v1677, 0.5
        %v1679 = vmul.f32 %v1673, %v1332
        %v1680 = vmul.f32 %v1669, %v1674
        %v1681 = vadd.f32 %v1679, %v1680
        %v1682 = vtanh.pop %v1681
        %v1683 = vmul.f32 %v1678, %v1682
        %s1684 = sadd.s32 %s1145, 1
        %v1685 = vstv %s1684
        %vm1686 = vcmp.gt.s32.totalorder %v1144, %v1685
        %v1687 = vsel %vm1686, 1, 0
        %1688 = vset.pattern.permute.xlu0 0
        %1689 = vperm.xlu0 %1688, %v1687
        %v1690 = vpop.permute.xlu0 %1689
        %vm1691 = vcmp.eq.s32.totalorder %v1690, 1
        %v1692 = vsel %vm1691, %v1683, 0.0
        %s1693 = scalar_lea.vmem %s419, 8 [#allocation14]
        %1694 = vst [vmem:[%s1693] sm:$0xff] %v1692
        %v1695 = vsel %vm1691, %v1683, %v1331
        %v1696 = vsel %vm1691, %v1681, %v1332
        %s1697 = scalar_lea.vmem [#allocation3], 64
        %v1698 = vld [vmem:[%s1697] sm:$0xff]
        %v1699 = vld [vmem:[%s1697 + $0x8] sm:$0xff]
        %v1700 = vld [vmem:[%s1697 + $0x10] sm:$0xff]
        %v1701 = vld [vmem:[%s1697 + $0x18] sm:$0xff]
        %1702 = vmatprep.subr.mxu0 %v1141
        %1703 = vmatpush1.msra.mxu0 %v1140
        %1704 = vmatprep.subr.mxu0 %v1137
        %1705 = vmatpush1.msra.mxu0 %v1136
        %1706 = vmatprep.subr.mxu0 %v1133
        %1707 = vmatpush1.msra.mxu0 %v1132
        %1708 = vmatprep.subr.mxu0 %v1129
        %1709 = vmatpush1.msra.mxu0 %v1128
        %1710 = vmatprep.subr.mxu0 %v1125
        %1711 = vmatpush1.msra.mxu0 %v1124
        %1712 = vmatprep.subr.mxu0 %v1121
        %1713 = vmatpush1.msra.mxu0 %v1120
        %1714 = vmatprep.subr.mxu0 %v1117
        %1715 = vmatpush1.msra.mxu0 %v1116
        %1716 = vmatprep.subr.mxu0 %v1113
        %1717 = vmatpush1.msra.mxu0 %v1112
        %1718 = vmatprep.subr.mxu0 %v1109
        %1719 = vmatpush1.msra.mxu0 %v1108
        %1720 = vmatprep.subr.mxu0 %v1105
        %1721 = vmatpush1.msra.mxu0 %v1104
        %1722 = vmatprep.subr.mxu0 %v1101
        %1723 = vmatpush1.msra.mxu0 %v1100
        %1724 = vmatprep.subr.mxu0 %v1097
        %1725 = vmatpush1.msra.mxu0 %v1096
        %1726 = vmatprep.subr.mxu0 %v1093
        %1727 = vmatpush1.msra.mxu0 %v1092
        %1728 = vmatprep.subr.mxu0 %v1089
        %1729 = vmatpush1.msra.mxu0 %v1088
        %1730 = vmatprep.subr.mxu0 %v1085
        %1731 = vmatpush1.msra.mxu0 %v1084
        %1732 = vmatprep.subr.mxu0 %v1081
        %1733 = vmatpush1.msra.mxu0 %v1080
        %1734 = vmatprep.subr.mxu0 0.0
        %1735 = vmatpush2.msra.mxu0 0.0
        %1736 = vmatprep.subr.mxu0 0.0
        %1737 = vmatpush2.msra.mxu0 0.0
        %1738 = vmatprep.subr.mxu0 0.0
        %1739 = vmatpush2.msra.mxu0 0.0
        %1740 = vmatprep.subr.mxu0 0.0
        %1741 = vmatpush2.msra.mxu0 0.0
        %1742 = vmatprep.subr.mxu0 0.0
        %1743 = vmatpush2.msra.mxu0 0.0
        %1744 = vmatprep.subr.mxu0 0.0
        %1745 = vmatpush2.msra.mxu0 0.0
        %1746 = vmatprep.subr.mxu0 0.0
        %1747 = vmatpush2.msra.mxu0 0.0
        %1748 = vmatprep.subr.mxu0 0.0
        %1749 = vmatpush2.msra.mxu0 0.0
        %1750 = vmatprep.subr.mxu0 0.0
        %1751 = vmatpush2.msra.mxu0 0.0
        %1752 = vmatprep.subr.mxu0 0.0
        %1753 = vmatpush2.msra.mxu0 0.0
        %1754 = vmatprep.subr.mxu0 0.0
        %1755 = vmatpush2.msra.mxu0 0.0
        %1756 = vmatprep.subr.mxu0 0.0
        %1757 = vmatpush2.msra.mxu0 0.0
        %1758 = vmatprep.subr.mxu0 0.0
        %1759 = vmatpush2.msra.mxu0 0.0
        %1760 = vmatprep.subr.mxu0 0.0
        %1761 = vmatpush2.msra.mxu0 0.0
        %1762 = vmatprep.subr.mxu0 0.0
        %1763 = vmatpush2.msra.mxu0 0.0
        %1764 = vmatprep.subr.mxu0 0.0
        %1765 = vmatpush2.msra.mxu0 0.0
        %1766 = vmatprep.mubr.f32.mxu0 0.0
        %1767 = vmatmul.mubr.f32.gmra.mxu0 %v1513
        %v1768 = vpop.f32.mrf.mxu0
        %v1769 = vadd.f32 0.0, %v1768
        %v1770 = vpop.f32.mrf.mxu0
        %v1771 = vadd.f32 0.0, %v1770
        %1772 = vdwg.mxu0
        %1773 = vmatprep.subr.mxu0 %v1143
        %1774 = vmatpush1.msra.mxu0 %v1142
        %1775 = vmatprep.subr.mxu0 %v1139
        %1776 = vmatpush1.msra.mxu0 %v1138
        %1777 = vmatprep.subr.mxu0 %v1135
        %1778 = vmatpush1.msra.mxu0 %v1134
        %1779 = vmatprep.subr.mxu0 %v1131
        %1780 = vmatpush1.msra.mxu0 %v1130
        %1781 = vmatprep.subr.mxu0 %v1127
        %1782 = vmatpush1.msra.mxu0 %v1126
        %1783 = vmatprep.subr.mxu0 %v1123
        %1784 = vmatpush1.msra.mxu0 %v1122
        %1785 = vmatprep.subr.mxu0 %v1119
        %1786 = vmatpush1.msra.mxu0 %v1118
        %1787 = vmatprep.subr.mxu0 %v1115
        %1788 = vmatpush1.msra.mxu0 %v1114
        %1789 = vmatprep.subr.mxu0 %v1111
        %1790 = vmatpush1.msra.mxu0 %v1110
        %1791 = vmatprep.subr.mxu0 %v1107
        %1792 = vmatpush1.msra.mxu0 %v1106
        %1793 = vmatprep.subr.mxu0 %v1103
        %1794 = vmatpush1.msra.mxu0 %v1102
        %1795 = vmatprep.subr.mxu0 %v1099
        %1796 = vmatpush1.msra.mxu0 %v1098
        %1797 = vmatprep.subr.mxu0 %v1095
        %1798 = vmatpush1.msra.mxu0 %v1094
        %1799 = vmatprep.subr.mxu0 %v1091
        %1800 = vmatpush1.msra.mxu0 %v1090
        %1801 = vmatprep.subr.mxu0 %v1087
        %1802 = vmatpush1.msra.mxu0 %v1086
        %1803 = vmatprep.subr.mxu0 %v1083
        %1804 = vmatpush1.msra.mxu0 %v1082
        %1805 = vmatprep.subr.mxu0 0.0
        %1806 = vmatpush2.msra.mxu0 0.0
        %1807 = vmatprep.subr.mxu0 0.0
        %1808 = vmatpush2.msra.mxu0 0.0
        %1809 = vmatprep.subr.mxu0 0.0
        %1810 = vmatpush2.msra.mxu0 0.0
        %1811 = vmatprep.subr.mxu0 0.0
        %1812 = vmatpush2.msra.mxu0 0.0
        %1813 = vmatprep.subr.mxu0 0.0
        %1814 = vmatpush2.msra.mxu0 0.0
        %1815 = vmatprep.subr.mxu0 0.0
        %1816 = vmatpush2.msra.mxu0 0.0
        %1817 = vmatprep.subr.mxu0 0.0
        %1818 = vmatpush2.msra.mxu0 0.0
        %1819 = vmatprep.subr.mxu0 0.0
        %1820 = vmatpush2.msra.mxu0 0.0
        %1821 = vmatprep.subr.mxu0 0.0
        %1822 = vmatpush2.msra.mxu0 0.0
        %1823 = vmatprep.subr.mxu0 0.0
        %1824 = vmatpush2.msra.mxu0 0.0
        %1825 = vmatprep.subr.mxu0 0.0
        %1826 = vmatpush2.msra.mxu0 0.0
        %1827 = vmatprep.subr.mxu0 0.0
        %1828 = vmatpush2.msra.mxu0 0.0
        %1829 = vmatprep.subr.mxu0 0.0
        %1830 = vmatpush2.msra.mxu0 0.0
        %1831 = vmatprep.subr.mxu0 0.0
        %1832 = vmatpush2.msra.mxu0 0.0
        %1833 = vmatprep.subr.mxu0 0.0
        %1834 = vmatpush2.msra.mxu0 0.0
        %1835 = vmatprep.subr.mxu0 0.0
        %1836 = vmatpush2.msra.mxu0 0.0
        %1837 = vmatprep.mubr.f32.mxu0 0.0
        %1838 = vmatmul.mubr.f32.gmra.mxu0 %v1513
        %v1839 = vpop.f32.mrf.mxu0
        %v1840 = vadd.f32 0.0, %v1839
        %v1841 = vpop.f32.mrf.mxu0
        %v1842 = vadd.f32 0.0, %v1841
        %1843 = vdwg.mxu0
        %v1844 = vadd.f32 %v1698, %v1769
        %v1845 = vadd.f32 %v1699, %v1771
        %v1846 = vadd.f32 %v1700, %v1840
        %v1847 = vadd.f32 %v1701, %v1842
        %v1848 = vmul.f32 %v1844, 0.5
        %v1849 = vtanh.pop %v1848
        %v1850 = vadd.f32 %v1849, 1.0
        %v1851 = vmul.f32 %v1850, 0.5
        %v1852 = vmul.f32 %v1845, 0.5
        %v1853 = vtanh.pop %v1852
        %v1854 = vadd.f32 %v1853, 1.0
        %v1855 = vmul.f32 %v1854, 0.5
        %v1856 = vtanh.pop %v1846
        %v1857 = vmul.f32 %v1847, 0.5
        %v1858 = vtanh.pop %v1857
        %v1859 = vadd.f32 %v1858, 1.0
        %v1860 = vmul.f32 %v1859, 0.5
        %v1861 = vmul.f32 %v1855, %v1514
        %v1862 = vmul.f32 %v1851, %v1856
        %v1863 = vadd.f32 %v1861, %v1862
        %v1864 = vtanh.pop %v1863
        %v1865 = vmul.f32 %v1860, %v1864
        %s1866 = sadd.s32 %s1147, 2
        %v1867 = vstv %s1866
        %vm1868 = vcmp.gt.s32.totalorder %v1144, %v1867
        %v1869 = vsel %vm1868, 1, 0
        %1870 = vset.pattern.permute.xlu0 0
        %1871 = vperm.xlu0 %1870, %v1869
        %v1872 = vpop.permute.xlu0 %1871
        %vm1873 = vcmp.eq.s32.totalorder %v1872, 1
        %v1874 = vsel %vm1873, %v1865, 0.0
        %s1875 = scalar_lea.vmem %s426, 16 [#allocation15]
        %1876 = vst [vmem:[%s1875] sm:$0xff] %v1874
        %v1877 = vsel %vm1873, %v1865, %v1513
        %v1878 = vsel %vm1873, %v1863, %v1514
        %s1879 = scalar_lea.vmem [#allocation2], 64
        %v1880 = vld [vmem:[%s1879] sm:$0xff]
        %v1881 = vld [vmem:[%s1879 + $0x8] sm:$0xff]
        %v1882 = vld [vmem:[%s1879 + $0x10] sm:$0xff]
        %v1883 = vld [vmem:[%s1879 + $0x18] sm:$0xff]
        %1884 = vmatprep.subr.mxu0 %v1076
        %1885 = vmatpush1.msra.mxu0 %v1075
        %1886 = vmatprep.subr.mxu0 %v1072
        %1887 = vmatpush1.msra.mxu0 %v1071
        %1888 = vmatprep.subr.mxu0 %v1068
        %1889 = vmatpush1.msra.mxu0 %v1067
        %1890 = vmatprep.subr.mxu0 %v1064
        %1891 = vmatpush1.msra.mxu0 %v1063
        %1892 = vmatprep.subr.mxu0 %v1060
        %1893 = vmatpush1.msra.mxu0 %v1059
        %1894 = vmatprep.subr.mxu0 %v1056
        %1895 = vmatpush1.msra.mxu0 %v1055
        %1896 = vmatprep.subr.mxu0 %v1052
        %1897 = vmatpush1.msra.mxu0 %v1051
        %1898 = vmatprep.subr.mxu0 %v1048
        %1899 = vmatpush1.msra.mxu0 %v1047
        %1900 = vmatprep.subr.mxu0 %v1044
        %1901 = vmatpush1.msra.mxu0 %v1043
        %1902 = vmatprep.subr.mxu0 %v1040
        %1903 = vmatpush1.msra.mxu0 %v1039
        %1904 = vmatprep.subr.mxu0 %v1036
        %1905 = vmatpush1.msra.mxu0 %v1035
        %1906 = vmatprep.subr.mxu0 %v1032
        %1907 = vmatpush1.msra.mxu0 %v1031
        %1908 = vmatprep.subr.mxu0 %v1028
        %1909 = vmatpush1.msra.mxu0 %v1027
        %1910 = vmatprep.subr.mxu0 %v1024
        %1911 = vmatpush1.msra.mxu0 %v1023
        %1912 = vmatprep.subr.mxu0 %v1020
        %1913 = vmatpush1.msra.mxu0 %v1019
        %1914 = vmatprep.subr.mxu0 %v1016
        %1915 = vmatpush1.msra.mxu0 %v1015
        %1916 = vmatprep.subr.mxu0 0.0
        %1917 = vmatpush2.msra.mxu0 0.0
        %1918 = vmatprep.subr.mxu0 0.0
        %1919 = vmatpush2.msra.mxu0 0.0
        %1920 = vmatprep.subr.mxu0 0.0
        %1921 = vmatpush2.msra.mxu0 0.0
        %1922 = vmatprep.subr.mxu0 0.0
        %1923 = vmatpush2.msra.mxu0 0.0
        %1924 = vmatprep.subr.mxu0 0.0
        %1925 = vmatpush2.msra.mxu0 0.0
        %1926 = vmatprep.subr.mxu0 0.0
        %1927 = vmatpush2.msra.mxu0 0.0
        %1928 = vmatprep.subr.mxu0 0.0
        %1929 = vmatpush2.msra.mxu0 0.0
        %1930 = vmatprep.subr.mxu0 0.0
        %1931 = vmatpush2.msra.mxu0 0.0
        %1932 = vmatprep.subr.mxu0 0.0
        %1933 = vmatpush2.msra.mxu0 0.0
        %1934 = vmatprep.subr.mxu0 0.0
        %1935 = vmatpush2.msra.mxu0 0.0
        %1936 = vmatprep.subr.mxu0 0.0
        %1937 = vmatpush2.msra.mxu0 0.0
        %1938 = vmatprep.subr.mxu0 0.0
        %1939 = vmatpush2.msra.mxu0 0.0
        %1940 = vmatprep.subr.mxu0 0.0
        %1941 = vmatpush2.msra.mxu0 0.0
        %1942 = vmatprep.subr.mxu0 0.0
        %1943 = vmatpush2.msra.mxu0 0.0
        %1944 = vmatprep.subr.mxu0 0.0
        %1945 = vmatpush2.msra.mxu0 0.0
        %1946 = vmatprep.subr.mxu0 0.0
        %1947 = vmatpush2.msra.mxu0 0.0
        %1948 = vmatprep.mubr.f32.mxu0 0.0
        %1949 = vmatmul.mubr.f32.gmra.mxu0 %v1695
        %v1950 = vpop.f32.mrf.mxu0
        %v1951 = vadd.f32 0.0, %v1950
        %v1952 = vpop.f32.mrf.mxu0
        %v1953 = vadd.f32 0.0, %v1952
        %1954 = vdwg.mxu0
        %1955 = vmatprep.subr.mxu0 %v1078
        %1956 = vmatpush1.msra.mxu0 %v1077
        %1957 = vmatprep.subr.mxu0 %v1074
        %1958 = vmatpush1.msra.mxu0 %v1073
        %1959 = vmatprep.subr.mxu0 %v1070
        %1960 = vmatpush1.msra.mxu0 %v1069
        %1961 = vmatprep.subr.mxu0 %v1066
        %1962 = vmatpush1.msra.mxu0 %v1065
        %1963 = vmatprep.subr.mxu0 %v1062
        %1964 = vmatpush1.msra.mxu0 %v1061
        %1965 = vmatprep.subr.mxu0 %v1058
        %1966 = vmatpush1.msra.mxu0 %v1057
        %1967 = vmatprep.subr.mxu0 %v1054
        %1968 = vmatpush1.msra.mxu0 %v1053
        %1969 = vmatprep.subr.mxu0 %v1050
        %1970 = vmatpush1.msra.mxu0 %v1049
        %1971 = vmatprep.subr.mxu0 %v1046
        %1972 = vmatpush1.msra.mxu0 %v1045
        %1973 = vmatprep.subr.mxu0 %v1042
        %1974 = vmatpush1.msra.mxu0 %v1041
        %1975 = vmatprep.subr.mxu0 %v1038
        %1976 = vmatpush1.msra.mxu0 %v1037
        %1977 = vmatprep.subr.mxu0 %v1034
        %1978 = vmatpush1.msra.mxu0 %v1033
        %1979 = vmatprep.subr.mxu0 %v1030
        %1980 = vmatpush1.msra.mxu0 %v1029
        %1981 = vmatprep.subr.mxu0 %v1026
        %1982 = vmatpush1.msra.mxu0 %v1025
        %1983 = vmatprep.subr.mxu0 %v1022
        %1984 = vmatpush1.msra.mxu0 %v1021
        %1985 = vmatprep.subr.mxu0 %v1018
        %1986 = vmatpush1.msra.mxu0 %v1017
        %1987 = vmatprep.subr.mxu0 0.0
        %1988 = vmatpush2.msra.mxu0 0.0
        %1989 = vmatprep.subr.mxu0 0.0
        %1990 = vmatpush2.msra.mxu0 0.0
        %1991 = vmatprep.subr.mxu0 0.0
        %1992 = vmatpush2.msra.mxu0 0.0
        %1993 = vmatprep.subr.mxu0 0.0
        %1994 = vmatpush2.msra.mxu0 0.0
        %1995 = vmatprep.subr.mxu0 0.0
        %1996 = vmatpush2.msra.mxu0 0.0
        %1997 = vmatprep.subr.mxu0 0.0
        %1998 = vmatpush2.msra.mxu0 0.0
        %1999 = vmatprep.subr.mxu0 0.0
        %2000 = vmatpush2.msra.mxu0 0.0
        %2001 = vmatprep.subr.mxu0 0.0
        %2002 = vmatpush2.msra.mxu0 0.0
        %2003 = vmatprep.subr.mxu0 0.0
        %2004 = vmatpush2.msra.mxu0 0.0
        %2005 = vmatprep.subr.mxu0 0.0
        %2006 = vmatpush2.msra.mxu0 0.0
        %2007 = vmatprep.subr.mxu0 0.0
        %2008 = vmatpush2.msra.mxu0 0.0
        %2009 = vmatprep.subr.mxu0 0.0
        %2010 = vmatpush2.msra.mxu0 0.0
        %2011 = vmatprep.subr.mxu0 0.0
        %2012 = vmatpush2.msra.mxu0 0.0
        %2013 = vmatprep.subr.mxu0 0.0
        %2014 = vmatpush2.msra.mxu0 0.0
        %2015 = vmatprep.subr.mxu0 0.0
        %2016 = vmatpush2.msra.mxu0 0.0
        %2017 = vmatprep.subr.mxu0 0.0
        %2018 = vmatpush2.msra.mxu0 0.0
        %2019 = vmatprep.mubr.f32.mxu0 0.0
        %2020 = vmatmul.mubr.f32.gmra.mxu0 %v1695
        %v2021 = vpop.f32.mrf.mxu0
        %v2022 = vadd.f32 0.0, %v2021
        %v2023 = vpop.f32.mrf.mxu0
        %v2024 = vadd.f32 0.0, %v2023
        %2025 = vdwg.mxu0
        %v2026 = vadd.f32 %v1880, %v1951
        %v2027 = vadd.f32 %v1881, %v1953
        %v2028 = vadd.f32 %v1882, %v2022
        %v2029 = vadd.f32 %v1883, %v2024
        %v2030 = vmul.f32 %v2026, 0.5
        %v2031 = vtanh.pop %v2030
        %v2032 = vadd.f32 %v2031, 1.0
        %v2033 = vmul.f32 %v2032, 0.5
        %v2034 = vmul.f32 %v2027, 0.5
        %v2035 = vtanh.pop %v2034
        %v2036 = vadd.f32 %v2035, 1.0
        %v2037 = vmul.f32 %v2036, 0.5
        %v2038 = vtanh.pop %v2028
        %v2039 = vmul.f32 %v2029, 0.5
        %v2040 = vtanh.pop %v2039
        %v2041 = vadd.f32 %v2040, 1.0
        %v2042 = vmul.f32 %v2041, 0.5
        %v2043 = vmul.f32 %v2037, %v1696
        %v2044 = vmul.f32 %v2033, %v2038
        %v2045 = vadd.f32 %v2043, %v2044
        %v2046 = vtanh.pop %v2045
        %v2047 = vmul.f32 %v2042, %v2046
        %s2048 = sadd.s32 %s1145, 2
        %v2049 = vstv %s2048
        %vm2050 = vcmp.gt.s32.totalorder %v1144, %v2049
        %v2051 = vsel %vm2050, 1, 0
        %2052 = vset.pattern.permute.xlu0 0
        %2053 = vperm.xlu0 %2052, %v2051
        %v2054 = vpop.permute.xlu0 %2053
        %vm2055 = vcmp.eq.s32.totalorder %v2054, 1
        %v2056 = vsel %vm2055, %v2047, 0.0
        %s2057 = scalar_lea.vmem %s419, 16 [#allocation14]
        %2058 = vst [vmem:[%s2057] sm:$0xff] %v2056
        %v2059 = vsel %vm2055, %v2047, %v1695
        %v2060 = vsel %vm2055, %v2045, %v1696
        %s2061 = scalar_lea.vmem [#allocation3], 32
        %v2062 = vld [vmem:[%s2061] sm:$0xff]
        %v2063 = vld [vmem:[%s2061 + $0x8] sm:$0xff]
        %v2064 = vld [vmem:[%s2061 + $0x10] sm:$0xff]
        %v2065 = vld [vmem:[%s2061 + $0x18] sm:$0xff]
        %2066 = vmatprep.subr.mxu0 %v1141
        %2067 = vmatpush1.msra.mxu0 %v1140
        %2068 = vmatprep.subr.mxu0 %v1137
        %2069 = vmatpush1.msra.mxu0 %v1136
        %2070 = vmatprep.subr.mxu0 %v1133
        %2071 = vmatpush1.msra.mxu0 %v1132
        %2072 = vmatprep.subr.mxu0 %v1129
        %2073 = vmatpush1.msra.mxu0 %v1128
        %2074 = vmatprep.subr.mxu0 %v1125
        %2075 = vmatpush1.msra.mxu0 %v1124
        %2076 = vmatprep.subr.mxu0 %v1121
        %2077 = vmatpush1.msra.mxu0 %v1120
        %2078 = vmatprep.subr.mxu0 %v1117
        %2079 = vmatpush1.msra.mxu0 %v1116
        %2080 = vmatprep.subr.mxu0 %v1113
        %2081 = vmatpush1.msra.mxu0 %v1112
        %2082 = vmatprep.subr.mxu0 %v1109
        %2083 = vmatpush1.msra.mxu0 %v1108
        %2084 = vmatprep.subr.mxu0 %v1105
        %2085 = vmatpush1.msra.mxu0 %v1104
        %2086 = vmatprep.subr.mxu0 %v1101
        %2087 = vmatpush1.msra.mxu0 %v1100
        %2088 = vmatprep.subr.mxu0 %v1097
        %2089 = vmatpush1.msra.mxu0 %v1096
        %2090 = vmatprep.subr.mxu0 %v1093
        %2091 = vmatpush1.msra.mxu0 %v1092
        %2092 = vmatprep.subr.mxu0 %v1089
        %2093 = vmatpush1.msra.mxu0 %v1088
        %2094 = vmatprep.subr.mxu0 %v1085
        %2095 = vmatpush1.msra.mxu0 %v1084
        %2096 = vmatprep.subr.mxu0 %v1081
        %2097 = vmatpush1.msra.mxu0 %v1080
        %2098 = vmatprep.subr.mxu0 0.0
        %2099 = vmatpush2.msra.mxu0 0.0
        %2100 = vmatprep.subr.mxu0 0.0
        %2101 = vmatpush2.msra.mxu0 0.0
        %2102 = vmatprep.subr.mxu0 0.0
        %2103 = vmatpush2.msra.mxu0 0.0
        %2104 = vmatprep.subr.mxu0 0.0
        %2105 = vmatpush2.msra.mxu0 0.0
        %2106 = vmatprep.subr.mxu0 0.0
        %2107 = vmatpush2.msra.mxu0 0.0
        %2108 = vmatprep.subr.mxu0 0.0
        %2109 = vmatpush2.msra.mxu0 0.0
        %2110 = vmatprep.subr.mxu0 0.0
        %2111 = vmatpush2.msra.mxu0 0.0
        %2112 = vmatprep.subr.mxu0 0.0
        %2113 = vmatpush2.msra.mxu0 0.0
        %2114 = vmatprep.subr.mxu0 0.0
        %2115 = vmatpush2.msra.mxu0 0.0
        %2116 = vmatprep.subr.mxu0 0.0
        %2117 = vmatpush2.msra.mxu0 0.0
        %2118 = vmatprep.subr.mxu0 0.0
        %2119 = vmatpush2.msra.mxu0 0.0
        %2120 = vmatprep.subr.mxu0 0.0
        %2121 = vmatpush2.msra.mxu0 0.0
        %2122 = vmatprep.subr.mxu0 0.0
        %2123 = vmatpush2.msra.mxu0 0.0
        %2124 = vmatprep.subr.mxu0 0.0
        %2125 = vmatpush2.msra.mxu0 0.0
        %2126 = vmatprep.subr.mxu0 0.0
        %2127 = vmatpush2.msra.mxu0 0.0
        %2128 = vmatprep.subr.mxu0 0.0
        %2129 = vmatpush2.msra.mxu0 0.0
        %2130 = vmatprep.mubr.f32.mxu0 0.0
        %2131 = vmatmul.mubr.f32.gmra.mxu0 %v1877
        %v2132 = vpop.f32.mrf.mxu0
        %v2133 = vadd.f32 0.0, %v2132
        %v2134 = vpop.f32.mrf.mxu0
        %v2135 = vadd.f32 0.0, %v2134
        %2136 = vdwg.mxu0
        %2137 = vmatprep.subr.mxu0 %v1143
        %2138 = vmatpush1.msra.mxu0 %v1142
        %2139 = vmatprep.subr.mxu0 %v1139
        %2140 = vmatpush1.msra.mxu0 %v1138
        %2141 = vmatprep.subr.mxu0 %v1135
        %2142 = vmatpush1.msra.mxu0 %v1134
        %2143 = vmatprep.subr.mxu0 %v1131
        %2144 = vmatpush1.msra.mxu0 %v1130
        %2145 = vmatprep.subr.mxu0 %v1127
        %2146 = vmatpush1.msra.mxu0 %v1126
        %2147 = vmatprep.subr.mxu0 %v1123
        %2148 = vmatpush1.msra.mxu0 %v1122
        %2149 = vmatprep.subr.mxu0 %v1119
        %2150 = vmatpush1.msra.mxu0 %v1118
        %2151 = vmatprep.subr.mxu0 %v1115
        %2152 = vmatpush1.msra.mxu0 %v1114
        %2153 = vmatprep.subr.mxu0 %v1111
        %2154 = vmatpush1.msra.mxu0 %v1110
        %2155 = vmatprep.subr.mxu0 %v1107
        %2156 = vmatpush1.msra.mxu0 %v1106
        %2157 = vmatprep.subr.mxu0 %v1103
        %2158 = vmatpush1.msra.mxu0 %v1102
        %2159 = vmatprep.subr.mxu0 %v1099
        %2160 = vmatpush1.msra.mxu0 %v1098
        %2161 = vmatprep.subr.mxu0 %v1095
        %2162 = vmatpush1.msra.mxu0 %v1094
        %2163 = vmatprep.subr.mxu0 %v1091
        %2164 = vmatpush1.msra.mxu0 %v1090
        %2165 = vmatprep.subr.mxu0 %v1087
        %2166 = vmatpush1.msra.mxu0 %v1086
        %2167 = vmatprep.subr.mxu0 %v1083
        %2168 = vmatpush1.msra.mxu0 %v1082
        %2169 = vmatprep.subr.mxu0 0.0
        %2170 = vmatpush2.msra.mxu0 0.0
        %2171 = vmatprep.subr.mxu0 0.0
        %2172 = vmatpush2.msra.mxu0 0.0
        %2173 = vmatprep.subr.mxu0 0.0
        %2174 = vmatpush2.msra.mxu0 0.0
        %2175 = vmatprep.subr.mxu0 0.0
        %2176 = vmatpush2.msra.mxu0 0.0
        %2177 = vmatprep.subr.mxu0 0.0
        %2178 = vmatpush2.msra.mxu0 0.0
        %2179 = vmatprep.subr.mxu0 0.0
        %2180 = vmatpush2.msra.mxu0 0.0
        %2181 = vmatprep.subr.mxu0 0.0
        %2182 = vmatpush2.msra.mxu0 0.0
        %2183 = vmatprep.subr.mxu0 0.0
        %2184 = vmatpush2.msra.mxu0 0.0
        %2185 = vmatprep.subr.mxu0 0.0
        %2186 = vmatpush2.msra.mxu0 0.0
        %2187 = vmatprep.subr.mxu0 0.0
        %2188 = vmatpush2.msra.mxu0 0.0
        %2189 = vmatprep.subr.mxu0 0.0
        %2190 = vmatpush2.msra.mxu0 0.0
        %2191 = vmatprep.subr.mxu0 0.0
        %2192 = vmatpush2.msra.mxu0 0.0
        %2193 = vmatprep.subr.mxu0 0.0
        %2194 = vmatpush2.msra.mxu0 0.0
        %2195 = vmatprep.subr.mxu0 0.0
        %2196 = vmatpush2.msra.mxu0 0.0
        %2197 = vmatprep.subr.mxu0 0.0
        %2198 = vmatpush2.msra.mxu0 0.0
        %2199 = vmatprep.subr.mxu0 0.0
        %2200 = vmatpush2.msra.mxu0 0.0
        %2201 = vmatprep.mubr.f32.mxu0 0.0
        %2202 = vmatmul.mubr.f32.gmra.mxu0 %v1877
        %v2203 = vpop.f32.mrf.mxu0
        %v2204 = vadd.f32 0.0, %v2203
        %v2205 = vpop.f32.mrf.mxu0
        %v2206 = vadd.f32 0.0, %v2205
        %2207 = vdwg.mxu0
        %v2208 = vadd.f32 %v2062, %v2133
        %v2209 = vadd.f32 %v2063, %v2135
        %v2210 = vadd.f32 %v2064, %v2204
        %v2211 = vadd.f32 %v2065, %v2206
        %v2212 = vmul.f32 %v2208, 0.5
        %v2213 = vtanh.pop %v2212
        %v2214 = vadd.f32 %v2213, 1.0
        %v2215 = vmul.f32 %v2214, 0.5
        %v2216 = vmul.f32 %v2209, 0.5
        %v2217 = vtanh.pop %v2216
        %v2218 = vadd.f32 %v2217, 1.0
        %v2219 = vmul.f32 %v2218, 0.5
        %v2220 = vtanh.pop %v2210
        %v2221 = vmul.f32 %v2211, 0.5
        %v2222 = vtanh.pop %v2221
        %v2223 = vadd.f32 %v2222, 1.0
        %v2224 = vmul.f32 %v2223, 0.5
        %v2225 = vmul.f32 %v2219, %v1878
        %v2226 = vmul.f32 %v2215, %v2220
        %v2227 = vadd.f32 %v2225, %v2226
        %v2228 = vtanh.pop %v2227
        %v2229 = vmul.f32 %v2224, %v2228
        %s2230 = sadd.s32 %s1147, 1
        %v2231 = vstv %s2230
        %vm2232 = vcmp.gt.s32.totalorder %v1144, %v2231
        %v2233 = vsel %vm2232, 1, 0
        %2234 = vset.pattern.permute.xlu0 0
        %2235 = vperm.xlu0 %2234, %v2233
        %v2236 = vpop.permute.xlu0 %2235
        %vm2237 = vcmp.eq.s32.totalorder %v2236, 1
        %v2238 = vsel %vm2237, %v2229, 0.0
        %s2239 = scalar_lea.vmem %s426, 8 [#allocation15]
        %2240 = vst [vmem:[%s2239] sm:$0xff] %v2238
        %v2241 = vsel %vm2237, %v2229, %v1877
        %v2242 = vsel %vm2237, %v2227, %v1878
        %s2243 = scalar_lea.vmem [#allocation2], 96
        %v2244 = vld [vmem:[%s2243] sm:$0xff]
        %v2245 = vld [vmem:[%s2243 + $0x8] sm:$0xff]
        %v2246 = vld [vmem:[%s2243 + $0x10] sm:$0xff]
        %v2247 = vld [vmem:[%s2243 + $0x18] sm:$0xff]
        %2248 = vmatprep.subr.mxu0 %v1076
        %2249 = vmatpush1.msra.mxu0 %v1075
        %2250 = vmatprep.subr.mxu0 %v1072
        %2251 = vmatpush1.msra.mxu0 %v1071
        %2252 = vmatprep.subr.mxu0 %v1068
        %2253 = vmatpush1.msra.mxu0 %v1067
        %2254 = vmatprep.subr.mxu0 %v1064
        %2255 = vmatpush1.msra.mxu0 %v1063
        %2256 = vmatprep.subr.mxu0 %v1060
        %2257 = vmatpush1.msra.mxu0 %v1059
        %2258 = vmatprep.subr.mxu0 %v1056
        %2259 = vmatpush1.msra.mxu0 %v1055
        %2260 = vmatprep.subr.mxu0 %v1052
        %2261 = vmatpush1.msra.mxu0 %v1051
        %2262 = vmatprep.subr.mxu0 %v1048
        %2263 = vmatpush1.msra.mxu0 %v1047
        %2264 = vmatprep.subr.mxu0 %v1044
        %2265 = vmatpush1.msra.mxu0 %v1043
        %2266 = vmatprep.subr.mxu0 %v1040
        %2267 = vmatpush1.msra.mxu0 %v1039
        %2268 = vmatprep.subr.mxu0 %v1036
        %2269 = vmatpush1.msra.mxu0 %v1035
        %2270 = vmatprep.subr.mxu0 %v1032
        %2271 = vmatpush1.msra.mxu0 %v1031
        %2272 = vmatprep.subr.mxu0 %v1028
        %2273 = vmatpush1.msra.mxu0 %v1027
        %2274 = vmatprep.subr.mxu0 %v1024
        %2275 = vmatpush1.msra.mxu0 %v1023
        %2276 = vmatprep.subr.mxu0 %v1020
        %2277 = vmatpush1.msra.mxu0 %v1019
        %2278 = vmatprep.subr.mxu0 %v1016
        %2279 = vmatpush1.msra.mxu0 %v1015
        %2280 = vmatprep.subr.mxu0 0.0
        %2281 = vmatpush2.msra.mxu0 0.0
        %2282 = vmatprep.subr.mxu0 0.0
        %2283 = vmatpush2.msra.mxu0 0.0
        %2284 = vmatprep.subr.mxu0 0.0
        %2285 = vmatpush2.msra.mxu0 0.0
        %2286 = vmatprep.subr.mxu0 0.0
        %2287 = vmatpush2.msra.mxu0 0.0
        %2288 = vmatprep.subr.mxu0 0.0
        %2289 = vmatpush2.msra.mxu0 0.0
        %2290 = vmatprep.subr.mxu0 0.0
        %2291 = vmatpush2.msra.mxu0 0.0
        %2292 = vmatprep.subr.mxu0 0.0
        %2293 = vmatpush2.msra.mxu0 0.0
        %2294 = vmatprep.subr.mxu0 0.0
        %2295 = vmatpush2.msra.mxu0 0.0
        %2296 = vmatprep.subr.mxu0 0.0
        %2297 = vmatpush2.msra.mxu0 0.0
        %2298 = vmatprep.subr.mxu0 0.0
        %2299 = vmatpush2.msra.mxu0 0.0
        %2300 = vmatprep.subr.mxu0 0.0
        %2301 = vmatpush2.msra.mxu0 0.0
        %2302 = vmatprep.subr.mxu0 0.0
        %2303 = vmatpush2.msra.mxu0 0.0
        %2304 = vmatprep.subr.mxu0 0.0
        %2305 = vmatpush2.msra.mxu0 0.0
        %2306 = vmatprep.subr.mxu0 0.0
        %2307 = vmatpush2.msra.mxu0 0.0
        %2308 = vmatprep.subr.mxu0 0.0
        %2309 = vmatpush2.msra.mxu0 0.0
        %2310 = vmatprep.subr.mxu0 0.0
        %2311 = vmatpush2.msra.mxu0 0.0
        %2312 = vmatprep.mubr.f32.mxu0 0.0
        %2313 = vmatmul.mubr.f32.gmra.mxu0 %v2059
        %v2314 = vpop.f32.mrf.mxu0
        %v2315 = vadd.f32 0.0, %v2314
        %v2316 = vpop.f32.mrf.mxu0
        %v2317 = vadd.f32 0.0, %v2316
        %2318 = vdwg.mxu0
        %2319 = vmatprep.subr.mxu0 %v1078
        %2320 = vmatpush1.msra.mxu0 %v1077
        %2321 = vmatprep.subr.mxu0 %v1074
        %2322 = vmatpush1.msra.mxu0 %v1073
        %2323 = vmatprep.subr.mxu0 %v1070
        %2324 = vmatpush1.msra.mxu0 %v1069
        %2325 = vmatprep.subr.mxu0 %v1066
        %2326 = vmatpush1.msra.mxu0 %v1065
        %2327 = vmatprep.subr.mxu0 %v1062
        %2328 = vmatpush1.msra.mxu0 %v1061
        %2329 = vmatprep.subr.mxu0 %v1058
        %2330 = vmatpush1.msra.mxu0 %v1057
        %2331 = vmatprep.subr.mxu0 %v1054
        %2332 = vmatpush1.msra.mxu0 %v1053
        %2333 = vmatprep.subr.mxu0 %v1050
        %2334 = vmatpush1.msra.mxu0 %v1049
        %2335 = vmatprep.subr.mxu0 %v1046
        %2336 = vmatpush1.msra.mxu0 %v1045
        %2337 = vmatprep.subr.mxu0 %v1042
        %2338 = vmatpush1.msra.mxu0 %v1041
        %2339 = vmatprep.subr.mxu0 %v1038
        %2340 = vmatpush1.msra.mxu0 %v1037
        %2341 = vmatprep.subr.mxu0 %v1034
        %2342 = vmatpush1.msra.mxu0 %v1033
        %2343 = vmatprep.subr.mxu0 %v1030
        %2344 = vmatpush1.msra.mxu0 %v1029
        %2345 = vmatprep.subr.mxu0 %v1026
        %2346 = vmatpush1.msra.mxu0 %v1025
        %2347 = vmatprep.subr.mxu0 %v1022
        %2348 = vmatpush1.msra.mxu0 %v1021
        %2349 = vmatprep.subr.mxu0 %v1018
        %2350 = vmatpush1.msra.mxu0 %v1017
        %2351 = vmatprep.subr.mxu0 0.0
        %2352 = vmatpush2.msra.mxu0 0.0
        %2353 = vmatprep.subr.mxu0 0.0
        %2354 = vmatpush2.msra.mxu0 0.0
        %2355 = vmatprep.subr.mxu0 0.0
        %2356 = vmatpush2.msra.mxu0 0.0
        %2357 = vmatprep.subr.mxu0 0.0
        %2358 = vmatpush2.msra.mxu0 0.0
        %2359 = vmatprep.subr.mxu0 0.0
        %2360 = vmatpush2.msra.mxu0 0.0
        %2361 = vmatprep.subr.mxu0 0.0
        %2362 = vmatpush2.msra.mxu0 0.0
        %2363 = vmatprep.subr.mxu0 0.0
        %2364 = vmatpush2.msra.mxu0 0.0
        %2365 = vmatprep.subr.mxu0 0.0
        %2366 = vmatpush2.msra.mxu0 0.0
        %2367 = vmatprep.subr.mxu0 0.0
        %2368 = vmatpush2.msra.mxu0 0.0
        %2369 = vmatprep.subr.mxu0 0.0
        %2370 = vmatpush2.msra.mxu0 0.0
        %2371 = vmatprep.subr.mxu0 0.0
        %2372 = vmatpush2.msra.mxu0 0.0
        %2373 = vmatprep.subr.mxu0 0.0
        %2374 = vmatpush2.msra.mxu0 0.0
        %2375 = vmatprep.subr.mxu0 0.0
        %2376 = vmatpush2.msra.mxu0 0.0
        %2377 = vmatprep.subr.mxu0 0.0
        %2378 = vmatpush2.msra.mxu0 0.0
        %2379 = vmatprep.subr.mxu0 0.0
        %2380 = vmatpush2.msra.mxu0 0.0
        %2381 = vmatprep.subr.mxu0 0.0
        %2382 = vmatpush2.msra.mxu0 0.0
        %2383 = vmatprep.mubr.f32.mxu0 0.0
        %2384 = vmatmul.mubr.f32.gmra.mxu0 %v2059
        %v2385 = vpop.f32.mrf.mxu0
        %v2386 = vadd.f32 0.0, %v2385
        %v2387 = vpop.f32.mrf.mxu0
        %v2388 = vadd.f32 0.0, %v2387
        %2389 = vdwg.mxu0
        %v2390 = vadd.f32 %v2244, %v2315
        %v2391 = vadd.f32 %v2245, %v2317
        %v2392 = vadd.f32 %v2246, %v2386
        %v2393 = vadd.f32 %v2247, %v2388
        %v2394 = vmul.f32 %v2390, 0.5
        %v2395 = vtanh.pop %v2394
        %v2396 = vadd.f32 %v2395, 1.0
        %v2397 = vmul.f32 %v2396, 0.5
        %v2398 = vmul.f32 %v2391, 0.5
        %v2399 = vtanh.pop %v2398
        %v2400 = vadd.f32 %v2399, 1.0
        %v2401 = vmul.f32 %v2400, 0.5
        %v2402 = vtanh.pop %v2392
        %v2403 = vmul.f32 %v2393, 0.5
        %v2404 = vtanh.pop %v2403
        %v2405 = vadd.f32 %v2404, 1.0
        %v2406 = vmul.f32 %v2405, 0.5
        %v2407 = vmul.f32 %v2401, %v2060
        %v2408 = vmul.f32 %v2397, %v2402
        %v2409 = vadd.f32 %v2407, %v2408
        %v2410 = vtanh.pop %v2409
        %v2411 = vmul.f32 %v2406, %v2410
        %s2412 = sadd.s32 %s1145, 3
        %v2413 = vstv %s2412
        %vm2414 = vcmp.gt.s32.totalorder %v1144, %v2413
        %v2415 = vsel %vm2414, 1, 0
        %2416 = vset.pattern.permute.xlu0 0
        %2417 = vperm.xlu0 %2416, %v2415
        %v2418 = vpop.permute.xlu0 %2417
        %vm2419 = vcmp.eq.s32.totalorder %v2418, 1
        %v2420 = vsel %vm2419, %v2411, 0.0
        %s2421 = scalar_lea.vmem %s419, 24 [#allocation14]
        %2422 = vst [vmem:[%s2421] sm:$0xff] %v2420
        %v2423 = vsel %vm2419, %v2411, %v2059
        %v2424 = vsel %vm2419, %v2409, %v2060
        %v2425 = vld [vmem:[#allocation3] sm:$0xff]
        %v2426 = vld [vmem:[#allocation3 + $0x8] sm:$0xff]
        %v2427 = vld [vmem:[#allocation3 + $0x10] sm:$0xff]
        %v2428 = vld [vmem:[#allocation3 + $0x18] sm:$0xff]
        %2429 = vmatprep.subr.mxu0 %v1141
        %2430 = vmatpush1.msra.mxu0 %v1140
        %2431 = vmatprep.subr.mxu0 %v1137
        %2432 = vmatpush1.msra.mxu0 %v1136
        %2433 = vmatprep.subr.mxu0 %v1133
        %2434 = vmatpush1.msra.mxu0 %v1132
        %2435 = vmatprep.subr.mxu0 %v1129
        %2436 = vmatpush1.msra.mxu0 %v1128
        %2437 = vmatprep.subr.mxu0 %v1125
        %2438 = vmatpush1.msra.mxu0 %v1124
        %2439 = vmatprep.subr.mxu0 %v1121
        %2440 = vmatpush1.msra.mxu0 %v1120
        %2441 = vmatprep.subr.mxu0 %v1117
        %2442 = vmatpush1.msra.mxu0 %v1116
        %2443 = vmatprep.subr.mxu0 %v1113
        %2444 = vmatpush1.msra.mxu0 %v1112
        %2445 = vmatprep.subr.mxu0 %v1109
        %2446 = vmatpush1.msra.mxu0 %v1108
        %2447 = vmatprep.subr.mxu0 %v1105
        %2448 = vmatpush1.msra.mxu0 %v1104
        %2449 = vmatprep.subr.mxu0 %v1101
        %2450 = vmatpush1.msra.mxu0 %v1100
        %2451 = vmatprep.subr.mxu0 %v1097
        %2452 = vmatpush1.msra.mxu0 %v1096
        %2453 = vmatprep.subr.mxu0 %v1093
        %2454 = vmatpush1.msra.mxu0 %v1092
        %2455 = vmatprep.subr.mxu0 %v1089
        %2456 = vmatpush1.msra.mxu0 %v1088
        %2457 = vmatprep.subr.mxu0 %v1085
        %2458 = vmatpush1.msra.mxu0 %v1084
        %2459 = vmatprep.subr.mxu0 %v1081
        %2460 = vmatpush1.msra.mxu0 %v1080
        %2461 = vmatprep.subr.mxu0 0.0
        %2462 = vmatpush2.msra.mxu0 0.0
        %2463 = vmatprep.subr.mxu0 0.0
        %2464 = vmatpush2.msra.mxu0 0.0
        %2465 = vmatprep.subr.mxu0 0.0
        %2466 = vmatpush2.msra.mxu0 0.0
        %2467 = vmatprep.subr.mxu0 0.0
        %2468 = vmatpush2.msra.mxu0 0.0
        %2469 = vmatprep.subr.mxu0 0.0
        %2470 = vmatpush2.msra.mxu0 0.0
        %2471 = vmatprep.subr.mxu0 0.0
        %2472 = vmatpush2.msra.mxu0 0.0
        %2473 = vmatprep.subr.mxu0 0.0
        %2474 = vmatpush2.msra.mxu0 0.0
        %2475 = vmatprep.subr.mxu0 0.0
        %2476 = vmatpush2.msra.mxu0 0.0
        %2477 = vmatprep.subr.mxu0 0.0
        %2478 = vmatpush2.msra.mxu0 0.0
        %2479 = vmatprep.subr.mxu0 0.0
        %2480 = vmatpush2.msra.mxu0 0.0
        %2481 = vmatprep.subr.mxu0 0.0
        %2482 = vmatpush2.msra.mxu0 0.0
        %2483 = vmatprep.subr.mxu0 0.0
        %2484 = vmatpush2.msra.mxu0 0.0
        %2485 = vmatprep.subr.mxu0 0.0
        %2486 = vmatpush2.msra.mxu0 0.0
        %2487 = vmatprep.subr.mxu0 0.0
        %2488 = vmatpush2.msra.mxu0 0.0
        %2489 = vmatprep.subr.mxu0 0.0
        %2490 = vmatpush2.msra.mxu0 0.0
        %2491 = vmatprep.subr.mxu0 0.0
        %2492 = vmatpush2.msra.mxu0 0.0
        %2493 = vmatprep.mubr.f32.mxu0 0.0
        %2494 = vmatmul.mubr.f32.gmra.mxu0 %v2241
        %v2495 = vpop.f32.mrf.mxu0
        %v2496 = vadd.f32 0.0, %v2495
        %v2497 = vpop.f32.mrf.mxu0
        %v2498 = vadd.f32 0.0, %v2497
        %2499 = vdwg.mxu0
        %2500 = vmatprep.subr.mxu0 %v1143
        %2501 = vmatpush1.msra.mxu0 %v1142
        %2502 = vmatprep.subr.mxu0 %v1139
        %2503 = vmatpush1.msra.mxu0 %v1138
        %2504 = vmatprep.subr.mxu0 %v1135
        %2505 = vmatpush1.msra.mxu0 %v1134
        %2506 = vmatprep.subr.mxu0 %v1131
        %2507 = vmatpush1.msra.mxu0 %v1130
        %2508 = vmatprep.subr.mxu0 %v1127
        %2509 = vmatpush1.msra.mxu0 %v1126
        %2510 = vmatprep.subr.mxu0 %v1123
        %2511 = vmatpush1.msra.mxu0 %v1122
        %2512 = vmatprep.subr.mxu0 %v1119
        %2513 = vmatpush1.msra.mxu0 %v1118
        %2514 = vmatprep.subr.mxu0 %v1115
        %2515 = vmatpush1.msra.mxu0 %v1114
        %2516 = vmatprep.subr.mxu0 %v1111
        %2517 = vmatpush1.msra.mxu0 %v1110
        %2518 = vmatprep.subr.mxu0 %v1107
        %2519 = vmatpush1.msra.mxu0 %v1106
        %2520 = vmatprep.subr.mxu0 %v1103
        %2521 = vmatpush1.msra.mxu0 %v1102
        %2522 = vmatprep.subr.mxu0 %v1099
        %2523 = vmatpush1.msra.mxu0 %v1098
        %2524 = vmatprep.subr.mxu0 %v1095
        %2525 = vmatpush1.msra.mxu0 %v1094
        %2526 = vmatprep.subr.mxu0 %v1091
        %2527 = vmatpush1.msra.mxu0 %v1090
        %2528 = vmatprep.subr.mxu0 %v1087
        %2529 = vmatpush1.msra.mxu0 %v1086
        %2530 = vmatprep.subr.mxu0 %v1083
        %2531 = vmatpush1.msra.mxu0 %v1082
        %2532 = vmatprep.subr.mxu0 0.0
        %2533 = vmatpush2.msra.mxu0 0.0
        %2534 = vmatprep.subr.mxu0 0.0
        %2535 = vmatpush2.msra.mxu0 0.0
        %2536 = vmatprep.subr.mxu0 0.0
        %2537 = vmatpush2.msra.mxu0 0.0
        %2538 = vmatprep.subr.mxu0 0.0
        %2539 = vmatpush2.msra.mxu0 0.0
        %2540 = vmatprep.subr.mxu0 0.0
        %2541 = vmatpush2.msra.mxu0 0.0
        %2542 = vmatprep.subr.mxu0 0.0
        %2543 = vmatpush2.msra.mxu0 0.0
        %2544 = vmatprep.subr.mxu0 0.0
        %2545 = vmatpush2.msra.mxu0 0.0
        %2546 = vmatprep.subr.mxu0 0.0
        %2547 = vmatpush2.msra.mxu0 0.0
        %2548 = vmatprep.subr.mxu0 0.0
        %2549 = vmatpush2.msra.mxu0 0.0
        %2550 = vmatprep.subr.mxu0 0.0
        %2551 = vmatpush2.msra.mxu0 0.0
        %2552 = vmatprep.subr.mxu0 0.0
        %2553 = vmatpush2.msra.mxu0 0.0
        %2554 = vmatprep.subr.mxu0 0.0
        %2555 = vmatpush2.msra.mxu0 0.0
        %2556 = vmatprep.subr.mxu0 0.0
        %2557 = vmatpush2.msra.mxu0 0.0
        %2558 = vmatprep.subr.mxu0 0.0
        %2559 = vmatpush2.msra.mxu0 0.0
        %2560 = vmatprep.subr.mxu0 0.0
        %2561 = vmatpush2.msra.mxu0 0.0
        %2562 = vmatprep.subr.mxu0 0.0
        %2563 = vmatpush2.msra.mxu0 0.0
        %2564 = vmatprep.mubr.f32.mxu0 0.0
        %2565 = vmatmul.mubr.f32.gmra.mxu0 %v2241
        %v2566 = vpop.f32.mrf.mxu0
        %v2567 = vadd.f32 0.0, %v2566
        %v2568 = vpop.f32.mrf.mxu0
        %v2569 = vadd.f32 0.0, %v2568
        %2570 = vdwg.mxu0
        %v2571 = vadd.f32 %v2425, %v2496
        %v2572 = vadd.f32 %v2426, %v2498
        %v2573 = vadd.f32 %v2427, %v2567
        %v2574 = vadd.f32 %v2428, %v2569
        %v2575 = vmul.f32 %v2571, 0.5
        %v2576 = vtanh.pop %v2575
        %v2577 = vadd.f32 %v2576, 1.0
        %v2578 = vmul.f32 %v2577, 0.5
        %v2579 = vmul.f32 %v2572, 0.5
        %v2580 = vtanh.pop %v2579
        %v2581 = vadd.f32 %v2580, 1.0
        %v2582 = vmul.f32 %v2581, 0.5
        %v2583 = vtanh.pop %v2573
        %v2584 = vmul.f32 %v2574, 0.5
        %v2585 = vtanh.pop %v2584
        %v2586 = vadd.f32 %v2585, 1.0
        %v2587 = vmul.f32 %v2586, 0.5
        %v2588 = vmul.f32 %v2582, %v2242
        %v2589 = vmul.f32 %v2578, %v2583
        %v2590 = vadd.f32 %v2588, %v2589
        %v2591 = vtanh.pop %v2590
        %v2592 = vmul.f32 %v2587, %v2591
        %v2593 = vstv %s1147
        %vm2594 = vcmp.gt.s32.totalorder %v1144, %v2593
        %v2595 = vsel %vm2594, 1, 0
        %2596 = vset.pattern.permute.xlu0 0
        %2597 = vperm.xlu0 %2596, %v2595
        %v2598 = vpop.permute.xlu0 %2597
        %vm2599 = vcmp.eq.s32.totalorder %v2598, 1
        %v2600 = vsel %vm2599, %v2592, 0.0
        %2601 = vst [vmem:[%s426] sm:$0xff] %v2600
        %v2602 = vsel %vm2599, %v2592, %v2241
        %v2603 = vsel %vm2599, %v2590, %v2242
        %2604 = vst [vmem:[#allocation4] sm:$0xff] %v2423
        %2605 = vst [vmem:[#allocation5] sm:$0xff] %v2424
        %2606 = vst [vmem:[%s1150] sm:$0xff] %v2602
        %2607 = vst [vmem:[%s1152] sm:$0xff] %v2603
        %p2608 = scmp.eq.s32.totalorder %s35, 1
        // Predicated region
        $region65: #{tpu_custom_call.1} parent=43 // pred_check
          %p2609 = pneg %p2608
        $region66: #{tpu_custom_call.1} parent=43 // pred_check_branch
          %2611 = sbr.rel (%p2609) target = $region68
        $region67: #{tpu_custom_call.1} parent=43 // pred_region
          %2612 = vst [vmem:[#allocation17] sm:$0xff] %v2423
          %s2613 = scalar_lea.vmem [#allocation17], 8
          %2614 = vst [vmem:[%s2613] sm:$0xff] %v2602
          %2615 = vst [vmem:[#allocation18] sm:$0xff] %v2424
          %s2616 = scalar_lea.vmem [#allocation18], 8
          %2617 = vst [vmem:[%s2616] sm:$0xff] %v2603
        $region68: #{tpu_custom_call.1} parent=43 // pred_fallthru
          _
        %s2618 = sand.u32 %s181, 1
        %s2619 = scalar_lea.sflag [#allocation8], %s2618
        %s2620 = sand.u32 %s181, 1
        %s2621 = smul.addr %s2620, 32
        %s2622 = scalar_lea.vmem [#allocation14], %s2621
        %s2623 = sand.u32 %s35, 1
        %s2624 = scalar_lea.sflag [#allocation16], %s2623
        %s2625 = sand.u32 %s209, 1
        %s2626 = smul.addr %s2625, 32
        %s2627 = scalar_lea.vmem [#allocation15], %s2626
        // Predicated region
        $region69: #{tpu_custom_call.1} parent=43 // pred_check
          %p2628 = pneg %p191
        $region70: #{tpu_custom_call.1} parent=43 // pred_check_branch
          %2630 = sbr.rel (%p2628) target = $region72
        $region71: #{tpu_custom_call.1} parent=43 // pred_region
          %s2631 = smul.u32 4, %s35
          %s2633 = ssub.s32 512, 512
          %2634 = vsyncadd %s2619, %s2633
          %s2635 = smul.addr %s2631, 128
          %s2636 = scalar_lea.hbm %s6, %s2635
          %s2637 = sshll.u32 %s2622, 4
          %s2638 = int_to_ptr.vmem [resolvable:$true] %s2637
          %2643 = dma.vmem_to_hbm [thread:$0]  %s2638, 512, %s2636, %s2619, 128, 128, 8
        $region72: #{tpu_custom_call.1} parent=43 // pred_fallthru
          _
        // Predicated region
        $region73: #{tpu_custom_call.1} parent=43 // pred_check
          %p2644 = pneg %p219
        $region74: #{tpu_custom_call.1} parent=43 // pred_check_branch
          %2646 = sbr.rel (%p2644) target = $region76
        $region75: #{tpu_custom_call.1} parent=43 // pred_region
          %s2647 = ssub.s32 1, %s35
          %s2648 = smul.u32 4, %s2647
          %s2650 = ssub.s32 512, 512
          %2651 = vsyncadd %s2624, %s2650
          %s2652 = smul.addr %s2648, 128
          %s2653 = scalar_lea.hbm %s7, %s2652
          %s2654 = sshll.u32 %s2627, 4
          %s2655 = int_to_ptr.vmem [resolvable:$true] %s2654
          %2660 = dma.vmem_to_hbm [thread:$0]  %s2655, 512, %s2653, %s2624, 128, 128, 8
        $region76: #{tpu_custom_call.1} parent=43 // pred_fallthru
          _
        // Predicated region
        $region77: #{tpu_custom_call.1} parent=43 // pred_check
          %p2661 = pneg %p240
        $region78: #{tpu_custom_call.1} parent=43 // pred_check_branch
          %2663 = sbr.rel (%p2661) target = $region80
        $region79: #{tpu_custom_call.1} parent=43 // pred_region
          %s2665 = ssub.s32 256, 256
          %2666 = vsyncadd [#allocation16], %s2665
          %s2667 = sshll.u32 [#allocation17], 4
          %s2668 = int_to_ptr.vmem [resolvable:$true] %s2667
          %2673 = dma.vmem_to_hbm [thread:$0]  %s2668, 256, %s8, [#allocation16], 128, 128, 8
        $region80: #{tpu_custom_call.1} parent=43 // pred_fallthru
          _
        // Predicated region
        $region81: #{tpu_custom_call.1} parent=43 // pred_check
          %p2674 = pneg %p261
        $region82: #{tpu_custom_call.1} parent=43 // pred_check_branch
          %2676 = sbr.rel (%p2674) target = $region84
        $region83: #{tpu_custom_call.1} parent=43 // pred_region
          %s2678 = ssub.s32 256, 256
          %2679 = vsyncadd [#allocation19], %s2678
          %s2680 = sshll.u32 [#allocation18], 4
          %s2681 = int_to_ptr.vmem [resolvable:$true] %s2680
          %2686 = dma.vmem_to_hbm [thread:$0]  %s2681, 256, %s9, [#allocation19], 128, 128, 8
        $region84: #{tpu_custom_call.1} parent=43 // pred_fallthru
          _
        // Predicated region
        $region85: #{tpu_custom_call.1} parent=43 // pred_check
          %p2687 = pneg %p240
        $region86: #{tpu_custom_call.1} parent=43 // pred_check_branch
          %2689 = sbr.rel (%p2687) target = $region88
        $region87: #{tpu_custom_call.1} parent=43 // pred_region
          %2690 = dma.done [#allocation16], 256
        $region88: #{tpu_custom_call.1} parent=43 // pred_fallthru
          _
        // Predicated region
        $region89: #{tpu_custom_call.1} parent=43 // pred_check
          %p2691 = pneg %p261
        $region90: #{tpu_custom_call.1} parent=43 // pred_check_branch
          %2693 = sbr.rel (%p2691) target = $region92
        $region91: #{tpu_custom_call.1} parent=43 // pred_region
          %2694 = dma.done [#allocation19], 256
        $region92: #{tpu_custom_call.1} parent=43 // pred_fallthru
          _
      $region44: #{tpu_custom_call.1} parent=5 // pred_fallthru
        _
      %p2695 = scmp.le.s32.totalorder 2, %s30
      // Predicated region
      $region93: #{tpu_custom_call.1} parent=5 // pred_check
        %p2696 = pneg %p2695
      $region94: #{tpu_custom_call.1} parent=5 // pred_check_branch
        %2698 = sbr.rel (%p2696) target = $region96
      $region95: #{tpu_custom_call.1} parent=5 // pred_region
        %s2699 = ssub.s32 %s30, 2
        // Predicated region
        $region97: #{tpu_custom_call.1} parent=95 // pred_check
          %p2700 = pneg %p197
        $region98: #{tpu_custom_call.1} parent=95 // pred_check_branch
          %2702 = sbr.rel (%p2700) target = $region100
        $region99: #{tpu_custom_call.1} parent=95 // pred_region
          %s2703 = sand.u32 %s182, 1
          %s2704 = scalar_lea.sflag [#allocation8], %s2703
          %s2705 = sand.u32 %s182, 1
          %s2706 = smul.addr %s2705, 32
          %s2707 = scalar_lea.vmem [#allocation14], %s2706
          %2708 = dma.done %s2704, 512
        $region100: #{tpu_custom_call.1} parent=95 // pred_fallthru
          _
        // Predicated region
        $region101: #{tpu_custom_call.1} parent=95 // pred_check
          %p2709 = pneg %p225
        $region102: #{tpu_custom_call.1} parent=95 // pred_check_branch
          %2711 = sbr.rel (%p2709) target = $region104
        $region103: #{tpu_custom_call.1} parent=95 // pred_region
          %s2712 = sand.u32 %s36, 1
          %s2713 = scalar_lea.sflag [#allocation16], %s2712
          %s2714 = sand.u32 %s210, 1
          %s2715 = smul.addr %s2714, 32
          %s2716 = scalar_lea.vmem [#allocation15], %s2715
          %2717 = dma.done %s2713, 512
        $region104: #{tpu_custom_call.1} parent=95 // pred_fallthru
          _
      $region96: #{tpu_custom_call.1} parent=5 // pred_fallthru
        _
    $region6: #{tpu_custom_call.1} parent=1 // loop_footer
      %s34 = sadd.s32 1, %s30
    $region7: #{tpu_custom_call.1} parent=1 // loop_footer_branch
      %29 = sbr.rel target = $region3
    $region8: #{tpu_custom_call.1} parent=1 // loop_exit
      _
    %2718 = vsyncpa [#allocation7], 1
    %s2719 = scalar_lea.sflag [#allocation7], 1
    %2720 = vsyncpa %s2719, 1
    %2721 = vsyncpa [#allocation10], 1
    %s2722 = scalar_lea.sflag [#allocation10], 1
    %2723 = vsyncpa %s2722, 1
    %2724 = vsyncpa [#allocation13], 1
    %2725 = vsyncpa [#allocation8], 1
    %s2726 = scalar_lea.sflag [#allocation8], 1
    %2727 = vsyncpa %s2726, 1
    %2728 = vsyncpa [#allocation16], 1
    %s2729 = scalar_lea.sflag [#allocation16], 1
    %2730 = vsyncpa %s2729, 1
    %2731 = vsyncpa [#allocation19], 1

</llo_original>
